<compile_context>
chip_gen: v5e
topology: v5e:2x2
jax: 0.10.0
libtpu: 0.0.40
codegen_flags: <defaults>
</compile_context>

<pallas_src>
import functools

import jax
import jax.numpy as jnp
from jax import lax
from jax.experimental import pallas as pl
from jax.experimental.pallas import tpu as pltpu


# --------------------------------------------------------------------------- #
# Fused Pallas kernel: one batch element per grid step
# --------------------------------------------------------------------------- #
def _fused_kernel(g_ref, xct_ref, yaug_ref, xtt_ref,
                  w1_ref, b1_ref, w2_ref, b2_ref,
                  out_ref, pad1_ref, pad2_ref,
                  *, m1, m2, dim, embed_ls, out_ls,
                  norm_embed, norm_out, eps, mxu_dtype):
    f32 = jnp.float32
    M = m1 * m2

    g = g_ref[...].astype(f32)        # (M, dim)   grid points, channels-last
    xcT = xct_ref[0].astype(f32)      # (dim, N)   context coords, channel-major
    y_aug = yaug_ref[0].astype(f32)   # (N, Fy+1)  [1 | Y_context]
    xtT = xtt_ref[0].astype(f32)      # (dim, T)   target coords, channel-major

    # ---------------- encode: RBF smoothing of [1, Y] onto the grid ----------
    n_ctx = xcT.shape[1]
    d2 = jnp.zeros((M, n_ctx), f32)
    for d in range(dim):                               # exact diff form, VPU only
        diff = g[:, d:d + 1] - xcT[d:d + 1, :]         # (M, N)
        d2 = d2 + diff * diff
    k_enc = jnp.exp(d2 * (-0.5 / (embed_ls * embed_ls)))          # (M, N)
    y_grid = jnp.dot(k_enc.astype(mxu_dtype), y_aug.astype(mxu_dtype),
                     preferred_element_type=f32)                  # (M, Fy+1)
    if norm_embed:
        dens = y_grid[:, :1]                                      # (M, 1)
        inv = pl.reciprocal(dens + eps, approx=True)
        col = lax.broadcasted_iota(jnp.int32, y_grid.shape, 1)
        # channel 0 keeps the density, remaining channels are divided by it
        y_grid = y_grid * jnp.where(col == 0, 1.0, inv)

    # ---------------- CNN: two 3x3 'same' convs, all in VMEM ------------------
    # Data stays in (m1, m2, C) layout; the wrapper already swapped the conv
    # weights' kh/kw axes so no stack_to_grid/grid_to_stack transpose is needed.
    def conv3x3(x_flat, w_r, b_r, pad_r, relu):
        cin = x_flat.shape[-1]
        cout = w_r.shape[-1]
        x_sp = x_flat.reshape(m1, m2, cin)
        # in-kernel zero padding: zero the scratch, write the interior at a
        # sublane-aligned offset (column 8), then read the 9 shifted taps.
        pad_r[...] = jnp.zeros(pad_r.shape, f32)
        pad_r[1:m1 + 1, 8:8 + m2, :] = x_sp
        xp = pad_r[...]                                # (m1+2, m2+16, cin)
        acc = jnp.zeros((M, cout), f32)
        for dm1 in range(3):
            for dm2 in range(3):
                patch = xp[dm1:dm1 + m1, 7 + dm2:7 + dm2 + m2, :].reshape(M, cin)
                acc = acc + jnp.dot(patch.astype(mxu_dtype),
                                    w_r[dm1, dm2].astype(mxu_dtype),
                                    preferred_element_type=f32)
        acc = acc + b_r[...]
        if relu:
            acc = jnp.maximum(acc, 0.0)
        return acc                                     # (M, cout)

    h = conv3x3(y_grid, w1_ref, b1_ref, pad1_ref, relu=True)      # (M, hidden)
    y_cnn = conv3x3(h, w2_ref, b2_ref, pad2_ref, relu=False)      # (M, Fy)

    # ---------------- decode: RBF-smooth grid values onto the targets --------
    n_tgt = xtT.shape[1]
    d2o = jnp.zeros((M, n_tgt), f32)
    for d in range(dim):
        diff = g[:, d:d + 1] - xtT[d:d + 1, :]         # (M, T)
        d2o = d2o + diff * diff
    k_out = jnp.exp(d2o * (-0.5 / (out_ls * out_ls)))             # (M, T)

    # transposed product -> lane-dense (Fy, T) output store
    outT = lax.dot_general(y_cnn, k_out, (((0,), (0,)), ((), ())),
                           preferred_element_type=f32)            # (Fy, T)
    if norm_out:
        denom = jnp.dot(jnp.ones((1, M), f32), k_out,
                        preferred_element_type=f32)               # (1, T)
        outT = outT * pl.reciprocal(denom + eps, approx=True)
    out_ref[0] = outT


# --------------------------------------------------------------------------- #
# Forward wrapper (single pallas_call)
# --------------------------------------------------------------------------- #
def on_grid_equiv_deepset_forward(params, x_context, y_context, x_target):
    f32 = jnp.float32
    B, N, dim = x_context.shape
    T = x_target.shape[1]
    Fy = y_context.shape[-1]
    m1, m2 = params["n_axes"]
    M = m1 * m2
    C1 = Fy + 1
    hidden = params["w1"].shape[0]
    grid_pts = params["grid"].astype(f32)                          # (M, dim)

    # Wrapper-side layout plumbing (tiny arrays only):
    #  * channel-major context/target coordinates,
    #  * density channel appended once,
    #  * PyTorch (Cout, Cin, kh, kw) weights -> (kw, kh, Cin, Cout) so the conv
    #    runs directly in (m1, m2, C) layout with no transposes.
    xcT = jnp.swapaxes(x_context.astype(f32), 1, 2)                # (B, dim, N)
    xtT = jnp.swapaxes(x_target.astype(f32), 1, 2)                 # (B, dim, T)
    y_aug = jnp.concatenate(
        [jnp.ones((B, N, 1), f32), y_context.astype(f32)], axis=-1)  # (B, N, C1)
    w1 = jnp.transpose(params["w1"].astype(f32), (3, 2, 1, 0))     # (3,3,C1,hidden)
    w2 = jnp.transpose(params["w2"].astype(f32), (3, 2, 1, 0))     # (3,3,hidden,Fy)
    b1 = params["b1"].astype(f32).reshape(1, hidden)
    b2 = params["b2"].astype(f32).reshape(1, Fy)

    kern = functools.partial(
        _fused_kernel, m1=m1, m2=m2, dim=dim,
        embed_ls=float(params["embed_lengthscale"]),
        out_ls=float(params["output_lengthscale"]),
        norm_embed=bool(params["normalise_embedding"]),
        norm_out=bool(params["normalise_output"]),
        eps=1e-6, mxu_dtype=jnp.bfloat16)

    outT = pl.pallas_call(
        kern,
        out_shape=jax.ShapeDtypeStruct((B, Fy, T), f32),
        grid=(B,),
        in_specs=[
            pl.BlockSpec((M, dim), lambda b: (0, 0)),              # grid, resident
            pl.BlockSpec((1, dim, N), lambda b: (b, 0, 0)),        # context coords
            pl.BlockSpec((1, N, C1), lambda b: (b, 0, 0)),         # [1 | Y_context]
            pl.BlockSpec((1, dim, T), lambda b: (b, 0, 0)),        # target coords
            pl.BlockSpec((3, 3, C1, hidden), lambda b: (0, 0, 0, 0)),
            pl.BlockSpec((1, hidden), lambda b: (0, 0)),
            pl.BlockSpec((3, 3, hidden, Fy), lambda b: (0, 0, 0, 0)),
            pl.BlockSpec((1, Fy), lambda b: (0, 0)),
        ],
        out_specs=pl.BlockSpec((1, Fy, T), lambda b: (b, 0, 0)),
        scratch_shapes=[
            pltpu.VMEM((m1 + 2, m2 + 16, C1), f32),     # padded conv1 input
            pltpu.VMEM((m1 + 2, m2 + 16, hidden), f32),  # padded conv2 input
        ],
        compiler_params=pltpu.CompilerParams(
            dimension_semantics=("parallel",)),
    )(grid_pts, xcT, y_aug, xtT, w1, b1, w2, b2)

    return jnp.swapaxes(outT, 1, 2)                                # (B, T, Fy)


# --------------------------------------------------------------------------- #
# Pure-JAX reference replicating the PyTorch module (NCHW conv + rearranges)
# --------------------------------------------------------------------------- #
def _rbf_smooth_ref(x_out, x_in, y_in, lengthscale, mode, eps=1e-6):
    d2 = jnp.sum((x_out[:, :, None, :] - x_in[:, None, :, :]) ** 2, axis=-1)
    k = jnp.exp(-0.5 * d2 / (lengthscale * lengthscale))
    y = jnp.einsum("bom,bmf->bof", k, y_in, precision=lax.Precision.HIGHEST)
    if mode == "density":
        density = y[..., :1]
        y = jnp.concatenate([density, y[..., 1:] / (density + eps)], axis=-1)
    elif mode == "ksum":
        y = y / (jnp.sum(k, axis=-1, keepdims=True) + eps)
    return y


def _forward_ref(params, x_context, y_context, x_target):
    B = x_context.shape[0]
    m1, m2 = params["n_axes"]
    M = m1 * m2
    Fy = y_context.shape[-1]
    xg_b = jnp.broadcast_to(params["grid"][None], (B, M, params["grid"].shape[-1]))
    ones = jnp.ones(y_context.shape[:-1] + (1,), jnp.float32)
    y_aug = jnp.concatenate([ones, y_context], axis=-1)
    y_grid = _rbf_smooth_ref(xg_b, x_context, y_aug, params["embed_lengthscale"],
                             "density" if params["normalise_embedding"] else "none")
    # stack_to_grid: 'b (m1 m2) d -> b d m2 m1'
    Y = y_grid.reshape(B, m1, m2, Fy + 1).transpose(0, 3, 2, 1)
    conv = lambda x, w: lax.conv_general_dilated(
        x, w, (1, 1), "SAME", dimension_numbers=("NCHW", "OIHW", "NCHW"),
        precision=lax.Precision.HIGHEST)
    h = jnp.maximum(conv(Y, params["w1"]) + params["b1"][None, :, None, None], 0.0)
    Y2 = conv(h, params["w2"]) + params["b2"][None, :, None, None]
    # grid_to_stack: 'b d m2 m1 -> b (m1 m2) d'
    y_stack = Y2.transpose(0, 3, 2, 1).reshape(B, M, Fy)
    return _rbf_smooth_ref(x_target, xg_b, y_stack, params["output_lengthscale"],
                           "ksum" if params["normalise_output"] else "none")


# --------------------------------------------------------------------------- #
if __name__ == "__main__":
    B, N_ctx, N_tgt, dim, Fy, hidden = 2, 8, 8, 2, 2, 32
    n_axes = (16, 16)
    grid_ranges = ((-3.0, 3.0), (-3.0, 3.0))

    # regular grid, same construction as DiscretisedRKHSEmbedding (meshgrid 'ij')
    axes = [jnp.linspace(r[0], r[1], n) for r, n in zip(grid_ranges, n_axes)]
    grid_pts = jnp.stack(jnp.meshgrid(*axes, indexing="ij"), axis=-1).reshape(-1, dim)

    key = jax.random.PRNGKey(0)
    kw1, kb1, kw2, kb2, kx, ky, kt = jax.random.split(key, 7)

    C1 = Fy + 1  # density channel + Fy feature channels
    # TODO(synk): the module takes an arbitrary `cnn`; a concrete
    # Conv3x3 -> ReLU -> Conv3x3 stack (PyTorch OIHW weights) is implemented here.
    w1 = 0.1 * jax.random.normal(kw1, (hidden, C1, 3, 3), jnp.float32)
    b1 = 0.1 * jax.random.normal(kb1, (hidden,), jnp.float32)
    w2 = 0.1 * jax.random.normal(kw2, (Fy, hidden, 3, 3), jnp.float32)
    b2 = 0.1 * jax.random.normal(kb2, (Fy,), jnp.float32)

    params = dict(
        grid=grid_pts, n_axes=n_axes,
        w1=w1, b1=b1, w2=w2, b2=b2,
        embed_lengthscale=0.8, output_lengthscale=0.8,
        normalise_embedding=True, normalise_output=True,
    )

    X_context = jax.random.uniform(kx, (B, N_ctx, dim), jnp.float32, -3.0, 3.0)
    Y_context = jax.random.normal(ky, (B, N_ctx, Fy), jnp.float32)
    X_target = jax.random.uniform(kt, (B, N_tgt, dim), jnp.float32, -3.0, 3.0)

    out = on_grid_equiv_deepset_forward(params, X_context, Y_context, X_target)
    out = jax.block_until_ready(out)

    ref = _forward_ref(params, X_context, Y_context, X_target)
    assert out.shape == (B, N_tgt, Fy)
    assert bool(jnp.all(jnp.isfinite(out)))
    # bf16 MXU operands + EUP approximate reciprocals vs an f32 HIGHEST-precision
    # reference -> 3e-2 tolerance.
    assert bool(jnp.allclose(out, ref, rtol=3e-2, atol=3e-2)), (
        "max abs diff = %f" % float(jnp.max(jnp.abs(out - ref))))

    print("KERNEL_OK")
</pallas_src>

<mosaic_0001>
module attributes {stable_mosaic.version = 11 : i64} {
  func.func @_fused_kernel(%arg0: i32, %arg1: memref<256x2xf32, #tpu.memory_space<vmem>>, %arg2: memref<1x2x8xf32, #tpu.memory_space<vmem>>, %arg3: memref<1x8x3xf32, #tpu.memory_space<vmem>>, %arg4: memref<1x2x8xf32, #tpu.memory_space<vmem>>, %arg5: memref<3x3x3x32xf32, #tpu.memory_space<vmem>>, %arg6: memref<1x32xf32, #tpu.memory_space<vmem>>, %arg7: memref<3x3x32x2xf32, #tpu.memory_space<vmem>>, %arg8: memref<1x2xf32, #tpu.memory_space<vmem>>, %arg9: memref<1x2x8xf32, #tpu.memory_space<vmem>>, %arg10: memref<18x32x3xf32, #tpu.memory_space<vmem>>, %arg11: memref<18x32x32xf32, #tpu.memory_space<vmem>>) attributes {dimension_semantics = [#tpu.dimension_semantics<parallel>], iteration_bounds = array<i64: 2>, scalar_prefetch = 0 : i64, scratch_operands = 2 : i64, tpu.core_type = #tpu.core_type<tc>, window_params = [{pipeline_mode = #tpu.pipeline_mode<synchronous>, transform_indices = @transform_0, window_bounds = array<i64: 256, 2>}, {transform_indices = @transform_1, window_bounds = array<i64: 1, 2, 8>}, {transform_indices = @transform_2, window_bounds = array<i64: 1, 8, 3>}, {transform_indices = @transform_3, window_bounds = array<i64: 1, 2, 8>}, {pipeline_mode = #tpu.pipeline_mode<synchronous>, transform_indices = @transform_4, window_bounds = array<i64: 3, 3, 3, 32>}, {pipeline_mode = #tpu.pipeline_mode<synchronous>, transform_indices = @transform_5, window_bounds = array<i64: 1, 32>}, {pipeline_mode = #tpu.pipeline_mode<synchronous>, transform_indices = @transform_6, window_bounds = array<i64: 3, 3, 32, 2>}, {pipeline_mode = #tpu.pipeline_mode<synchronous>, transform_indices = @transform_7, window_bounds = array<i64: 1, 2>}, {transform_indices = @transform_8, window_bounds = array<i64: 1, 2, 8>}]} {
    %c0 = arith.constant 0 : index
    %c0_0 = arith.constant 0 : index
    %0 = vector.load %arg1[%c0, %c0_0] : memref<256x2xf32, #tpu.memory_space<vmem>>, vector<256x2xf32>
    %c0_1 = arith.constant 0 : index
    %c0_2 = arith.constant 0 : index
    %c0_3 = arith.constant 0 : index
    %1 = vector.load %arg2[%c0_1, %c0_2, %c0_3] : memref<1x2x8xf32, #tpu.memory_space<vmem>>, vector<1x2x8xf32>
    %2 = vector.shape_cast %1 : vector<1x2x8xf32> to vector<2x8xf32>
    %c0_4 = arith.constant 0 : index
    %c0_5 = arith.constant 0 : index
    %c0_6 = arith.constant 0 : index
    %3 = vector.load %arg3[%c0_4, %c0_5, %c0_6] : memref<1x8x3xf32, #tpu.memory_space<vmem>>, vector<1x8x3xf32>
    %4 = vector.shape_cast %3 : vector<1x8x3xf32> to vector<8x3xf32>
    %c0_7 = arith.constant 0 : index
    %c0_8 = arith.constant 0 : index
    %c0_9 = arith.constant 0 : index
    %5 = vector.load %arg4[%c0_7, %c0_8, %c0_9] : memref<1x2x8xf32, #tpu.memory_space<vmem>>, vector<1x2x8xf32>
    %6 = vector.shape_cast %5 : vector<1x2x8xf32> to vector<2x8xf32>
    %cst = arith.constant 0.000000e+00 : f32
    %7 = vector.broadcast %cst : f32 to vector<256x8xf32>
    %8 = vector.extract_strided_slice %0 {offsets = [0, 0], sizes = [256, 1], strides = [1, 1]} : vector<256x2xf32> to vector<256x1xf32>
    %9 = vector.extract_strided_slice %2 {offsets = [0, 0], sizes = [1, 8], strides = [1, 1]} : vector<2x8xf32> to vector<1x8xf32>
    %10 = vector.broadcast %8 : vector<256x1xf32> to vector<256x8xf32>
    %11 = vector.broadcast %9 : vector<1x8xf32> to vector<256x8xf32>
    %12 = arith.subf %10, %11 : vector<256x8xf32>
    %13 = arith.mulf %12, %12 : vector<256x8xf32>
    %14 = arith.addf %7, %13 : vector<256x8xf32>
    %15 = vector.extract_strided_slice %0 {offsets = [0, 1], sizes = [256, 1], strides = [1, 1]} : vector<256x2xf32> to vector<256x1xf32>
    %16 = vector.extract_strided_slice %2 {offsets = [1, 0], sizes = [1, 8], strides = [1, 1]} : vector<2x8xf32> to vector<1x8xf32>
    %17 = vector.broadcast %15 : vector<256x1xf32> to vector<256x8xf32>
    %18 = vector.broadcast %16 : vector<1x8xf32> to vector<256x8xf32>
    %19 = arith.subf %17, %18 : vector<256x8xf32>
    %20 = arith.mulf %19, %19 : vector<256x8xf32>
    %21 = arith.addf %14, %20 : vector<256x8xf32>
    %cst_10 = arith.constant -7.812500e-01 : f32
    %22 = vector.broadcast %cst_10 : f32 to vector<256x8xf32>
    %23 = arith.mulf %21, %22 : vector<256x8xf32>
    %24 = math.exp %23 : vector<256x8xf32>
    %25 = arith.truncf %24 : vector<256x8xf32> to vector<256x8xbf16>
    %26 = arith.truncf %4 : vector<8x3xf32> to vector<8x3xbf16>
    %cst_11 = arith.constant dense<0.000000e+00> : vector<256x3xf32>
    %27 = tpu.matmul %25, %26, %cst_11 {dimension_numbers = #tpu.dot_dimension_numbers<[1], [0], [0], [1], [0, 0, 1, 1], [], []>} : vector<256x8xbf16>, vector<8x3xbf16>, vector<256x3xf32> -> vector<256x3xf32>
    %28 = vector.extract_strided_slice %27 {offsets = [0, 0], sizes = [256, 1], strides = [1, 1]} : vector<256x3xf32> to vector<256x1xf32>
    %cst_12 = arith.constant 9.99999997E-7 : f32
    %29 = vector.broadcast %cst_12 : f32 to vector<256x1xf32>
    %30 = arith.addf %28, %29 : vector<256x1xf32>
    %31 = tpu.reciprocal %30 {approx = true} : vector<256x1xf32> -> vector<256x1xf32>
    %32 = tpu.iota {dimensions = array<i32: 1>} : vector<256x3xi32>
    %c0_i32 = arith.constant 0 : i32
    %33 = vector.broadcast %c0_i32 : i32 to vector<256x3xi32>
    %34 = arith.cmpi eq, %32, %33 : vector<256x3xi32>
    %cst_13 = arith.constant 1.000000e+00 : f32
    %35 = vector.broadcast %cst_13 : f32 to vector<256x3xf32>
    %36 = vector.shape_cast %31 : vector<256x1xf32> to vector<256x1xf32>
    %37 = vector.broadcast %36 : vector<256x1xf32> to vector<256x3xf32>
    %38 = arith.select %34, %35, %37 : vector<256x3xi1>, vector<256x3xf32>
    %39 = arith.mulf %27, %38 : vector<256x3xf32>
    %40 = vector.shape_cast %39 : vector<256x3xf32> to vector<16x16x3xf32>
    %cst_14 = arith.constant 0.000000e+00 : f32
    %41 = vector.broadcast %cst_14 : f32 to vector<18x32x3xf32>
    %c0_15 = arith.constant 0 : index
    %c0_16 = arith.constant 0 : index
    %c0_17 = arith.constant 0 : index
    %42 = vector.load %arg10[%c0_15, %c0_16, %c0_17] : memref<18x32x3xf32, #tpu.memory_space<vmem>>, vector<18x32x3xf32>
    tpu.vector_store %arg10[%c0_15, %c0_16, %c0_17], %41 {strides = array<i32>} : memref<18x32x3xf32, #tpu.memory_space<vmem>>, vector<18x32x3xf32>,
    %c1 = arith.constant 1 : index
    %c8 = arith.constant 8 : index
    %c0_18 = arith.constant 0 : index
    %43 = vector.load %arg10[%c1, %c8, %c0_18] : memref<18x32x3xf32, #tpu.memory_space<vmem>>, vector<16x16x3xf32>
    tpu.vector_store %arg10[%c1, %c8, %c0_18], %40 {strides = array<i32>} : memref<18x32x3xf32, #tpu.memory_space<vmem>>, vector<16x16x3xf32>,
    %c0_19 = arith.constant 0 : index
    %c0_20 = arith.constant 0 : index
    %c0_21 = arith.constant 0 : index
    %44 = vector.load %arg10[%c0_19, %c0_20, %c0_21] : memref<18x32x3xf32, #tpu.memory_space<vmem>>, vector<18x32x3xf32>
    %cst_22 = arith.constant 0.000000e+00 : f32
    %45 = vector.broadcast %cst_22 : f32 to vector<256x32xf32>
    %46 = vector.extract_strided_slice %44 {offsets = [0, 7, 0], sizes = [16, 16, 3], strides = [1, 1, 1]} : vector<18x32x3xf32> to vector<16x16x3xf32>
    %47 = vector.shape_cast %46 : vector<16x16x3xf32> to vector<256x3xf32>
    %48 = arith.truncf %47 : vector<256x3xf32> to vector<256x3xbf16>
    %c0_23 = arith.constant 0 : index
    %c0_24 = arith.constant 0 : index
    %c0_25 = arith.constant 0 : index
    %c0_26 = arith.constant 0 : index
    %49 = vector.load %arg5[%c0_23, %c0_24, %c0_25, %c0_26] : memref<3x3x3x32xf32, #tpu.memory_space<vmem>>, vector<1x1x3x32xf32>
    %50 = vector.shape_cast %49 : vector<1x1x3x32xf32> to vector<3x32xf32>
    %51 = arith.truncf %50 : vector<3x32xf32> to vector<3x32xbf16>
    %cst_27 = arith.constant dense<0.000000e+00> : vector<256x32xf32>
    %52 = tpu.matmul %48, %51, %cst_27 {dimension_numbers = #tpu.dot_dimension_numbers<[1], [0], [0], [1], [0, 0, 1, 1], [], []>} : vector<256x3xbf16>, vector<3x32xbf16>, vector<256x32xf32> -> vector<256x32xf32>
    %53 = arith.addf %45, %52 : vector<256x32xf32>
    %54 = vector.extract_strided_slice %44 {offsets = [0, 8, 0], sizes = [16, 16, 3], strides = [1, 1, 1]} : vector<18x32x3xf32> to vector<16x16x3xf32>
    %55 = vector.shape_cast %54 : vector<16x16x3xf32> to vector<256x3xf32>
    %56 = arith.truncf %55 : vector<256x3xf32> to vector<256x3xbf16>
    %c0_28 = arith.constant 0 : index
    %c1_29 = arith.constant 1 : index
    %c0_30 = arith.constant 0 : index
    %c0_31 = arith.constant 0 : index
    %57 = vector.load %arg5[%c0_28, %c1_29, %c0_30, %c0_31] : memref<3x3x3x32xf32, #tpu.memory_space<vmem>>, vector<1x1x3x32xf32>
    %58 = vector.shape_cast %57 : vector<1x1x3x32xf32> to vector<3x32xf32>
    %59 = arith.truncf %58 : vector<3x32xf32> to vector<3x32xbf16>
    %cst_32 = arith.constant dense<0.000000e+00> : vector<256x32xf32>
    %60 = tpu.matmul %56, %59, %cst_32 {dimension_numbers = #tpu.dot_dimension_numbers<[1], [0], [0], [1], [0, 0, 1, 1], [], []>} : vector<256x3xbf16>, vector<3x32xbf16>, vector<256x32xf32> -> vector<256x32xf32>
    %61 = arith.addf %53, %60 : vector<256x32xf32>
    %62 = vector.extract_strided_slice %44 {offsets = [0, 9, 0], sizes = [16, 16, 3], strides = [1, 1, 1]} : vector<18x32x3xf32> to vector<16x16x3xf32>
    %63 = vector.shape_cast %62 : vector<16x16x3xf32> to vector<256x3xf32>
    %64 = arith.truncf %63 : vector<256x3xf32> to vector<256x3xbf16>
    %c0_33 = arith.constant 0 : index
    %c2 = arith.constant 2 : index
    %c0_34 = arith.constant 0 : index
    %c0_35 = arith.constant 0 : index
    %65 = vector.load %arg5[%c0_33, %c2, %c0_34, %c0_35] : memref<3x3x3x32xf32, #tpu.memory_space<vmem>>, vector<1x1x3x32xf32>
    %66 = vector.shape_cast %65 : vector<1x1x3x32xf32> to vector<3x32xf32>
    %67 = arith.truncf %66 : vector<3x32xf32> to vector<3x32xbf16>
    %cst_36 = arith.constant dense<0.000000e+00> : vector<256x32xf32>
    %68 = tpu.matmul %64, %67, %cst_36 {dimension_numbers = #tpu.dot_dimension_numbers<[1], [0], [0], [1], [0, 0, 1, 1], [], []>} : vector<256x3xbf16>, vector<3x32xbf16>, vector<256x32xf32> -> vector<256x32xf32>
    %69 = arith.addf %61, %68 : vector<256x32xf32>
    %70 = vector.extract_strided_slice %44 {offsets = [1, 7, 0], sizes = [16, 16, 3], strides = [1, 1, 1]} : vector<18x32x3xf32> to vector<16x16x3xf32>
    %71 = vector.shape_cast %70 : vector<16x16x3xf32> to vector<256x3xf32>
    %72 = arith.truncf %71 : vector<256x3xf32> to vector<256x3xbf16>
    %c1_37 = arith.constant 1 : index
    %c0_38 = arith.constant 0 : index
    %c0_39 = arith.constant 0 : index
    %c0_40 = arith.constant 0 : index
    %73 = vector.load %arg5[%c1_37, %c0_38, %c0_39, %c0_40] : memref<3x3x3x32xf32, #tpu.memory_space<vmem>>, vector<1x1x3x32xf32>
    %74 = vector.shape_cast %73 : vector<1x1x3x32xf32> to vector<3x32xf32>
    %75 = arith.truncf %74 : vector<3x32xf32> to vector<3x32xbf16>
    %cst_41 = arith.constant dense<0.000000e+00> : vector<256x32xf32>
    %76 = tpu.matmul %72, %75, %cst_41 {dimension_numbers = #tpu.dot_dimension_numbers<[1], [0], [0], [1], [0, 0, 1, 1], [], []>} : vector<256x3xbf16>, vector<3x32xbf16>, vector<256x32xf32> -> vector<256x32xf32>
    %77 = arith.addf %69, %76 : vector<256x32xf32>
    %78 = vector.extract_strided_slice %44 {offsets = [1, 8, 0], sizes = [16, 16, 3], strides = [1, 1, 1]} : vector<18x32x3xf32> to vector<16x16x3xf32>
    %79 = vector.shape_cast %78 : vector<16x16x3xf32> to vector<256x3xf32>
    %80 = arith.truncf %79 : vector<256x3xf32> to vector<256x3xbf16>
    %c1_42 = arith.constant 1 : index
    %c1_43 = arith.constant 1 : index
    %c0_44 = arith.constant 0 : index
    %c0_45 = arith.constant 0 : index
    %81 = vector.load %arg5[%c1_42, %c1_43, %c0_44, %c0_45] : memref<3x3x3x32xf32, #tpu.memory_space<vmem>>, vector<1x1x3x32xf32>
    %82 = vector.shape_cast %81 : vector<1x1x3x32xf32> to vector<3x32xf32>
    %83 = arith.truncf %82 : vector<3x32xf32> to vector<3x32xbf16>
    %cst_46 = arith.constant dense<0.000000e+00> : vector<256x32xf32>
    %84 = tpu.matmul %80, %83, %cst_46 {dimension_numbers = #tpu.dot_dimension_numbers<[1], [0], [0], [1], [0, 0, 1, 1], [], []>} : vector<256x3xbf16>, vector<3x32xbf16>, vector<256x32xf32> -> vector<256x32xf32>
    %85 = arith.addf %77, %84 : vector<256x32xf32>
    %86 = vector.extract_strided_slice %44 {offsets = [1, 9, 0], sizes = [16, 16, 3], strides = [1, 1, 1]} : vector<18x32x3xf32> to vector<16x16x3xf32>
    %87 = vector.shape_cast %86 : vector<16x16x3xf32> to vector<256x3xf32>
    %88 = arith.truncf %87 : vector<256x3xf32> to vector<256x3xbf16>
    %c1_47 = arith.constant 1 : index
    %c2_48 = arith.constant 2 : index
    %c0_49 = arith.constant 0 : index
    %c0_50 = arith.constant 0 : index
    %89 = vector.load %arg5[%c1_47, %c2_48, %c0_49, %c0_50] : memref<3x3x3x32xf32, #tpu.memory_space<vmem>>, vector<1x1x3x32xf32>
    %90 = vector.shape_cast %89 : vector<1x1x3x32xf32> to vector<3x32xf32>
    %91 = arith.truncf %90 : vector<3x32xf32> to vector<3x32xbf16>
    %cst_51 = arith.constant dense<0.000000e+00> : vector<256x32xf32>
    %92 = tpu.matmul %88, %91, %cst_51 {dimension_numbers = #tpu.dot_dimension_numbers<[1], [0], [0], [1], [0, 0, 1, 1], [], []>} : vector<256x3xbf16>, vector<3x32xbf16>, vector<256x32xf32> -> vector<256x32xf32>
    %93 = arith.addf %85, %92 : vector<256x32xf32>
    %94 = vector.extract_strided_slice %44 {offsets = [2, 7, 0], sizes = [16, 16, 3], strides = [1, 1, 1]} : vector<18x32x3xf32> to vector<16x16x3xf32>
    %95 = vector.shape_cast %94 : vector<16x16x3xf32> to vector<256x3xf32>
    %96 = arith.truncf %95 : vector<256x3xf32> to vector<256x3xbf16>
    %c2_52 = arith.constant 2 : index
    %c0_53 = arith.constant 0 : index
    %c0_54 = arith.constant 0 : index
    %c0_55 = arith.constant 0 : index
    %97 = vector.load %arg5[%c2_52, %c0_53, %c0_54, %c0_55] : memref<3x3x3x32xf32, #tpu.memory_space<vmem>>, vector<1x1x3x32xf32>
    %98 = vector.shape_cast %97 : vector<1x1x3x32xf32> to vector<3x32xf32>
    %99 = arith.truncf %98 : vector<3x32xf32> to vector<3x32xbf16>
    %cst_56 = arith.constant dense<0.000000e+00> : vector<256x32xf32>
    %100 = tpu.matmul %96, %99, %cst_56 {dimension_numbers = #tpu.dot_dimension_numbers<[1], [0], [0], [1], [0, 0, 1, 1], [], []>} : vector<256x3xbf16>, vector<3x32xbf16>, vector<256x32xf32> -> vector<256x32xf32>
    %101 = arith.addf %93, %100 : vector<256x32xf32>
    %102 = vector.extract_strided_slice %44 {offsets = [2, 8, 0], sizes = [16, 16, 3], strides = [1, 1, 1]} : vector<18x32x3xf32> to vector<16x16x3xf32>
    %103 = vector.shape_cast %102 : vector<16x16x3xf32> to vector<256x3xf32>
    %104 = arith.truncf %103 : vector<256x3xf32> to vector<256x3xbf16>
    %c2_57 = arith.constant 2 : index
    %c1_58 = arith.constant 1 : index
    %c0_59 = arith.constant 0 : index
    %c0_60 = arith.constant 0 : index
    %105 = vector.load %arg5[%c2_57, %c1_58, %c0_59, %c0_60] : memref<3x3x3x32xf32, #tpu.memory_space<vmem>>, vector<1x1x3x32xf32>
    %106 = vector.shape_cast %105 : vector<1x1x3x32xf32> to vector<3x32xf32>
    %107 = arith.truncf %106 : vector<3x32xf32> to vector<3x32xbf16>
    %cst_61 = arith.constant dense<0.000000e+00> : vector<256x32xf32>
    %108 = tpu.matmul %104, %107, %cst_61 {dimension_numbers = #tpu.dot_dimension_numbers<[1], [0], [0], [1], [0, 0, 1, 1], [], []>} : vector<256x3xbf16>, vector<3x32xbf16>, vector<256x32xf32> -> vector<256x32xf32>
    %109 = arith.addf %101, %108 : vector<256x32xf32>
    %110 = vector.extract_strided_slice %44 {offsets = [2, 9, 0], sizes = [16, 16, 3], strides = [1, 1, 1]} : vector<18x32x3xf32> to vector<16x16x3xf32>
    %111 = vector.shape_cast %110 : vector<16x16x3xf32> to vector<256x3xf32>
    %112 = arith.truncf %111 : vector<256x3xf32> to vector<256x3xbf16>
    %c2_62 = arith.constant 2 : index
    %c2_63 = arith.constant 2 : index
    %c0_64 = arith.constant 0 : index
    %c0_65 = arith.constant 0 : index
    %113 = vector.load %arg5[%c2_62, %c2_63, %c0_64, %c0_65] : memref<3x3x3x32xf32, #tpu.memory_space<vmem>>, vector<1x1x3x32xf32>
    %114 = vector.shape_cast %113 : vector<1x1x3x32xf32> to vector<3x32xf32>
    %115 = arith.truncf %114 : vector<3x32xf32> to vector<3x32xbf16>
    %cst_66 = arith.constant dense<0.000000e+00> : vector<256x32xf32>
    %116 = tpu.matmul %112, %115, %cst_66 {dimension_numbers = #tpu.dot_dimension_numbers<[1], [0], [0], [1], [0, 0, 1, 1], [], []>} : vector<256x3xbf16>, vector<3x32xbf16>, vector<256x32xf32> -> vector<256x32xf32>
    %117 = arith.addf %109, %116 : vector<256x32xf32>
    %c0_67 = arith.constant 0 : index
    %c0_68 = arith.constant 0 : index
    %118 = vector.load %arg6[%c0_67, %c0_68] : memref<1x32xf32, #tpu.memory_space<vmem>>, vector<1x32xf32>
    %119 = vector.broadcast %118 : vector<1x32xf32> to vector<256x32xf32>
    %120 = arith.addf %117, %119 : vector<256x32xf32>
    %cst_69 = arith.constant 0.000000e+00 : f32
    %121 = vector.broadcast %cst_69 : f32 to vector<256x32xf32>
    %122 = arith.maximumf %120, %121 : vector<256x32xf32>
    %123 = vector.shape_cast %122 : vector<256x32xf32> to vector<16x16x32xf32>
    %cst_70 = arith.constant 0.000000e+00 : f32
    %124 = vector.broadcast %cst_70 : f32 to vector<18x32x32xf32>
    %c0_71 = arith.constant 0 : index
    %c0_72 = arith.constant 0 : index
    %c0_73 = arith.constant 0 : index
    %125 = vector.load %arg11[%c0_71, %c0_72, %c0_73] : memref<18x32x32xf32, #tpu.memory_space<vmem>>, vector<18x32x32xf32>
    tpu.vector_store %arg11[%c0_71, %c0_72, %c0_73], %124 {strides = array<i32>} : memref<18x32x32xf32, #tpu.memory_space<vmem>>, vector<18x32x32xf32>,
    %c1_74 = arith.constant 1 : index
    %c8_75 = arith.constant 8 : index
    %c0_76 = arith.constant 0 : index
    %126 = vector.load %arg11[%c1_74, %c8_75, %c0_76] : memref<18x32x32xf32, #tpu.memory_space<vmem>>, vector<16x16x32xf32>
    tpu.vector_store %arg11[%c1_74, %c8_75, %c0_76], %123 {strides = array<i32>} : memref<18x32x32xf32, #tpu.memory_space<vmem>>, vector<16x16x32xf32>,
    %c0_77 = arith.constant 0 : index
    %c0_78 = arith.constant 0 : index
    %c0_79 = arith.constant 0 : index
    %127 = vector.load %arg11[%c0_77, %c0_78, %c0_79] : memref<18x32x32xf32, #tpu.memory_space<vmem>>, vector<18x32x32xf32>
    %cst_80 = arith.constant 0.000000e+00 : f32
    %128 = vector.broadcast %cst_80 : f32 to vector<256x2xf32>
    %129 = vector.extract_strided_slice %127 {offsets = [0, 7, 0], sizes = [16, 16, 32], strides = [1, 1, 1]} : vector<18x32x32xf32> to vector<16x16x32xf32>
    %130 = vector.shape_cast %129 : vector<16x16x32xf32> to vector<256x32xf32>
    %131 = arith.truncf %130 : vector<256x32xf32> to vector<256x32xbf16>
    %c0_81 = arith.constant 0 : index
    %c0_82 = arith.constant 0 : index
    %c0_83 = arith.constant 0 : index
    %c0_84 = arith.constant 0 : index
    %132 = vector.load %arg7[%c0_81, %c0_82, %c0_83, %c0_84] : memref<3x3x32x2xf32, #tpu.memory_space<vmem>>, vector<1x1x32x2xf32>
    %133 = vector.shape_cast %132 : vector<1x1x32x2xf32> to vector<32x2xf32>
    %134 = arith.truncf %133 : vector<32x2xf32> to vector<32x2xbf16>
    %cst_85 = arith.constant dense<0.000000e+00> : vector<256x2xf32>
    %135 = tpu.matmul %131, %134, %cst_85 {dimension_numbers = #tpu.dot_dimension_numbers<[1], [0], [0], [1], [0, 0, 1, 1], [], []>} : vector<256x32xbf16>, vector<32x2xbf16>, vector<256x2xf32> -> vector<256x2xf32>
    %136 = arith.addf %128, %135 : vector<256x2xf32>
    %137 = vector.extract_strided_slice %127 {offsets = [0, 8, 0], sizes = [16, 16, 32], strides = [1, 1, 1]} : vector<18x32x32xf32> to vector<16x16x32xf32>
    %138 = vector.shape_cast %137 : vector<16x16x32xf32> to vector<256x32xf32>
    %139 = arith.truncf %138 : vector<256x32xf32> to vector<256x32xbf16>
    %c0_86 = arith.constant 0 : index
    %c1_87 = arith.constant 1 : index
    %c0_88 = arith.constant 0 : index
    %c0_89 = arith.constant 0 : index
    %140 = vector.load %arg7[%c0_86, %c1_87, %c0_88, %c0_89] : memref<3x3x32x2xf32, #tpu.memory_space<vmem>>, vector<1x1x32x2xf32>
    %141 = vector.shape_cast %140 : vector<1x1x32x2xf32> to vector<32x2xf32>
    %142 = arith.truncf %141 : vector<32x2xf32> to vector<32x2xbf16>
    %cst_90 = arith.constant dense<0.000000e+00> : vector<256x2xf32>
    %143 = tpu.matmul %139, %142, %cst_90 {dimension_numbers = #tpu.dot_dimension_numbers<[1], [0], [0], [1], [0, 0, 1, 1], [], []>} : vector<256x32xbf16>, vector<32x2xbf16>, vector<256x2xf32> -> vector<256x2xf32>
    %144 = arith.addf %136, %143 : vector<256x2xf32>
    %145 = vector.extract_strided_slice %127 {offsets = [0, 9, 0], sizes = [16, 16, 32], strides = [1, 1, 1]} : vector<18x32x32xf32> to vector<16x16x32xf32>
    %146 = vector.shape_cast %145 : vector<16x16x32xf32> to vector<256x32xf32>
    %147 = arith.truncf %146 : vector<256x32xf32> to vector<256x32xbf16>
    %c0_91 = arith.constant 0 : index
    %c2_92 = arith.constant 2 : index
    %c0_93 = arith.constant 0 : index
    %c0_94 = arith.constant 0 : index
    %148 = vector.load %arg7[%c0_91, %c2_92, %c0_93, %c0_94] : memref<3x3x32x2xf32, #tpu.memory_space<vmem>>, vector<1x1x32x2xf32>
    %149 = vector.shape_cast %148 : vector<1x1x32x2xf32> to vector<32x2xf32>
    %150 = arith.truncf %149 : vector<32x2xf32> to vector<32x2xbf16>
    %cst_95 = arith.constant dense<0.000000e+00> : vector<256x2xf32>
    %151 = tpu.matmul %147, %150, %cst_95 {dimension_numbers = #tpu.dot_dimension_numbers<[1], [0], [0], [1], [0, 0, 1, 1], [], []>} : vector<256x32xbf16>, vector<32x2xbf16>, vector<256x2xf32> -> vector<256x2xf32>
    %152 = arith.addf %144, %151 : vector<256x2xf32>
    %153 = vector.extract_strided_slice %127 {offsets = [1, 7, 0], sizes = [16, 16, 32], strides = [1, 1, 1]} : vector<18x32x32xf32> to vector<16x16x32xf32>
    %154 = vector.shape_cast %153 : vector<16x16x32xf32> to vector<256x32xf32>
    %155 = arith.truncf %154 : vector<256x32xf32> to vector<256x32xbf16>
    %c1_96 = arith.constant 1 : index
    %c0_97 = arith.constant 0 : index
    %c0_98 = arith.constant 0 : index
    %c0_99 = arith.constant 0 : index
    %156 = vector.load %arg7[%c1_96, %c0_97, %c0_98, %c0_99] : memref<3x3x32x2xf32, #tpu.memory_space<vmem>>, vector<1x1x32x2xf32>
    %157 = vector.shape_cast %156 : vector<1x1x32x2xf32> to vector<32x2xf32>
    %158 = arith.truncf %157 : vector<32x2xf32> to vector<32x2xbf16>
    %cst_100 = arith.constant dense<0.000000e+00> : vector<256x2xf32>
    %159 = tpu.matmul %155, %158, %cst_100 {dimension_numbers = #tpu.dot_dimension_numbers<[1], [0], [0], [1], [0, 0, 1, 1], [], []>} : vector<256x32xbf16>, vector<32x2xbf16>, vector<256x2xf32> -> vector<256x2xf32>
    %160 = arith.addf %152, %159 : vector<256x2xf32>
    %161 = vector.extract_strided_slice %127 {offsets = [1, 8, 0], sizes = [16, 16, 32], strides = [1, 1, 1]} : vector<18x32x32xf32> to vector<16x16x32xf32>
    %162 = vector.shape_cast %161 : vector<16x16x32xf32> to vector<256x32xf32>
    %163 = arith.truncf %162 : vector<256x32xf32> to vector<256x32xbf16>
    %c1_101 = arith.constant 1 : index
    %c1_102 = arith.constant 1 : index
    %c0_103 = arith.constant 0 : index
    %c0_104 = arith.constant 0 : index
    %164 = vector.load %arg7[%c1_101, %c1_102, %c0_103, %c0_104] : memref<3x3x32x2xf32, #tpu.memory_space<vmem>>, vector<1x1x32x2xf32>
    %165 = vector.shape_cast %164 : vector<1x1x32x2xf32> to vector<32x2xf32>
    %166 = arith.truncf %165 : vector<32x2xf32> to vector<32x2xbf16>
    %cst_105 = arith.constant dense<0.000000e+00> : vector<256x2xf32>
    %167 = tpu.matmul %163, %166, %cst_105 {dimension_numbers = #tpu.dot_dimension_numbers<[1], [0], [0], [1], [0, 0, 1, 1], [], []>} : vector<256x32xbf16>, vector<32x2xbf16>, vector<256x2xf32> -> vector<256x2xf32>
    %168 = arith.addf %160, %167 : vector<256x2xf32>
    %169 = vector.extract_strided_slice %127 {offsets = [1, 9, 0], sizes = [16, 16, 32], strides = [1, 1, 1]} : vector<18x32x32xf32> to vector<16x16x32xf32>
    %170 = vector.shape_cast %169 : vector<16x16x32xf32> to vector<256x32xf32>
    %171 = arith.truncf %170 : vector<256x32xf32> to vector<256x32xbf16>
    %c1_106 = arith.constant 1 : index
    %c2_107 = arith.constant 2 : index
    %c0_108 = arith.constant 0 : index
    %c0_109 = arith.constant 0 : index
    %172 = vector.load %arg7[%c1_106, %c2_107, %c0_108, %c0_109] : memref<3x3x32x2xf32, #tpu.memory_space<vmem>>, vector<1x1x32x2xf32>
    %173 = vector.shape_cast %172 : vector<1x1x32x2xf32> to vector<32x2xf32>
    %174 = arith.truncf %173 : vector<32x2xf32> to vector<32x2xbf16>
    %cst_110 = arith.constant dense<0.000000e+00> : vector<256x2xf32>
    %175 = tpu.matmul %171, %174, %cst_110 {dimension_numbers = #tpu.dot_dimension_numbers<[1], [0], [0], [1], [0, 0, 1, 1], [], []>} : vector<256x32xbf16>, vector<32x2xbf16>, vector<256x2xf32> -> vector<256x2xf32>
    %176 = arith.addf %168, %175 : vector<256x2xf32>
    %177 = vector.extract_strided_slice %127 {offsets = [2, 7, 0], sizes = [16, 16, 32], strides = [1, 1, 1]} : vector<18x32x32xf32> to vector<16x16x32xf32>
    %178 = vector.shape_cast %177 : vector<16x16x32xf32> to vector<256x32xf32>
    %179 = arith.truncf %178 : vector<256x32xf32> to vector<256x32xbf16>
    %c2_111 = arith.constant 2 : index
    %c0_112 = arith.constant 0 : index
    %c0_113 = arith.constant 0 : index
    %c0_114 = arith.constant 0 : index
    %180 = vector.load %arg7[%c2_111, %c0_112, %c0_113, %c0_114] : memref<3x3x32x2xf32, #tpu.memory_space<vmem>>, vector<1x1x32x2xf32>
    %181 = vector.shape_cast %180 : vector<1x1x32x2xf32> to vector<32x2xf32>
    %182 = arith.truncf %181 : vector<32x2xf32> to vector<32x2xbf16>
    %cst_115 = arith.constant dense<0.000000e+00> : vector<256x2xf32>
    %183 = tpu.matmul %179, %182, %cst_115 {dimension_numbers = #tpu.dot_dimension_numbers<[1], [0], [0], [1], [0, 0, 1, 1], [], []>} : vector<256x32xbf16>, vector<32x2xbf16>, vector<256x2xf32> -> vector<256x2xf32>
    %184 = arith.addf %176, %183 : vector<256x2xf32>
    %185 = vector.extract_strided_slice %127 {offsets = [2, 8, 0], sizes = [16, 16, 32], strides = [1, 1, 1]} : vector<18x32x32xf32> to vector<16x16x32xf32>
    %186 = vector.shape_cast %185 : vector<16x16x32xf32> to vector<256x32xf32>
    %187 = arith.truncf %186 : vector<256x32xf32> to vector<256x32xbf16>
    %c2_116 = arith.constant 2 : index
    %c1_117 = arith.constant 1 : index
    %c0_118 = arith.constant 0 : index
    %c0_119 = arith.constant 0 : index
    %188 = vector.load %arg7[%c2_116, %c1_117, %c0_118, %c0_119] : memref<3x3x32x2xf32, #tpu.memory_space<vmem>>, vector<1x1x32x2xf32>
    %189 = vector.shape_cast %188 : vector<1x1x32x2xf32> to vector<32x2xf32>
    %190 = arith.truncf %189 : vector<32x2xf32> to vector<32x2xbf16>
    %cst_120 = arith.constant dense<0.000000e+00> : vector<256x2xf32>
    %191 = tpu.matmul %187, %190, %cst_120 {dimension_numbers = #tpu.dot_dimension_numbers<[1], [0], [0], [1], [0, 0, 1, 1], [], []>} : vector<256x32xbf16>, vector<32x2xbf16>, vector<256x2xf32> -> vector<256x2xf32>
    %192 = arith.addf %184, %191 : vector<256x2xf32>
    %193 = vector.extract_strided_slice %127 {offsets = [2, 9, 0], sizes = [16, 16, 32], strides = [1, 1, 1]} : vector<18x32x32xf32> to vector<16x16x32xf32>
    %194 = vector.shape_cast %193 : vector<16x16x32xf32> to vector<256x32xf32>
    %195 = arith.truncf %194 : vector<256x32xf32> to vector<256x32xbf16>
    %c2_121 = arith.constant 2 : index
    %c2_122 = arith.constant 2 : index
    %c0_123 = arith.constant 0 : index
    %c0_124 = arith.constant 0 : index
    %196 = vector.load %arg7[%c2_121, %c2_122, %c0_123, %c0_124] : memref<3x3x32x2xf32, #tpu.memory_space<vmem>>, vector<1x1x32x2xf32>
    %197 = vector.shape_cast %196 : vector<1x1x32x2xf32> to vector<32x2xf32>
    %198 = arith.truncf %197 : vector<32x2xf32> to vector<32x2xbf16>
    %cst_125 = arith.constant dense<0.000000e+00> : vector<256x2xf32>
    %199 = tpu.matmul %195, %198, %cst_125 {dimension_numbers = #tpu.dot_dimension_numbers<[1], [0], [0], [1], [0, 0, 1, 1], [], []>} : vector<256x32xbf16>, vector<32x2xbf16>, vector<256x2xf32> -> vector<256x2xf32>
    %200 = arith.addf %192, %199 : vector<256x2xf32>
    %c0_126 = arith.constant 0 : index
    %c0_127 = arith.constant 0 : index
    %201 = vector.load %arg8[%c0_126, %c0_127] : memref<1x2xf32, #tpu.memory_space<vmem>>, vector<1x2xf32>
    %202 = vector.broadcast %201 : vector<1x2xf32> to vector<256x2xf32>
    %203 = arith.addf %200, %202 : vector<256x2xf32>
    %cst_128 = arith.constant 0.000000e+00 : f32
    %204 = vector.broadcast %cst_128 : f32 to vector<256x8xf32>
    %205 = vector.extract_strided_slice %0 {offsets = [0, 0], sizes = [256, 1], strides = [1, 1]} : vector<256x2xf32> to vector<256x1xf32>
    %206 = vector.extract_strided_slice %6 {offsets = [0, 0], sizes = [1, 8], strides = [1, 1]} : vector<2x8xf32> to vector<1x8xf32>
    %207 = vector.broadcast %205 : vector<256x1xf32> to vector<256x8xf32>
    %208 = vector.broadcast %206 : vector<1x8xf32> to vector<256x8xf32>
    %209 = arith.subf %207, %208 : vector<256x8xf32>
    %210 = arith.mulf %209, %209 : vector<256x8xf32>
    %211 = arith.addf %204, %210 : vector<256x8xf32>
    %212 = vector.extract_strided_slice %0 {offsets = [0, 1], sizes = [256, 1], strides = [1, 1]} : vector<256x2xf32> to vector<256x1xf32>
    %213 = vector.extract_strided_slice %6 {offsets = [1, 0], sizes = [1, 8], strides = [1, 1]} : vector<2x8xf32> to vector<1x8xf32>
    %214 = vector.broadcast %212 : vector<256x1xf32> to vector<256x8xf32>
    %215 = vector.broadcast %213 : vector<1x8xf32> to vector<256x8xf32>
    %216 = arith.subf %214, %215 : vector<256x8xf32>
    %217 = arith.mulf %216, %216 : vector<256x8xf32>
    %218 = arith.addf %211, %217 : vector<256x8xf32>
    %cst_129 = arith.constant -7.812500e-01 : f32
    %219 = vector.broadcast %cst_129 : f32 to vector<256x8xf32>
    %220 = arith.mulf %218, %219 : vector<256x8xf32>
    %221 = math.exp %220 : vector<256x8xf32>
    %cst_130 = arith.constant dense<0.000000e+00> : vector<2x8xf32>
    %222 = tpu.matmul %203, %221, %cst_130 {dimension_numbers = #tpu.dot_dimension_numbers<[0], [0], [1], [1], [0, 1, 1, 1], [], []>} : vector<256x2xf32>, vector<256x8xf32>, vector<2x8xf32> -> vector<2x8xf32>
    %cst_131 = arith.constant 1.000000e+00 : f32
    %223 = vector.broadcast %cst_131 : f32 to vector<1x256xf32>
    %cst_132 = arith.constant dense<0.000000e+00> : vector<1x8xf32>
    %224 = tpu.matmul %223, %221, %cst_132 {dimension_numbers = #tpu.dot_dimension_numbers<[1], [0], [0], [1], [0, 0, 1, 1], [], []>} : vector<1x256xf32>, vector<256x8xf32>, vector<1x8xf32> -> vector<1x8xf32>
    %cst_133 = arith.constant 9.99999997E-7 : f32
    %225 = vector.broadcast %cst_133 : f32 to vector<1x8xf32>
    %226 = arith.addf %224, %225 : vector<1x8xf32>
    %227 = tpu.reciprocal %226 {approx = true} : vector<1x8xf32> -> vector<1x8xf32>
    %228 = vector.broadcast %227 : vector<1x8xf32> to vector<2x8xf32>
    %229 = arith.mulf %222, %228 : vector<2x8xf32>
    %c0_134 = arith.constant 0 : index
    %c0_135 = arith.constant 0 : index
    %c0_136 = arith.constant 0 : index
    %230 = vector.load %arg9[%c0_134, %c0_135, %c0_136] : memref<1x2x8xf32, #tpu.memory_space<vmem>>, vector<1x2x8xf32>
    %231 = vector.shape_cast %230 : vector<1x2x8xf32> to vector<2x8xf32>
    %232 = vector.shape_cast %229 : vector<2x8xf32> to vector<1x2x8xf32>
    tpu.vector_store %arg9[%c0_134, %c0_135, %c0_136], %232 {strides = array<i32>} : memref<1x2x8xf32, #tpu.memory_space<vmem>>, vector<1x2x8xf32>,
    return
  }
  func.func @transform_0(%arg0: i32) -> (i32, i32) {
    %c0_i32 = arith.constant 0 : i32
    %c0_i32_0 = arith.constant 0 : i32
    %c0_i32_1 = arith.constant 0 : i32
    return %c0_i32, %c0_i32_0 : i32, i32
  }
  func.func @transform_1(%arg0: i32) -> (i32, i32, i32) {
    %c0_i32 = arith.constant 0 : i32
    %c0_i32_0 = arith.constant 0 : i32
    %c0_i32_1 = arith.constant 0 : i32
    return %arg0, %c0_i32, %c0_i32_0 : i32, i32, i32
  }
  func.func @transform_2(%arg0: i32) -> (i32, i32, i32) {
    %c0_i32 = arith.constant 0 : i32
    %c0_i32_0 = arith.constant 0 : i32
    %c0_i32_1 = arith.constant 0 : i32
    return %arg0, %c0_i32, %c0_i32_0 : i32, i32, i32
  }
  func.func @transform_3(%arg0: i32) -> (i32, i32, i32) {
    %c0_i32 = arith.constant 0 : i32
    %c0_i32_0 = arith.constant 0 : i32
    %c0_i32_1 = arith.constant 0 : i32
    return %arg0, %c0_i32, %c0_i32_0 : i32, i32, i32
  }
  func.func @transform_4(%arg0: i32) -> (i32, i32, i32, i32) {
    %c0_i32 = arith.constant 0 : i32
    %c0_i32_0 = arith.constant 0 : i32
    %c0_i32_1 = arith.constant 0 : i32
    %c0_i32_2 = arith.constant 0 : i32
    %c0_i32_3 = arith.constant 0 : i32
    return %c0_i32, %c0_i32_0, %c0_i32_1, %c0_i32_2 : i32, i32, i32, i32
  }
  func.func @transform_5(%arg0: i32) -> (i32, i32) {
    %c0_i32 = arith.constant 0 : i32
    %c0_i32_0 = arith.constant 0 : i32
    %c0_i32_1 = arith.constant 0 : i32
    return %c0_i32, %c0_i32_0 : i32, i32
  }
  func.func @transform_6(%arg0: i32) -> (i32, i32, i32, i32) {
    %c0_i32 = arith.constant 0 : i32
    %c0_i32_0 = arith.constant 0 : i32
    %c0_i32_1 = arith.constant 0 : i32
    %c0_i32_2 = arith.constant 0 : i32
    %c0_i32_3 = arith.constant 0 : i32
    return %c0_i32, %c0_i32_0, %c0_i32_1, %c0_i32_2 : i32, i32, i32, i32
  }
  func.func @transform_7(%arg0: i32) -> (i32, i32) {
    %c0_i32 = arith.constant 0 : i32
    %c0_i32_0 = arith.constant 0 : i32
    %c0_i32_1 = arith.constant 0 : i32
    return %c0_i32, %c0_i32_0 : i32, i32
  }
  func.func @transform_8(%arg0: i32) -> (i32, i32, i32) {
    %c0_i32 = arith.constant 0 : i32
    %c0_i32_0 = arith.constant 0 : i32
    %c0_i32_1 = arith.constant 0 : i32
    return %arg0, %c0_i32, %c0_i32_0 : i32, i32, i32
  }
}

</mosaic_0001>

<llo_original>
// kernel: tpu_custom_call.1
$region0: #{tpu_custom_call.1}
  #allocation0 [shape = 'u32[]', space=smem, size = 0x4, offset = 0x4, fixed_abs, tag = 'smem constant byte address 0x4 - core index']
  #allocation1 [shape = 'u32[72,128]{1,0:T(1,128)}', space=vmem, size = 0x9000, scoped, tag = 'internal scratch']
  #allocation2 [shape = 'f32[18,32,3]{2,1,0:T(8,128)}', space=vmem, size = 0x48000, scoped, tag = 'scratch operand']
  #allocation3 [shape = 'f32[18,32,32]{2,1,0:T(8,128)}', space=vmem, size = 0x48000, scoped, tag = 'scratch operand']
  %s0 = inlined_call_operand.vmem [shape: f32[256,2], index: 0, kind: input, shape index: {}]
  %s1 = inlined_call_operand.vmem [shape: f32[2,2,8], index: 1, kind: input, shape index: {}]
  %s2 = inlined_call_operand.vmem [shape: f32[2,8,3], index: 2, kind: input, shape index: {}]
  %s3 = inlined_call_operand.vmem [shape: f32[2,2,8], index: 3, kind: input, shape index: {}]
  %s4 = inlined_call_operand.vmem [shape: f32[3,3,3,32], index: 4, kind: input, shape index: {}]
  %s5 = inlined_call_operand.vmem [shape: f32[1,32], index: 5, kind: input, shape index: {}]
  %s6 = inlined_call_operand.vmem [shape: f32[3,3,32,2], index: 6, kind: input, shape index: {}]
  %s7 = inlined_call_operand.vmem [shape: f32[1,2], index: 7, kind: input, shape index: {}]
  %s8 = inlined_call_operand.hbm [shape: f32[2,2,8], index: 8, kind: output, shape index: {}]
  %s9 = sld [smem:[#allocation0]]
  $region65: #{tpu_custom_call.1} parent=0
    _
  %s11 = ssub.s32 1, %s9
  %s12 = scalar_select 0, %s11, %s9
  $region1: #{tpu_custom_call.1} parent=0
    #allocation4 [shape = 'u8[2048]{0}', space=vmem, size = 0x800, scoped, tag = 'output window, operand 0']
    #allocation5 [shape = 's32[2]{0}', space=sflag, size = 0x8, scoped, tag = 'scoped memory for tpu_custom_call.1']
    %13 = vsyncpa [#allocation5], 0
    %s14 = scalar_lea.sflag [#allocation5], 1
    %15 = vsyncpa %s14, 0
    loop: start=0, step=1, limit=4
    $region2: #{tpu_custom_call.1} parent=1 // loop_pre_header
      _
    $region3: #{tpu_custom_call.1} parent=1 // loop_header
      %s17 = sphi 0, %s21
      %p18 = scmp.ge.s32.totalorder %s17, 4
      %s25 = sphi 0, %s25
      %s27 = sphi 0, %s25
      %s28 = sphi 0, %s27
      %s42 = sphi 0, %s28
      %s48 = sphi 0, %s50
      %s51 = sphi 0, %s48
      %s52 = sphi 0, %s51
      %s68 = sphi 0, %s52
      %s74 = sphi 0, %s76
      %s77 = sphi 0, %s74
      %s78 = sphi 0, %s77
      %s94 = sphi 0, %s78
      %s100 = sphi 0, %s102
      %s103 = sphi 0, %s100
      %s104 = sphi 0, %s103
      %s120 = sphi 0, %s104
      %s124 = sphi 0, %s124
      %s126 = sphi 0, %s124
      %s127 = sphi 0, %s126
      %s141 = sphi 0, %s127
      %s145 = sphi 0, %s145
      %s147 = sphi 0, %s145
      %s148 = sphi 0, %s147
      %s162 = sphi 0, %s148
      %s166 = sphi 0, %s166
      %s168 = sphi 0, %s166
      %s169 = sphi 0, %s168
      %s183 = sphi 0, %s169
      %s187 = sphi 0, %s187
      %s189 = sphi 0, %s187
      %s190 = sphi 0, %s189
      %s204 = sphi 0, %s190
      %s210 = sphi 0, %s212
      %s213 = sphi 0, %s210
      %s214 = sphi 0, %s213
      %s230 = sphi 0, %s214
    $region4: #{tpu_custom_call.1} parent=1 // loop_header_branch
      %20 = sbr.rel (%p18) target = $region8
    $region5: #{tpu_custom_call.1} parent=1 // loop_body
      %s22 = ssub.s32 %s17, 1
      %s23 = ssub.s32 %s17, 2
      %s24 = sadd.s32 %s17, 1
      %s26 = sadd.s32 %s25, 1
      %p29 = scmp.eq.s32.totalorder %s17, 1
      %p30 = scmp.ne.s32.totalorder %s25, %s27
      %p31 = scmp.eq.s32.totalorder %s17, 0
      %p32 = por %p30, %p31
      %p33 = scmp.ne.s32.totalorder %s25, %s27
      %p34 = scmp.eq.s32.totalorder %s22, 1
      %p35 = por %p33, %p34
      %p36 = scmp.ne.s32.totalorder %s27, %s28
      %p37 = scmp.eq.s32.totalorder %s22, 0
      %p38 = por %p36, %p37
      %p39 = scmp.ne.s32.totalorder %s27, %s28
      %p40 = scmp.eq.s32.totalorder %s23, 1
      %p41 = por %p39, %p40
      %p43 = scmp.ne.s32.totalorder %s28, %s42
      %p44 = scmp.eq.s32.totalorder %s23, 0
      %p45 = por %p43, %p44
      %s46 = ssub.s32 %s17, %s24
      %p47 = scmp.eq.s32.totalorder %s46, 0
      %s49 = sadd.s32 %s48, 1
      %s50 = scalar_select %p47, %s48, %s49
      %p53 = pneg %p47
      %p54 = scmp.eq.s32.totalorder %s17, 1
      %p55 = por %p53, %p54
      %p56 = scmp.ne.s32.totalorder %s48, %s51
      %p57 = scmp.eq.s32.totalorder %s17, 0
      %p58 = por %p56, %p57
      %p59 = scmp.ne.s32.totalorder %s48, %s51
      %p60 = scmp.eq.s32.totalorder %s22, 1
      %p61 = por %p59, %p60
      %p62 = scmp.ne.s32.totalorder %s51, %s52
      %p63 = scmp.eq.s32.totalorder %s22, 0
      %p64 = por %p62, %p63
      %p65 = scmp.ne.s32.totalorder %s51, %s52
      %p66 = scmp.eq.s32.totalorder %s23, 1
      %p67 = por %p65, %p66
      %p69 = scmp.ne.s32.totalorder %s52, %s68
      %p70 = scmp.eq.s32.totalorder %s23, 0
      %p71 = por %p69, %p70
      %s72 = ssub.s32 %s17, %s24
      %p73 = scmp.eq.s32.totalorder %s72, 0
      %s75 = sadd.s32 %s74, 1
      %s76 = scalar_select %p73, %s74, %s75
      %p79 = pneg %p73
      %p80 = scmp.eq.s32.totalorder %s17, 1
      %p81 = por %p79, %p80
      %p82 = scmp.ne.s32.totalorder %s74, %s77
      %p83 = scmp.eq.s32.totalorder %s17, 0
      %p84 = por %p82, %p83
      %p85 = scmp.ne.s32.totalorder %s74, %s77
      %p86 = scmp.eq.s32.totalorder %s22, 1
      %p87 = por %p85, %p86
      %p88 = scmp.ne.s32.totalorder %s77, %s78
      %p89 = scmp.eq.s32.totalorder %s22, 0
      %p90 = por %p88, %p89
      %p91 = scmp.ne.s32.totalorder %s77, %s78
      %p92 = scmp.eq.s32.totalorder %s23, 1
      %p93 = por %p91, %p92
      %p95 = scmp.ne.s32.totalorder %s78, %s94
      %p96 = scmp.eq.s32.totalorder %s23, 0
      %p97 = por %p95, %p96
      %s98 = ssub.s32 %s17, %s24
      %p99 = scmp.eq.s32.totalorder %s98, 0
      %s101 = sadd.s32 %s100, 1
      %s102 = scalar_select %p99, %s100, %s101
      %p105 = pneg %p99
      %p106 = scmp.eq.s32.totalorder %s17, 1
      %p107 = por %p105, %p106
      %p108 = scmp.ne.s32.totalorder %s100, %s103
      %p109 = scmp.eq.s32.totalorder %s17, 0
      %p110 = por %p108, %p109
      %p111 = scmp.ne.s32.totalorder %s100, %s103
      %p112 = scmp.eq.s32.totalorder %s22, 1
      %p113 = por %p111, %p112
      %p114 = scmp.ne.s32.totalorder %s103, %s104
      %p115 = scmp.eq.s32.totalorder %s22, 0
      %p116 = por %p114, %p115
      %p117 = scmp.ne.s32.totalorder %s103, %s104
      %p118 = scmp.eq.s32.totalorder %s23, 1
      %p119 = por %p117, %p118
      %p121 = scmp.ne.s32.totalorder %s104, %s120
      %p122 = scmp.eq.s32.totalorder %s23, 0
      %p123 = por %p121, %p122
      %s125 = sadd.s32 %s124, 1
      %p128 = scmp.eq.s32.totalorder %s17, 1
      %p129 = scmp.ne.s32.totalorder %s124, %s126
      %p130 = scmp.eq.s32.totalorder %s17, 0
      %p131 = por %p129, %p130
      %p132 = scmp.ne.s32.totalorder %s124, %s126
      %p133 = scmp.eq.s32.totalorder %s22, 1
      %p134 = por %p132, %p133
      %p135 = scmp.ne.s32.totalorder %s126, %s127
      %p136 = scmp.eq.s32.totalorder %s22, 0
      %p137 = por %p135, %p136
      %p138 = scmp.ne.s32.totalorder %s126, %s127
      %p139 = scmp.eq.s32.totalorder %s23, 1
      %p140 = por %p138, %p139
      %p142 = scmp.ne.s32.totalorder %s127, %s141
      %p143 = scmp.eq.s32.totalorder %s23, 0
      %p144 = por %p142, %p143
      %s146 = sadd.s32 %s145, 1
      %p149 = scmp.eq.s32.totalorder %s17, 1
      %p150 = scmp.ne.s32.totalorder %s145, %s147
      %p151 = scmp.eq.s32.totalorder %s17, 0
      %p152 = por %p150, %p151
      %p153 = scmp.ne.s32.totalorder %s145, %s147
      %p154 = scmp.eq.s32.totalorder %s22, 1
      %p155 = por %p153, %p154
      %p156 = scmp.ne.s32.totalorder %s147, %s148
      %p157 = scmp.eq.s32.totalorder %s22, 0
      %p158 = por %p156, %p157
      %p159 = scmp.ne.s32.totalorder %s147, %s148
      %p160 = scmp.eq.s32.totalorder %s23, 1
      %p161 = por %p159, %p160
      %p163 = scmp.ne.s32.totalorder %s148, %s162
      %p164 = scmp.eq.s32.totalorder %s23, 0
      %p165 = por %p163, %p164
      %s167 = sadd.s32 %s166, 1
      %p170 = scmp.eq.s32.totalorder %s17, 1
      %p171 = scmp.ne.s32.totalorder %s166, %s168
      %p172 = scmp.eq.s32.totalorder %s17, 0
      %p173 = por %p171, %p172
      %p174 = scmp.ne.s32.totalorder %s166, %s168
      %p175 = scmp.eq.s32.totalorder %s22, 1
      %p176 = por %p174, %p175
      %p177 = scmp.ne.s32.totalorder %s168, %s169
      %p178 = scmp.eq.s32.totalorder %s22, 0
      %p179 = por %p177, %p178
      %p180 = scmp.ne.s32.totalorder %s168, %s169
      %p181 = scmp.eq.s32.totalorder %s23, 1
      %p182 = por %p180, %p181
      %p184 = scmp.ne.s32.totalorder %s169, %s183
      %p185 = scmp.eq.s32.totalorder %s23, 0
      %p186 = por %p184, %p185
      %s188 = sadd.s32 %s187, 1
      %p191 = scmp.eq.s32.totalorder %s17, 1
      %p192 = scmp.ne.s32.totalorder %s187, %s189
      %p193 = scmp.eq.s32.totalorder %s17, 0
      %p194 = por %p192, %p193
      %p195 = scmp.ne.s32.totalorder %s187, %s189
      %p196 = scmp.eq.s32.totalorder %s22, 1
      %p197 = por %p195, %p196
      %p198 = scmp.ne.s32.totalorder %s189, %s190
      %p199 = scmp.eq.s32.totalorder %s22, 0
      %p200 = por %p198, %p199
      %p201 = scmp.ne.s32.totalorder %s189, %s190
      %p202 = scmp.eq.s32.totalorder %s23, 1
      %p203 = por %p201, %p202
      %p205 = scmp.ne.s32.totalorder %s190, %s204
      %p206 = scmp.eq.s32.totalorder %s23, 0
      %p207 = por %p205, %p206
      %s208 = ssub.s32 %s17, %s24
      %p209 = scmp.eq.s32.totalorder %s208, 0
      %s211 = sadd.s32 %s210, 1
      %s212 = scalar_select %p209, %s210, %s211
      %p215 = pneg %p209
      %p216 = scmp.eq.s32.totalorder %s17, 1
      %p217 = por %p215, %p216
      %p218 = scmp.ne.s32.totalorder %s210, %s213
      %p219 = scmp.eq.s32.totalorder %s17, 0
      %p220 = por %p218, %p219
      %p221 = scmp.ne.s32.totalorder %s210, %s213
      %p222 = scmp.eq.s32.totalorder %s22, 1
      %p223 = por %p221, %p222
      %p224 = scmp.ne.s32.totalorder %s213, %s214
      %p225 = scmp.eq.s32.totalorder %s22, 0
      %p226 = por %p224, %p225
      %p227 = scmp.ne.s32.totalorder %s213, %s214
      %p228 = scmp.eq.s32.totalorder %s23, 1
      %p229 = por %p227, %p228
      %p231 = scmp.ne.s32.totalorder %s214, %s230
      %p232 = scmp.eq.s32.totalorder %s23, 0
      %p233 = por %p231, %p232
      %p234 = scmp.le.s32.totalorder 1, %s17
      %p235 = scmp.lt.s32.totalorder %s17, 3
      %p236 = pnand %p234, %p235
      %p237 = pneg %p236
      // Predicated region
      $region9: #{tpu_custom_call.1} parent=5 // pred_check
        _
      $region10: #{tpu_custom_call.1} parent=5 // pred_check_branch
        %239 = sbr.rel (%p236) target = $region12
      $region11: #{tpu_custom_call.1} parent=5 // pred_region
        %s240 = ssub.s32 %s17, 1
        // Predicated region
        $region13: #{tpu_custom_call.1} parent=11 // pred_check
          %p241 = pneg %p38
        $region14: #{tpu_custom_call.1} parent=11 // pred_check_branch
          %243 = sbr.rel (%p241) target = $region16
        $region15: #{tpu_custom_call.1} parent=11 // pred_region
          _
        $region16: #{tpu_custom_call.1} parent=11 // pred_fallthru
          _
        // Predicated region
        $region17: #{tpu_custom_call.1} parent=11 // pred_check
          %p244 = pneg %p137
        $region18: #{tpu_custom_call.1} parent=11 // pred_check_branch
          %246 = sbr.rel (%p244) target = $region20
        $region19: #{tpu_custom_call.1} parent=11 // pred_region
          _
        $region20: #{tpu_custom_call.1} parent=11 // pred_fallthru
          _
        // Predicated region
        $region21: #{tpu_custom_call.1} parent=11 // pred_check
          %p247 = pneg %p158
        $region22: #{tpu_custom_call.1} parent=11 // pred_check_branch
          %249 = sbr.rel (%p247) target = $region24
        $region23: #{tpu_custom_call.1} parent=11 // pred_region
          _
        $region24: #{tpu_custom_call.1} parent=11 // pred_fallthru
          _
        // Predicated region
        $region25: #{tpu_custom_call.1} parent=11 // pred_check
          %p250 = pneg %p179
        $region26: #{tpu_custom_call.1} parent=11 // pred_check_branch
          %252 = sbr.rel (%p250) target = $region28
        $region27: #{tpu_custom_call.1} parent=11 // pred_region
          _
        $region28: #{tpu_custom_call.1} parent=11 // pred_fallthru
          _
        // Predicated region
        $region29: #{tpu_custom_call.1} parent=11 // pred_check
          %p253 = pneg %p200
        $region30: #{tpu_custom_call.1} parent=11 // pred_check_branch
          %255 = sbr.rel (%p253) target = $region32
        $region31: #{tpu_custom_call.1} parent=11 // pred_region
          _
        $region32: #{tpu_custom_call.1} parent=11 // pred_fallthru
          _
      $region12: #{tpu_custom_call.1} parent=5 // pred_fallthru
        _
      %p256 = scmp.lt.s32.totalorder %s17, 2
      // Predicated region
      $region33: #{tpu_custom_call.1} parent=5 // pred_check
        %p257 = pneg %p256
      $region34: #{tpu_custom_call.1} parent=5 // pred_check_branch
        %259 = sbr.rel (%p257) target = $region36
      $region35: #{tpu_custom_call.1} parent=5 // pred_region
        // Predicated region
        $region37: #{tpu_custom_call.1} parent=35 // pred_check
          %p260 = pneg %p58
        $region38: #{tpu_custom_call.1} parent=35 // pred_check_branch
          %262 = sbr.rel (%p260) target = $region40
        $region39: #{tpu_custom_call.1} parent=35 // pred_region
          %p263 = scmp.lt.s32.totalorder %s17, 1
          %s264 = scalar_select %p263, %s17, 1
          %s265 = smul.addr %s264, 2
          %s266 = scalar_lea.vmem %s1, %s265
        $region40: #{tpu_custom_call.1} parent=35 // pred_fallthru
          _
        // Predicated region
        $region41: #{tpu_custom_call.1} parent=35 // pred_check
          %p267 = pneg %p84
        $region42: #{tpu_custom_call.1} parent=35 // pred_check_branch
          %269 = sbr.rel (%p267) target = $region44
        $region43: #{tpu_custom_call.1} parent=35 // pred_region
          %p270 = scmp.lt.s32.totalorder %s17, 1
          %s271 = scalar_select %p270, %s17, 1
          %s272 = smul.addr %s271, 8
          %s273 = scalar_lea.vmem %s2, %s272
        $region44: #{tpu_custom_call.1} parent=35 // pred_fallthru
          _
        // Predicated region
        $region45: #{tpu_custom_call.1} parent=35 // pred_check
          %p274 = pneg %p110
        $region46: #{tpu_custom_call.1} parent=35 // pred_check_branch
          %276 = sbr.rel (%p274) target = $region48
        $region47: #{tpu_custom_call.1} parent=35 // pred_region
          %p277 = scmp.lt.s32.totalorder %s17, 1
          %s278 = scalar_select %p277, %s17, 1
          %s279 = smul.addr %s278, 2
          %s280 = scalar_lea.vmem %s3, %s279
        $region48: #{tpu_custom_call.1} parent=35 // pred_fallthru
          _
      $region36: #{tpu_custom_call.1} parent=5 // pred_fallthru
        _
      %p281 = scmp.le.s32.totalorder 1, %s17
      %p282 = scmp.lt.s32.totalorder %s17, 3
      %p283 = pnand %p281, %p282
      %p284 = pneg %p283
      // Predicated region
      $region49: #{tpu_custom_call.1} parent=5 // pred_check
        _
      $region50: #{tpu_custom_call.1} parent=5 // pred_check_branch
        %286 = sbr.rel (%p283) target = $region52
      $region51: #{tpu_custom_call.1} parent=5 // pred_region
        %s287 = ssub.s32 %s17, 1
        %p288 = pneg %p38
        %p289 = pneg %p35
        %p290 = scmp.lt.s32.totalorder %s22, 1
        %s291 = scalar_select %p290, %s22, 1
        %s292 = smul.addr %s291, 2
        %s293 = scalar_lea.vmem %s1, %s292
        %p294 = pneg %p64
        %p295 = pneg %p61
        %p296 = scmp.lt.s32.totalorder %s22, 1
        %s297 = scalar_select %p296, %s22, 1
        %s298 = smul.addr %s297, 8
        %s299 = scalar_lea.vmem %s2, %s298
        %p300 = pneg %p90
        %p301 = pneg %p87
        %p302 = scmp.lt.s32.totalorder %s22, 1
        %s303 = scalar_select %p302, %s22, 1
        %s304 = smul.addr %s303, 2
        %s305 = scalar_lea.vmem %s3, %s304
        %p306 = pneg %p116
        %p307 = pneg %p113
        %p308 = pneg %p137
        %p309 = pneg %p134
        %p310 = pneg %p158
        %p311 = pneg %p155
        %p312 = pneg %p179
        %p313 = pneg %p176
        %p314 = pneg %p200
        %p315 = pneg %p197
        %p316 = pneg %p226
        %p317 = pneg %p223
        %s318 = sand.u32 %s213, 1
        %s319 = scalar_lea.sflag [#allocation5], %s318
        %s320 = sand.u32 %s213, 1
        %s321 = smul.addr %s320, 2
        %s322 = scalar_lea.vmem [#allocation4], %s321
        %p323 = scmp.lt.s32.totalorder %s22, 1
        %s324 = scalar_select %p323, %s22, 1
        %s325 = smul.addr %s324, 2
        %s326 = scalar_lea.vmem %s1, %s325
        %p327 = scmp.lt.s32.totalorder %s22, 1
        %s328 = scalar_select %p327, %s22, 1
        %s329 = smul.addr %s328, 8
        %s330 = scalar_lea.vmem %s2, %s329
        %p331 = scmp.lt.s32.totalorder %s22, 1
        %s332 = scalar_select %p331, %s22, 1
        %s333 = smul.addr %s332, 2
        %s334 = scalar_lea.vmem %s3, %s333
        %v336 = vld [vmem:[%s0] sm:$0xff]
        %v337 = vld [vmem:[%s0 + $0x8] sm:$0xff]
        %v338 = vld [vmem:[%s0 + $0x10] sm:$0xff]
        %v339 = vld [vmem:[%s0 + $0x18] sm:$0xff]
        %v340 = vld [vmem:[%s0 + $0x20] sm:$0xff]
        %v341 = vld [vmem:[%s0 + $0x28] sm:$0xff]
        %v342 = vld [vmem:[%s0 + $0x30] sm:$0xff]
        %v343 = vld [vmem:[%s0 + $0x38] sm:$0xff]
        %v344 = vld [vmem:[%s0 + $0x40] sm:$0xff]
        %v345 = vld [vmem:[%s0 + $0x48] sm:$0xff]
        %v346 = vld [vmem:[%s0 + $0x50] sm:$0xff]
        %v347 = vld [vmem:[%s0 + $0x58] sm:$0xff]
        %v348 = vld [vmem:[%s0 + $0x60] sm:$0xff]
        %v349 = vld [vmem:[%s0 + $0x68] sm:$0xff]
        %v350 = vld [vmem:[%s0 + $0x70] sm:$0xff]
        %v351 = vld [vmem:[%s0 + $0x78] sm:$0xff]
        %v352 = vld [vmem:[%s0 + $0x80] sm:$0xff]
        %v353 = vld [vmem:[%s0 + $0x88] sm:$0xff]
        %v354 = vld [vmem:[%s0 + $0x90] sm:$0xff]
        %v355 = vld [vmem:[%s0 + $0x98] sm:$0xff]
        %v356 = vld [vmem:[%s0 + $0xa0] sm:$0xff]
        %v357 = vld [vmem:[%s0 + $0xa8] sm:$0xff]
        %v358 = vld [vmem:[%s0 + $0xb0] sm:$0xff]
        %v359 = vld [vmem:[%s0 + $0xb8] sm:$0xff]
        %v360 = vld [vmem:[%s0 + $0xc0] sm:$0xff]
        %v361 = vld [vmem:[%s0 + $0xc8] sm:$0xff]
        %v362 = vld [vmem:[%s0 + $0xd0] sm:$0xff]
        %v363 = vld [vmem:[%s0 + $0xd8] sm:$0xff]
        %v364 = vld [vmem:[%s0 + $0xe0] sm:$0xff]
        %v365 = vld [vmem:[%s0 + $0xe8] sm:$0xff]
        %v366 = vld [vmem:[%s0 + $0xf0] sm:$0xff]
        %v367 = vld [vmem:[%s0 + $0xf8] sm:$0xff]
        %v368 = vld [vmem:[%s326] sm:$0x3]
        %v369 = vld [vmem:[%s330] sm:$0xff]
        %v370 = vld [vmem:[%s334] sm:$0x3]
        %372 = vset.pattern.permute.xlu0 0
        %373 = vperm.xlu0 %372, %v336
        %v374 = vpop.permute.xlu0 %373
        %377 = vset.pattern.permute.xlu0 0
        %378 = vperm.xlu0 %377, %v337
        %v379 = vpop.permute.xlu0 %378
        %382 = vset.pattern.permute.xlu0 0
        %383 = vperm.xlu0 %382, %v338
        %v384 = vpop.permute.xlu0 %383
        %387 = vset.pattern.permute.xlu0 0
        %388 = vperm.xlu0 %387, %v339
        %v389 = vpop.permute.xlu0 %388
        %392 = vset.pattern.permute.xlu0 0
        %393 = vperm.xlu0 %392, %v340
        %v394 = vpop.permute.xlu0 %393
        %397 = vset.pattern.permute.xlu0 0
        %398 = vperm.xlu0 %397, %v341
        %v399 = vpop.permute.xlu0 %398
        %402 = vset.pattern.permute.xlu0 0
        %403 = vperm.xlu0 %402, %v342
        %v404 = vpop.permute.xlu0 %403
        %407 = vset.pattern.permute.xlu0 0
        %408 = vperm.xlu0 %407, %v343
        %v409 = vpop.permute.xlu0 %408
        %412 = vset.pattern.permute.xlu0 0
        %413 = vperm.xlu0 %412, %v344
        %v414 = vpop.permute.xlu0 %413
        %417 = vset.pattern.permute.xlu0 0
        %418 = vperm.xlu0 %417, %v345
        %v419 = vpop.permute.xlu0 %418
        %422 = vset.pattern.permute.xlu0 0
        %423 = vperm.xlu0 %422, %v346
        %v424 = vpop.permute.xlu0 %423
        %427 = vset.pattern.permute.xlu0 0
        %428 = vperm.xlu0 %427, %v347
        %v429 = vpop.permute.xlu0 %428
        %432 = vset.pattern.permute.xlu0 0
        %433 = vperm.xlu0 %432, %v348
        %v434 = vpop.permute.xlu0 %433
        %437 = vset.pattern.permute.xlu0 0
        %438 = vperm.xlu0 %437, %v349
        %v439 = vpop.permute.xlu0 %438
        %442 = vset.pattern.permute.xlu0 0
        %443 = vperm.xlu0 %442, %v350
        %v444 = vpop.permute.xlu0 %443
        %447 = vset.pattern.permute.xlu0 0
        %448 = vperm.xlu0 %447, %v351
        %v449 = vpop.permute.xlu0 %448
        %452 = vset.pattern.permute.xlu0 0
        %453 = vperm.xlu0 %452, %v352
        %v454 = vpop.permute.xlu0 %453
        %457 = vset.pattern.permute.xlu0 0
        %458 = vperm.xlu0 %457, %v353
        %v459 = vpop.permute.xlu0 %458
        %462 = vset.pattern.permute.xlu0 0
        %463 = vperm.xlu0 %462, %v354
        %v464 = vpop.permute.xlu0 %463
        %467 = vset.pattern.permute.xlu0 0
        %468 = vperm.xlu0 %467, %v355
        %v469 = vpop.permute.xlu0 %468
        %472 = vset.pattern.permute.xlu0 0
        %473 = vperm.xlu0 %472, %v356
        %v474 = vpop.permute.xlu0 %473
        %477 = vset.pattern.permute.xlu0 0
        %478 = vperm.xlu0 %477, %v357
        %v479 = vpop.permute.xlu0 %478
        %482 = vset.pattern.permute.xlu0 0
        %483 = vperm.xlu0 %482, %v358
        %v484 = vpop.permute.xlu0 %483
        %487 = vset.pattern.permute.xlu0 0
        %488 = vperm.xlu0 %487, %v359
        %v489 = vpop.permute.xlu0 %488
        %492 = vset.pattern.permute.xlu0 0
        %493 = vperm.xlu0 %492, %v360
        %v494 = vpop.permute.xlu0 %493
        %497 = vset.pattern.permute.xlu0 0
        %498 = vperm.xlu0 %497, %v361
        %v499 = vpop.permute.xlu0 %498
        %502 = vset.pattern.permute.xlu0 0
        %503 = vperm.xlu0 %502, %v362
        %v504 = vpop.permute.xlu0 %503
        %507 = vset.pattern.permute.xlu0 0
        %508 = vperm.xlu0 %507, %v363
        %v509 = vpop.permute.xlu0 %508
        %512 = vset.pattern.permute.xlu0 0
        %513 = vperm.xlu0 %512, %v364
        %v514 = vpop.permute.xlu0 %513
        %517 = vset.pattern.permute.xlu0 0
        %518 = vperm.xlu0 %517, %v365
        %v519 = vpop.permute.xlu0 %518
        %522 = vset.pattern.permute.xlu0 0
        %523 = vperm.xlu0 %522, %v366
        %v524 = vpop.permute.xlu0 %523
        %527 = vset.pattern.permute.xlu0 0
        %528 = vperm.xlu0 %527, %v367
        %v529 = vpop.permute.xlu0 %528
        %v531 = vperm.slane %v368, 0
        %v532 = vsub.f32 %v374, %v531
        %v533 = vsub.f32 %v379, %v531
        %v534 = vsub.f32 %v384, %v531
        %v535 = vsub.f32 %v389, %v531
        %v536 = vsub.f32 %v394, %v531
        %v537 = vsub.f32 %v399, %v531
        %v538 = vsub.f32 %v404, %v531
        %v539 = vsub.f32 %v409, %v531
        %v540 = vsub.f32 %v414, %v531
        %v541 = vsub.f32 %v419, %v531
        %v542 = vsub.f32 %v424, %v531
        %v543 = vsub.f32 %v429, %v531
        %v544 = vsub.f32 %v434, %v531
        %v545 = vsub.f32 %v439, %v531
        %v546 = vsub.f32 %v444, %v531
        %v547 = vsub.f32 %v449, %v531
        %v548 = vsub.f32 %v454, %v531
        %v549 = vsub.f32 %v459, %v531
        %v550 = vsub.f32 %v464, %v531
        %v551 = vsub.f32 %v469, %v531
        %v552 = vsub.f32 %v474, %v531
        %v553 = vsub.f32 %v479, %v531
        %v554 = vsub.f32 %v484, %v531
        %v555 = vsub.f32 %v489, %v531
        %v556 = vsub.f32 %v494, %v531
        %v557 = vsub.f32 %v499, %v531
        %v558 = vsub.f32 %v504, %v531
        %v559 = vsub.f32 %v509, %v531
        %v560 = vsub.f32 %v514, %v531
        %v561 = vsub.f32 %v519, %v531
        %v562 = vsub.f32 %v524, %v531
        %v563 = vsub.f32 %v529, %v531
        %v564 = vmul.f32 %v532, %v532
        %v565 = vmul.f32 %v533, %v533
        %v566 = vmul.f32 %v534, %v534
        %v567 = vmul.f32 %v535, %v535
        %v568 = vmul.f32 %v536, %v536
        %v569 = vmul.f32 %v537, %v537
        %v570 = vmul.f32 %v538, %v538
        %v571 = vmul.f32 %v539, %v539
        %v572 = vmul.f32 %v540, %v540
        %v573 = vmul.f32 %v541, %v541
        %v574 = vmul.f32 %v542, %v542
        %v575 = vmul.f32 %v543, %v543
        %v576 = vmul.f32 %v544, %v544
        %v577 = vmul.f32 %v545, %v545
        %v578 = vmul.f32 %v546, %v546
        %v579 = vmul.f32 %v547, %v547
        %v580 = vmul.f32 %v548, %v548
        %v581 = vmul.f32 %v549, %v549
        %v582 = vmul.f32 %v550, %v550
        %v583 = vmul.f32 %v551, %v551
        %v584 = vmul.f32 %v552, %v552
        %v585 = vmul.f32 %v553, %v553
        %v586 = vmul.f32 %v554, %v554
        %v587 = vmul.f32 %v555, %v555
        %v588 = vmul.f32 %v556, %v556
        %v589 = vmul.f32 %v557, %v557
        %v590 = vmul.f32 %v558, %v558
        %v591 = vmul.f32 %v559, %v559
        %v592 = vmul.f32 %v560, %v560
        %v593 = vmul.f32 %v561, %v561
        %v594 = vmul.f32 %v562, %v562
        %v595 = vmul.f32 %v563, %v563
        %v596 = vadd.f32 %v564, 0.0
        %v597 = vadd.f32 %v565, 0.0
        %v598 = vadd.f32 %v566, 0.0
        %v599 = vadd.f32 %v567, 0.0
        %v600 = vadd.f32 %v568, 0.0
        %v601 = vadd.f32 %v569, 0.0
        %v602 = vadd.f32 %v570, 0.0
        %v603 = vadd.f32 %v571, 0.0
        %v604 = vadd.f32 %v572, 0.0
        %v605 = vadd.f32 %v573, 0.0
        %v606 = vadd.f32 %v574, 0.0
        %v607 = vadd.f32 %v575, 0.0
        %v608 = vadd.f32 %v576, 0.0
        %v609 = vadd.f32 %v577, 0.0
        %v610 = vadd.f32 %v578, 0.0
        %v611 = vadd.f32 %v579, 0.0
        %v612 = vadd.f32 %v580, 0.0
        %v613 = vadd.f32 %v581, 0.0
        %v614 = vadd.f32 %v582, 0.0
        %v615 = vadd.f32 %v583, 0.0
        %v616 = vadd.f32 %v584, 0.0
        %v617 = vadd.f32 %v585, 0.0
        %v618 = vadd.f32 %v586, 0.0
        %v619 = vadd.f32 %v587, 0.0
        %v620 = vadd.f32 %v588, 0.0
        %v621 = vadd.f32 %v589, 0.0
        %v622 = vadd.f32 %v590, 0.0
        %v623 = vadd.f32 %v591, 0.0
        %v624 = vadd.f32 %v592, 0.0
        %v625 = vadd.f32 %v593, 0.0
        %v626 = vadd.f32 %v594, 0.0
        %v627 = vadd.f32 %v595, 0.0
        %628 = vset.pattern.permute.xlu0 1
        %629 = vperm.xlu0 %628, %v336
        %v630 = vpop.permute.xlu0 %629
        %632 = vset.pattern.permute.xlu0 1
        %633 = vperm.xlu0 %632, %v337
        %v634 = vpop.permute.xlu0 %633
        %636 = vset.pattern.permute.xlu0 1
        %637 = vperm.xlu0 %636, %v338
        %v638 = vpop.permute.xlu0 %637
        %640 = vset.pattern.permute.xlu0 1
        %641 = vperm.xlu0 %640, %v339
        %v642 = vpop.permute.xlu0 %641
        %644 = vset.pattern.permute.xlu0 1
        %645 = vperm.xlu0 %644, %v340
        %v646 = vpop.permute.xlu0 %645
        %648 = vset.pattern.permute.xlu0 1
        %649 = vperm.xlu0 %648, %v341
        %v650 = vpop.permute.xlu0 %649
        %652 = vset.pattern.permute.xlu0 1
        %653 = vperm.xlu0 %652, %v342
        %v654 = vpop.permute.xlu0 %653
        %656 = vset.pattern.permute.xlu0 1
        %657 = vperm.xlu0 %656, %v343
        %v658 = vpop.permute.xlu0 %657
        %660 = vset.pattern.permute.xlu0 1
        %661 = vperm.xlu0 %660, %v344
        %v662 = vpop.permute.xlu0 %661
        %664 = vset.pattern.permute.xlu0 1
        %665 = vperm.xlu0 %664, %v345
        %v666 = vpop.permute.xlu0 %665
        %668 = vset.pattern.permute.xlu0 1
        %669 = vperm.xlu0 %668, %v346
        %v670 = vpop.permute.xlu0 %669
        %672 = vset.pattern.permute.xlu0 1
        %673 = vperm.xlu0 %672, %v347
        %v674 = vpop.permute.xlu0 %673
        %676 = vset.pattern.permute.xlu0 1
        %677 = vperm.xlu0 %676, %v348
        %v678 = vpop.permute.xlu0 %677
        %680 = vset.pattern.permute.xlu0 1
        %681 = vperm.xlu0 %680, %v349
        %v682 = vpop.permute.xlu0 %681
        %684 = vset.pattern.permute.xlu0 1
        %685 = vperm.xlu0 %684, %v350
        %v686 = vpop.permute.xlu0 %685
        %688 = vset.pattern.permute.xlu0 1
        %689 = vperm.xlu0 %688, %v351
        %v690 = vpop.permute.xlu0 %689
        %692 = vset.pattern.permute.xlu0 1
        %693 = vperm.xlu0 %692, %v352
        %v694 = vpop.permute.xlu0 %693
        %696 = vset.pattern.permute.xlu0 1
        %697 = vperm.xlu0 %696, %v353
        %v698 = vpop.permute.xlu0 %697
        %700 = vset.pattern.permute.xlu0 1
        %701 = vperm.xlu0 %700, %v354
        %v702 = vpop.permute.xlu0 %701
        %704 = vset.pattern.permute.xlu0 1
        %705 = vperm.xlu0 %704, %v355
        %v706 = vpop.permute.xlu0 %705
        %708 = vset.pattern.permute.xlu0 1
        %709 = vperm.xlu0 %708, %v356
        %v710 = vpop.permute.xlu0 %709
        %712 = vset.pattern.permute.xlu0 1
        %713 = vperm.xlu0 %712, %v357
        %v714 = vpop.permute.xlu0 %713
        %716 = vset.pattern.permute.xlu0 1
        %717 = vperm.xlu0 %716, %v358
        %v718 = vpop.permute.xlu0 %717
        %720 = vset.pattern.permute.xlu0 1
        %721 = vperm.xlu0 %720, %v359
        %v722 = vpop.permute.xlu0 %721
        %724 = vset.pattern.permute.xlu0 1
        %725 = vperm.xlu0 %724, %v360
        %v726 = vpop.permute.xlu0 %725
        %728 = vset.pattern.permute.xlu0 1
        %729 = vperm.xlu0 %728, %v361
        %v730 = vpop.permute.xlu0 %729
        %732 = vset.pattern.permute.xlu0 1
        %733 = vperm.xlu0 %732, %v362
        %v734 = vpop.permute.xlu0 %733
        %736 = vset.pattern.permute.xlu0 1
        %737 = vperm.xlu0 %736, %v363
        %v738 = vpop.permute.xlu0 %737
        %740 = vset.pattern.permute.xlu0 1
        %741 = vperm.xlu0 %740, %v364
        %v742 = vpop.permute.xlu0 %741
        %744 = vset.pattern.permute.xlu0 1
        %745 = vperm.xlu0 %744, %v365
        %v746 = vpop.permute.xlu0 %745
        %748 = vset.pattern.permute.xlu0 1
        %749 = vperm.xlu0 %748, %v366
        %v750 = vpop.permute.xlu0 %749
        %752 = vset.pattern.permute.xlu0 1
        %753 = vperm.xlu0 %752, %v367
        %v754 = vpop.permute.xlu0 %753
        %v756 = vperm.slane %v368, 1
        %v757 = vsub.f32 %v630, %v756
        %v758 = vsub.f32 %v634, %v756
        %v759 = vsub.f32 %v638, %v756
        %v760 = vsub.f32 %v642, %v756
        %v761 = vsub.f32 %v646, %v756
        %v762 = vsub.f32 %v650, %v756
        %v763 = vsub.f32 %v654, %v756
        %v764 = vsub.f32 %v658, %v756
        %v765 = vsub.f32 %v662, %v756
        %v766 = vsub.f32 %v666, %v756
        %v767 = vsub.f32 %v670, %v756
        %v768 = vsub.f32 %v674, %v756
        %v769 = vsub.f32 %v678, %v756
        %v770 = vsub.f32 %v682, %v756
        %v771 = vsub.f32 %v686, %v756
        %v772 = vsub.f32 %v690, %v756
        %v773 = vsub.f32 %v694, %v756
        %v774 = vsub.f32 %v698, %v756
        %v775 = vsub.f32 %v702, %v756
        %v776 = vsub.f32 %v706, %v756
        %v777 = vsub.f32 %v710, %v756
        %v778 = vsub.f32 %v714, %v756
        %v779 = vsub.f32 %v718, %v756
        %v780 = vsub.f32 %v722, %v756
        %v781 = vsub.f32 %v726, %v756
        %v782 = vsub.f32 %v730, %v756
        %v783 = vsub.f32 %v734, %v756
        %v784 = vsub.f32 %v738, %v756
        %v785 = vsub.f32 %v742, %v756
        %v786 = vsub.f32 %v746, %v756
        %v787 = vsub.f32 %v750, %v756
        %v788 = vsub.f32 %v754, %v756
        %v789 = vmul.f32 %v757, %v757
        %v790 = vmul.f32 %v758, %v758
        %v791 = vmul.f32 %v759, %v759
        %v792 = vmul.f32 %v760, %v760
        %v793 = vmul.f32 %v761, %v761
        %v794 = vmul.f32 %v762, %v762
        %v795 = vmul.f32 %v763, %v763
        %v796 = vmul.f32 %v764, %v764
        %v797 = vmul.f32 %v765, %v765
        %v798 = vmul.f32 %v766, %v766
        %v799 = vmul.f32 %v767, %v767
        %v800 = vmul.f32 %v768, %v768
        %v801 = vmul.f32 %v769, %v769
        %v802 = vmul.f32 %v770, %v770
        %v803 = vmul.f32 %v771, %v771
        %v804 = vmul.f32 %v772, %v772
        %v805 = vmul.f32 %v773, %v773
        %v806 = vmul.f32 %v774, %v774
        %v807 = vmul.f32 %v775, %v775
        %v808 = vmul.f32 %v776, %v776
        %v809 = vmul.f32 %v777, %v777
        %v810 = vmul.f32 %v778, %v778
        %v811 = vmul.f32 %v779, %v779
        %v812 = vmul.f32 %v780, %v780
        %v813 = vmul.f32 %v781, %v781
        %v814 = vmul.f32 %v782, %v782
        %v815 = vmul.f32 %v783, %v783
        %v816 = vmul.f32 %v784, %v784
        %v817 = vmul.f32 %v785, %v785
        %v818 = vmul.f32 %v786, %v786
        %v819 = vmul.f32 %v787, %v787
        %v820 = vmul.f32 %v788, %v788
        %v821 = vadd.f32 %v596, %v789
        %v822 = vadd.f32 %v597, %v790
        %v823 = vadd.f32 %v598, %v791
        %v824 = vadd.f32 %v599, %v792
        %v825 = vadd.f32 %v600, %v793
        %v826 = vadd.f32 %v601, %v794
        %v827 = vadd.f32 %v602, %v795
        %v828 = vadd.f32 %v603, %v796
        %v829 = vadd.f32 %v604, %v797
        %v830 = vadd.f32 %v605, %v798
        %v831 = vadd.f32 %v606, %v799
        %v832 = vadd.f32 %v607, %v800
        %v833 = vadd.f32 %v608, %v801
        %v834 = vadd.f32 %v609, %v802
        %v835 = vadd.f32 %v610, %v803
        %v836 = vadd.f32 %v611, %v804
        %v837 = vadd.f32 %v612, %v805
        %v838 = vadd.f32 %v613, %v806
        %v839 = vadd.f32 %v614, %v807
        %v840 = vadd.f32 %v615, %v808
        %v841 = vadd.f32 %v616, %v809
        %v842 = vadd.f32 %v617, %v810
        %v843 = vadd.f32 %v618, %v811
        %v844 = vadd.f32 %v619, %v812
        %v845 = vadd.f32 %v620, %v813
        %v846 = vadd.f32 %v621, %v814
        %v847 = vadd.f32 %v622, %v815
        %v848 = vadd.f32 %v623, %v816
        %v849 = vadd.f32 %v624, %v817
        %v850 = vadd.f32 %v625, %v818
        %v851 = vadd.f32 %v626, %v819
        %v852 = vadd.f32 %v627, %v820
        %v853 = vmul.f32 %v821, -0.78125
        %v854 = vmul.f32 %v822, -0.78125
        %v855 = vmul.f32 %v823, -0.78125
        %v856 = vmul.f32 %v824, -0.78125
        %v857 = vmul.f32 %v825, -0.78125
        %v858 = vmul.f32 %v826, -0.78125
        %v859 = vmul.f32 %v827, -0.78125
        %v860 = vmul.f32 %v828, -0.78125
        %v861 = vmul.f32 %v829, -0.78125
        %v862 = vmul.f32 %v830, -0.78125
        %v863 = vmul.f32 %v831, -0.78125
        %v864 = vmul.f32 %v832, -0.78125
        %v865 = vmul.f32 %v833, -0.78125
        %v866 = vmul.f32 %v834, -0.78125
        %v867 = vmul.f32 %v835, -0.78125
        %v868 = vmul.f32 %v836, -0.78125
        %v869 = vmul.f32 %v837, -0.78125
        %v870 = vmul.f32 %v838, -0.78125
        %v871 = vmul.f32 %v839, -0.78125
        %v872 = vmul.f32 %v840, -0.78125
        %v873 = vmul.f32 %v841, -0.78125
        %v874 = vmul.f32 %v842, -0.78125
        %v875 = vmul.f32 %v843, -0.78125
        %v876 = vmul.f32 %v844, -0.78125
        %v877 = vmul.f32 %v845, -0.78125
        %v878 = vmul.f32 %v846, -0.78125
        %v879 = vmul.f32 %v847, -0.78125
        %v880 = vmul.f32 %v848, -0.78125
        %v881 = vmul.f32 %v849, -0.78125
        %v882 = vmul.f32 %v850, -0.78125
        %v883 = vmul.f32 %v851, -0.78125
        %v884 = vmul.f32 %v852, -0.78125
        %v885 = vmul.f32 %v853, 1.442695
        %v886 = vpow.pop %v885
        %v887 = vmul.f32 %v854, 1.442695
        %v888 = vpow.pop %v887
        %v889 = vmul.f32 %v855, 1.442695
        %v890 = vpow.pop %v889
        %v891 = vmul.f32 %v856, 1.442695
        %v892 = vpow.pop %v891
        %v893 = vmul.f32 %v857, 1.442695
        %v894 = vpow.pop %v893
        %v895 = vmul.f32 %v858, 1.442695
        %v896 = vpow.pop %v895
        %v897 = vmul.f32 %v859, 1.442695
        %v898 = vpow.pop %v897
        %v899 = vmul.f32 %v860, 1.442695
        %v900 = vpow.pop %v899
        %v901 = vmul.f32 %v861, 1.442695
        %v902 = vpow.pop %v901
        %v903 = vmul.f32 %v862, 1.442695
        %v904 = vpow.pop %v903
        %v905 = vmul.f32 %v863, 1.442695
        %v906 = vpow.pop %v905
        %v907 = vmul.f32 %v864, 1.442695
        %v908 = vpow.pop %v907
        %v909 = vmul.f32 %v865, 1.442695
        %v910 = vpow.pop %v909
        %v911 = vmul.f32 %v866, 1.442695
        %v912 = vpow.pop %v911
        %v913 = vmul.f32 %v867, 1.442695
        %v914 = vpow.pop %v913
        %v915 = vmul.f32 %v868, 1.442695
        %v916 = vpow.pop %v915
        %v917 = vmul.f32 %v869, 1.442695
        %v918 = vpow.pop %v917
        %v919 = vmul.f32 %v870, 1.442695
        %v920 = vpow.pop %v919
        %v921 = vmul.f32 %v871, 1.442695
        %v922 = vpow.pop %v921
        %v923 = vmul.f32 %v872, 1.442695
        %v924 = vpow.pop %v923
        %v925 = vmul.f32 %v873, 1.442695
        %v926 = vpow.pop %v925
        %v927 = vmul.f32 %v874, 1.442695
        %v928 = vpow.pop %v927
        %v929 = vmul.f32 %v875, 1.442695
        %v930 = vpow.pop %v929
        %v931 = vmul.f32 %v876, 1.442695
        %v932 = vpow.pop %v931
        %v933 = vmul.f32 %v877, 1.442695
        %v934 = vpow.pop %v933
        %v935 = vmul.f32 %v878, 1.442695
        %v936 = vpow.pop %v935
        %v937 = vmul.f32 %v879, 1.442695
        %v938 = vpow.pop %v937
        %v939 = vmul.f32 %v880, 1.442695
        %v940 = vpow.pop %v939
        %v941 = vmul.f32 %v881, 1.442695
        %v942 = vpow.pop %v941
        %v943 = vmul.f32 %v882, 1.442695
        %v944 = vpow.pop %v943
        %v945 = vmul.f32 %v883, 1.442695
        %v946 = vpow.pop %v945
        %v947 = vmul.f32 %v884, 1.442695
        %v948 = vpow.pop %v947
        %v949 = vpack.c.bf16 %v888, %v886
        %v950 = vpack.c.bf16 %v892, %v890
        %v951 = vpack.c.bf16 %v896, %v894
        %v952 = vpack.c.bf16 %v900, %v898
        %v953 = vpack.c.bf16 %v904, %v902
        %v954 = vpack.c.bf16 %v908, %v906
        %v955 = vpack.c.bf16 %v912, %v910
        %v956 = vpack.c.bf16 %v916, %v914
        %v957 = vpack.c.bf16 %v920, %v918
        %v958 = vpack.c.bf16 %v924, %v922
        %v959 = vpack.c.bf16 %v928, %v926
        %v960 = vpack.c.bf16 %v932, %v930
        %v961 = vpack.c.bf16 %v936, %v934
        %v962 = vpack.c.bf16 %v940, %v938
        %v963 = vpack.c.bf16 %v944, %v942
        %v964 = vpack.c.bf16 %v948, %v946
        %v965 = vpack.c.bf16 %v369, %v369
        %vm966 = vcmask 64512
        %v968 = vsel %vm966, %v949, 0
        %v971 = vsel %vm966, %v950, 0
        %v974 = vsel %vm966, %v951, 0
        %v977 = vsel %vm966, %v952, 0
        %v980 = vsel %vm966, %v953, 0
        %v983 = vsel %vm966, %v954, 0
        %v986 = vsel %vm966, %v955, 0
        %v989 = vsel %vm966, %v956, 0
        %v992 = vsel %vm966, %v957, 0
        %v995 = vsel %vm966, %v958, 0
        %v998 = vsel %vm966, %v959, 0
        %v1001 = vsel %vm966, %v960, 0
        %v1004 = vsel %vm966, %v961, 0
        %v1007 = vsel %vm966, %v962, 0
        %v1010 = vsel %vm966, %v963, 0
        %v1013 = vsel %vm966, %v964, 0
        %vm1015 = vcmask 1043456
        %v1017 = vsel %vm1015, %v965, 0
        %1019 = vmatpush.bf16.msra.mxu0 0
        %1020 = vmatpush.bf16.msra.mxu0 0
        %1021 = vmatpush.bf16.msra.mxu0 0
        %1022 = vmatpush.bf16.msra.mxu0 0
        %1023 = vmatpush.bf16.msra.mxu0 0
        %1024 = vmatpush.bf16.msra.mxu0 0
        %1025 = vmatpush.bf16.msra.mxu0 0
        %1026 = vmatpush.bf16.msra.mxu0 %v1017
        %1027 = vmatmul.bf16.gmra.mxu0 %v968
        %v1028 = vpop.f32.mrf.mxu0
        %v1029 = vadd.f32 0.0, %v1028
        %v1030 = vpop.f32.mrf.mxu0
        %v1031 = vadd.f32 0.0, %v1030
        %1032 = vmatmul.bf16.gmra.mxu0 %v971
        %v1033 = vpop.f32.mrf.mxu0
        %v1034 = vadd.f32 0.0, %v1033
        %v1035 = vpop.f32.mrf.mxu0
        %v1036 = vadd.f32 0.0, %v1035
        %1037 = vmatmul.bf16.gmra.mxu0 %v974
        %v1038 = vpop.f32.mrf.mxu0
        %v1039 = vadd.f32 0.0, %v1038
        %v1040 = vpop.f32.mrf.mxu0
        %v1041 = vadd.f32 0.0, %v1040
        %1042 = vmatmul.bf16.gmra.mxu0 %v977
        %v1043 = vpop.f32.mrf.mxu0
        %v1044 = vadd.f32 0.0, %v1043
        %v1045 = vpop.f32.mrf.mxu0
        %v1046 = vadd.f32 0.0, %v1045
        %1047 = vmatmul.bf16.gmra.mxu0 %v980
        %v1048 = vpop.f32.mrf.mxu0
        %v1049 = vadd.f32 0.0, %v1048
        %v1050 = vpop.f32.mrf.mxu0
        %v1051 = vadd.f32 0.0, %v1050
        %1052 = vmatmul.bf16.gmra.mxu0 %v983
        %v1053 = vpop.f32.mrf.mxu0
        %v1054 = vadd.f32 0.0, %v1053
        %v1055 = vpop.f32.mrf.mxu0
        %v1056 = vadd.f32 0.0, %v1055
        %1057 = vmatmul.bf16.gmra.mxu0 %v986
        %v1058 = vpop.f32.mrf.mxu0
        %v1059 = vadd.f32 0.0, %v1058
        %v1060 = vpop.f32.mrf.mxu0
        %v1061 = vadd.f32 0.0, %v1060
        %1062 = vmatmul.bf16.gmra.mxu0 %v989
        %v1063 = vpop.f32.mrf.mxu0
        %v1064 = vadd.f32 0.0, %v1063
        %v1065 = vpop.f32.mrf.mxu0
        %v1066 = vadd.f32 0.0, %v1065
        %1067 = vmatmul.bf16.gmra.mxu0 %v992
        %v1068 = vpop.f32.mrf.mxu0
        %v1069 = vadd.f32 0.0, %v1068
        %v1070 = vpop.f32.mrf.mxu0
        %v1071 = vadd.f32 0.0, %v1070
        %1072 = vmatmul.bf16.gmra.mxu0 %v995
        %v1073 = vpop.f32.mrf.mxu0
        %v1074 = vadd.f32 0.0, %v1073
        %v1075 = vpop.f32.mrf.mxu0
        %v1076 = vadd.f32 0.0, %v1075
        %1077 = vmatmul.bf16.gmra.mxu0 %v998
        %v1078 = vpop.f32.mrf.mxu0
        %v1079 = vadd.f32 0.0, %v1078
        %v1080 = vpop.f32.mrf.mxu0
        %v1081 = vadd.f32 0.0, %v1080
        %1082 = vmatmul.bf16.gmra.mxu0 %v1001
        %v1083 = vpop.f32.mrf.mxu0
        %v1084 = vadd.f32 0.0, %v1083
        %v1085 = vpop.f32.mrf.mxu0
        %v1086 = vadd.f32 0.0, %v1085
        %1087 = vmatmul.bf16.gmra.mxu0 %v1004
        %v1088 = vpop.f32.mrf.mxu0
        %v1089 = vadd.f32 0.0, %v1088
        %v1090 = vpop.f32.mrf.mxu0
        %v1091 = vadd.f32 0.0, %v1090
        %1092 = vmatmul.bf16.gmra.mxu0 %v1007
        %v1093 = vpop.f32.mrf.mxu0
        %v1094 = vadd.f32 0.0, %v1093
        %v1095 = vpop.f32.mrf.mxu0
        %v1096 = vadd.f32 0.0, %v1095
        %1097 = vmatmul.bf16.gmra.mxu0 %v1010
        %v1098 = vpop.f32.mrf.mxu0
        %v1099 = vadd.f32 0.0, %v1098
        %v1100 = vpop.f32.mrf.mxu0
        %v1101 = vadd.f32 0.0, %v1100
        %1102 = vmatmul.bf16.gmra.mxu0 %v1013
        %v1103 = vpop.f32.mrf.mxu0
        %v1104 = vadd.f32 0.0, %v1103
        %v1105 = vpop.f32.mrf.mxu0
        %v1106 = vadd.f32 0.0, %v1105
        %1107 = vdwg.mxu0
        %v1108 = vadd.f32 %v1029, 1e-06
        %v1109 = vadd.f32 %v1031, 1e-06
        %v1110 = vadd.f32 %v1034, 1e-06
        %v1111 = vadd.f32 %v1036, 1e-06
        %v1112 = vadd.f32 %v1039, 1e-06
        %v1113 = vadd.f32 %v1041, 1e-06
        %v1114 = vadd.f32 %v1044, 1e-06
        %v1115 = vadd.f32 %v1046, 1e-06
        %v1116 = vadd.f32 %v1049, 1e-06
        %v1117 = vadd.f32 %v1051, 1e-06
        %v1118 = vadd.f32 %v1054, 1e-06
        %v1119 = vadd.f32 %v1056, 1e-06
        %v1120 = vadd.f32 %v1059, 1e-06
        %v1121 = vadd.f32 %v1061, 1e-06
        %v1122 = vadd.f32 %v1064, 1e-06
        %v1123 = vadd.f32 %v1066, 1e-06
        %v1124 = vadd.f32 %v1069, 1e-06
        %v1125 = vadd.f32 %v1071, 1e-06
        %v1126 = vadd.f32 %v1074, 1e-06
        %v1127 = vadd.f32 %v1076, 1e-06
        %v1128 = vadd.f32 %v1079, 1e-06
        %v1129 = vadd.f32 %v1081, 1e-06
        %v1130 = vadd.f32 %v1084, 1e-06
        %v1131 = vadd.f32 %v1086, 1e-06
        %v1132 = vadd.f32 %v1089, 1e-06
        %v1133 = vadd.f32 %v1091, 1e-06
        %v1134 = vadd.f32 %v1094, 1e-06
        %v1135 = vadd.f32 %v1096, 1e-06
        %v1136 = vadd.f32 %v1099, 1e-06
        %v1137 = vadd.f32 %v1101, 1e-06
        %v1138 = vadd.f32 %v1104, 1e-06
        %v1139 = vadd.f32 %v1106, 1e-06
        %v1140 = vrcp.pop %v1108
        %v1141 = vrcp.pop %v1109
        %v1142 = vrcp.pop %v1110
        %v1143 = vrcp.pop %v1111
        %v1144 = vrcp.pop %v1112
        %v1145 = vrcp.pop %v1113
        %v1146 = vrcp.pop %v1114
        %v1147 = vrcp.pop %v1115
        %v1148 = vrcp.pop %v1116
        %v1149 = vrcp.pop %v1117
        %v1150 = vrcp.pop %v1118
        %v1151 = vrcp.pop %v1119
        %v1152 = vrcp.pop %v1120
        %v1153 = vrcp.pop %v1121
        %v1154 = vrcp.pop %v1122
        %v1155 = vrcp.pop %v1123
        %v1156 = vrcp.pop %v1124
        %v1157 = vrcp.pop %v1125
        %v1158 = vrcp.pop %v1126
        %v1159 = vrcp.pop %v1127
        %v1160 = vrcp.pop %v1128
        %v1161 = vrcp.pop %v1129
        %v1162 = vrcp.pop %v1130
        %v1163 = vrcp.pop %v1131
        %v1164 = vrcp.pop %v1132
        %v1165 = vrcp.pop %v1133
        %v1166 = vrcp.pop %v1134
        %v1167 = vrcp.pop %v1135
        %v1168 = vrcp.pop %v1136
        %v1169 = vrcp.pop %v1137
        %v1170 = vrcp.pop %v1138
        %v1171 = vrcp.pop %v1139
        %v1172 = vlaneseq
        %v1173 = vand.u32 %v1172, 127
        %vm1174 = vcmp.eq.s32.totalorder %v1173, 0
        %1176 = vset.pattern.permute.xlu0 0
        %1177 = vperm.xlu0 %1176, %v1140
        %v1178 = vpop.permute.xlu0 %1177
        %1181 = vset.pattern.permute.xlu0 0
        %1182 = vperm.xlu0 %1181, %v1141
        %v1183 = vpop.permute.xlu0 %1182
        %1186 = vset.pattern.permute.xlu0 0
        %1187 = vperm.xlu0 %1186, %v1142
        %v1188 = vpop.permute.xlu0 %1187
        %1191 = vset.pattern.permute.xlu0 0
        %1192 = vperm.xlu0 %1191, %v1143
        %v1193 = vpop.permute.xlu0 %1192
        %1196 = vset.pattern.permute.xlu0 0
        %1197 = vperm.xlu0 %1196, %v1144
        %v1198 = vpop.permute.xlu0 %1197
        %1201 = vset.pattern.permute.xlu0 0
        %1202 = vperm.xlu0 %1201, %v1145
        %v1203 = vpop.permute.xlu0 %1202
        %1206 = vset.pattern.permute.xlu0 0
        %1207 = vperm.xlu0 %1206, %v1146
        %v1208 = vpop.permute.xlu0 %1207
        %1211 = vset.pattern.permute.xlu0 0
        %1212 = vperm.xlu0 %1211, %v1147
        %v1213 = vpop.permute.xlu0 %1212
        %1216 = vset.pattern.permute.xlu0 0
        %1217 = vperm.xlu0 %1216, %v1148
        %v1218 = vpop.permute.xlu0 %1217
        %1221 = vset.pattern.permute.xlu0 0
        %1222 = vperm.xlu0 %1221, %v1149
        %v1223 = vpop.permute.xlu0 %1222
        %1226 = vset.pattern.permute.xlu0 0
        %1227 = vperm.xlu0 %1226, %v1150
        %v1228 = vpop.permute.xlu0 %1227
        %1231 = vset.pattern.permute.xlu0 0
        %1232 = vperm.xlu0 %1231, %v1151
        %v1233 = vpop.permute.xlu0 %1232
        %1236 = vset.pattern.permute.xlu0 0
        %1237 = vperm.xlu0 %1236, %v1152
        %v1238 = vpop.permute.xlu0 %1237
        %1241 = vset.pattern.permute.xlu0 0
        %1242 = vperm.xlu0 %1241, %v1153
        %v1243 = vpop.permute.xlu0 %1242
        %1246 = vset.pattern.permute.xlu0 0
        %1247 = vperm.xlu0 %1246, %v1154
        %v1248 = vpop.permute.xlu0 %1247
        %1251 = vset.pattern.permute.xlu0 0
        %1252 = vperm.xlu0 %1251, %v1155
        %v1253 = vpop.permute.xlu0 %1252
        %1256 = vset.pattern.permute.xlu0 0
        %1257 = vperm.xlu0 %1256, %v1156
        %v1258 = vpop.permute.xlu0 %1257
        %1261 = vset.pattern.permute.xlu0 0
        %1262 = vperm.xlu0 %1261, %v1157
        %v1263 = vpop.permute.xlu0 %1262
        %1266 = vset.pattern.permute.xlu0 0
        %1267 = vperm.xlu0 %1266, %v1158
        %v1268 = vpop.permute.xlu0 %1267
        %1271 = vset.pattern.permute.xlu0 0
        %1272 = vperm.xlu0 %1271, %v1159
        %v1273 = vpop.permute.xlu0 %1272
        %1276 = vset.pattern.permute.xlu0 0
        %1277 = vperm.xlu0 %1276, %v1160
        %v1278 = vpop.permute.xlu0 %1277
        %1281 = vset.pattern.permute.xlu0 0
        %1282 = vperm.xlu0 %1281, %v1161
        %v1283 = vpop.permute.xlu0 %1282
        %1286 = vset.pattern.permute.xlu0 0
        %1287 = vperm.xlu0 %1286, %v1162
        %v1288 = vpop.permute.xlu0 %1287
        %1291 = vset.pattern.permute.xlu0 0
        %1292 = vperm.xlu0 %1291, %v1163
        %v1293 = vpop.permute.xlu0 %1292
        %1296 = vset.pattern.permute.xlu0 0
        %1297 = vperm.xlu0 %1296, %v1164
        %v1298 = vpop.permute.xlu0 %1297
        %1301 = vset.pattern.permute.xlu0 0
        %1302 = vperm.xlu0 %1301, %v1165
        %v1303 = vpop.permute.xlu0 %1302
        %1306 = vset.pattern.permute.xlu0 0
        %1307 = vperm.xlu0 %1306, %v1166
        %v1308 = vpop.permute.xlu0 %1307
        %1311 = vset.pattern.permute.xlu0 0
        %1312 = vperm.xlu0 %1311, %v1167
        %v1313 = vpop.permute.xlu0 %1312
        %1316 = vset.pattern.permute.xlu0 0
        %1317 = vperm.xlu0 %1316, %v1168
        %v1318 = vpop.permute.xlu0 %1317
        %1321 = vset.pattern.permute.xlu0 0
        %1322 = vperm.xlu0 %1321, %v1169
        %v1323 = vpop.permute.xlu0 %1322
        %1326 = vset.pattern.permute.xlu0 0
        %1327 = vperm.xlu0 %1326, %v1170
        %v1328 = vpop.permute.xlu0 %1327
        %1331 = vset.pattern.permute.xlu0 0
        %1332 = vperm.xlu0 %1331, %v1171
        %v1333 = vpop.permute.xlu0 %1332
        %v1335 = vsel %vm1174, 1.0, %v1178
        %v1336 = vsel %vm1174, 1.0, %v1183
        %v1337 = vsel %vm1174, 1.0, %v1188
        %v1338 = vsel %vm1174, 1.0, %v1193
        %v1339 = vsel %vm1174, 1.0, %v1198
        %v1340 = vsel %vm1174, 1.0, %v1203
        %v1341 = vsel %vm1174, 1.0, %v1208
        %v1342 = vsel %vm1174, 1.0, %v1213
        %v1343 = vsel %vm1174, 1.0, %v1218
        %v1344 = vsel %vm1174, 1.0, %v1223
        %v1345 = vsel %vm1174, 1.0, %v1228
        %v1346 = vsel %vm1174, 1.0, %v1233
        %v1347 = vsel %vm1174, 1.0, %v1238
        %v1348 = vsel %vm1174, 1.0, %v1243
        %v1349 = vsel %vm1174, 1.0, %v1248
        %v1350 = vsel %vm1174, 1.0, %v1253
        %v1351 = vsel %vm1174, 1.0, %v1258
        %v1352 = vsel %vm1174, 1.0, %v1263
        %v1353 = vsel %vm1174, 1.0, %v1268
        %v1354 = vsel %vm1174, 1.0, %v1273
        %v1355 = vsel %vm1174, 1.0, %v1278
        %v1356 = vsel %vm1174, 1.0, %v1283
        %v1357 = vsel %vm1174, 1.0, %v1288
        %v1358 = vsel %vm1174, 1.0, %v1293
        %v1359 = vsel %vm1174, 1.0, %v1298
        %v1360 = vsel %vm1174, 1.0, %v1303
        %v1361 = vsel %vm1174, 1.0, %v1308
        %v1362 = vsel %vm1174, 1.0, %v1313
        %v1363 = vsel %vm1174, 1.0, %v1318
        %v1364 = vsel %vm1174, 1.0, %v1323
        %v1365 = vsel %vm1174, 1.0, %v1328
        %v1366 = vsel %vm1174, 1.0, %v1333
        %v1367 = vmul.f32 %v1029, %v1335
        %v1368 = vmul.f32 %v1031, %v1336
        %v1369 = vmul.f32 %v1034, %v1337
        %v1370 = vmul.f32 %v1036, %v1338
        %v1371 = vmul.f32 %v1039, %v1339
        %v1372 = vmul.f32 %v1041, %v1340
        %v1373 = vmul.f32 %v1044, %v1341
        %v1374 = vmul.f32 %v1046, %v1342
        %v1375 = vmul.f32 %v1049, %v1343
        %v1376 = vmul.f32 %v1051, %v1344
        %v1377 = vmul.f32 %v1054, %v1345
        %v1378 = vmul.f32 %v1056, %v1346
        %v1379 = vmul.f32 %v1059, %v1347
        %v1380 = vmul.f32 %v1061, %v1348
        %v1381 = vmul.f32 %v1064, %v1349
        %v1382 = vmul.f32 %v1066, %v1350
        %v1383 = vmul.f32 %v1069, %v1351
        %v1384 = vmul.f32 %v1071, %v1352
        %v1385 = vmul.f32 %v1074, %v1353
        %v1386 = vmul.f32 %v1076, %v1354
        %v1387 = vmul.f32 %v1079, %v1355
        %v1388 = vmul.f32 %v1081, %v1356
        %v1389 = vmul.f32 %v1084, %v1357
        %v1390 = vmul.f32 %v1086, %v1358
        %v1391 = vmul.f32 %v1089, %v1359
        %v1392 = vmul.f32 %v1091, %v1360
        %v1393 = vmul.f32 %v1094, %v1361
        %v1394 = vmul.f32 %v1096, %v1362
        %v1395 = vmul.f32 %v1099, %v1363
        %v1396 = vmul.f32 %v1101, %v1364
        %v1397 = vmul.f32 %v1104, %v1365
        %v1398 = vmul.f32 %v1106, %v1366
        %vm1399 = vcmask 23552
        %1400 = vst.msk [vmem:[#allocation2] sm:$0xff] %vm1399, 0.0
        %1401 = vst.msk [vmem:[#allocation2 + $0x8] sm:$0xff] %vm1399, 0.0
        %1402 = vst.msk [vmem:[#allocation2 + $0x10] sm:$0xff] %vm1399, 0.0
        %1403 = vst.msk [vmem:[#allocation2 + $0x18] sm:$0xff] %vm1399, 0.0
        %1404 = vst.msk [vmem:[#allocation2 + $0x20] sm:$0xff] %vm1399, 0.0
        %1405 = vst.msk [vmem:[#allocation2 + $0x28] sm:$0xff] %vm1399, 0.0
        %1406 = vst.msk [vmem:[#allocation2 + $0x30] sm:$0xff] %vm1399, 0.0
        %1407 = vst.msk [vmem:[#allocation2 + $0x38] sm:$0xff] %vm1399, 0.0
        %1408 = vst.msk [vmem:[#allocation2 + $0x40] sm:$0xff] %vm1399, 0.0
        %1409 = vst.msk [vmem:[#allocation2 + $0x48] sm:$0xff] %vm1399, 0.0
        %1410 = vst.msk [vmem:[#allocation2 + $0x50] sm:$0xff] %vm1399, 0.0
        %1411 = vst.msk [vmem:[#allocation2 + $0x58] sm:$0xff] %vm1399, 0.0
        %1412 = vst.msk [vmem:[#allocation2 + $0x60] sm:$0xff] %vm1399, 0.0
        %1413 = vst.msk [vmem:[#allocation2 + $0x68] sm:$0xff] %vm1399, 0.0
        %1414 = vst.msk [vmem:[#allocation2 + $0x70] sm:$0xff] %vm1399, 0.0
        %1415 = vst.msk [vmem:[#allocation2 + $0x78] sm:$0xff] %vm1399, 0.0
        %1416 = vst.msk [vmem:[#allocation2 + $0x80] sm:$0xff] %vm1399, 0.0
        %1417 = vst.msk [vmem:[#allocation2 + $0x88] sm:$0xff] %vm1399, 0.0
        %1418 = vst.msk [vmem:[#allocation2 + $0x90] sm:$0xff] %vm1399, 0.0
        %1419 = vst.msk [vmem:[#allocation2 + $0x98] sm:$0xff] %vm1399, 0.0
        %1420 = vst.msk [vmem:[#allocation2 + $0xa0] sm:$0xff] %vm1399, 0.0
        %1421 = vst.msk [vmem:[#allocation2 + $0xa8] sm:$0xff] %vm1399, 0.0
        %1422 = vst.msk [vmem:[#allocation2 + $0xb0] sm:$0xff] %vm1399, 0.0
        %1423 = vst.msk [vmem:[#allocation2 + $0xb8] sm:$0xff] %vm1399, 0.0
        %1424 = vst.msk [vmem:[#allocation2 + $0xc0] sm:$0xff] %vm1399, 0.0
        %1425 = vst.msk [vmem:[#allocation2 + $0xc8] sm:$0xff] %vm1399, 0.0
        %1426 = vst.msk [vmem:[#allocation2 + $0xd0] sm:$0xff] %vm1399, 0.0
        %1427 = vst.msk [vmem:[#allocation2 + $0xd8] sm:$0xff] %vm1399, 0.0
        %1428 = vst.msk [vmem:[#allocation2 + $0xe0] sm:$0xff] %vm1399, 0.0
        %1429 = vst.msk [vmem:[#allocation2 + $0xe8] sm:$0xff] %vm1399, 0.0
        %1430 = vst.msk [vmem:[#allocation2 + $0xf0] sm:$0xff] %vm1399, 0.0
        %1431 = vst.msk [vmem:[#allocation2 + $0xf8] sm:$0xff] %vm1399, 0.0
        %1432 = vst.msk [vmem:[#allocation2 + $0x100] sm:$0xff] %vm1399, 0.0
        %1433 = vst.msk [vmem:[#allocation2 + $0x108] sm:$0xff] %vm1399, 0.0
        %1434 = vst.msk [vmem:[#allocation2 + $0x110] sm:$0xff] %vm1399, 0.0
        %1435 = vst.msk [vmem:[#allocation2 + $0x118] sm:$0xff] %vm1399, 0.0
        %1436 = vst.msk [vmem:[#allocation2 + $0x120] sm:$0xff] %vm1399, 0.0
        %1437 = vst.msk [vmem:[#allocation2 + $0x128] sm:$0xff] %vm1399, 0.0
        %1438 = vst.msk [vmem:[#allocation2 + $0x130] sm:$0xff] %vm1399, 0.0
        %1439 = vst.msk [vmem:[#allocation2 + $0x138] sm:$0xff] %vm1399, 0.0
        %1440 = vst.msk [vmem:[#allocation2 + $0x140] sm:$0xff] %vm1399, 0.0
        %1441 = vst.msk [vmem:[#allocation2 + $0x148] sm:$0xff] %vm1399, 0.0
        %1442 = vst.msk [vmem:[#allocation2 + $0x150] sm:$0xff] %vm1399, 0.0
        %1443 = vst.msk [vmem:[#allocation2 + $0x158] sm:$0xff] %vm1399, 0.0
        %1444 = vst.msk [vmem:[#allocation2 + $0x160] sm:$0xff] %vm1399, 0.0
        %1445 = vst.msk [vmem:[#allocation2 + $0x168] sm:$0xff] %vm1399, 0.0
        %1446 = vst.msk [vmem:[#allocation2 + $0x170] sm:$0xff] %vm1399, 0.0
        %1447 = vst.msk [vmem:[#allocation2 + $0x178] sm:$0xff] %vm1399, 0.0
        %1448 = vst.msk [vmem:[#allocation2 + $0x180] sm:$0xff] %vm1399, 0.0
        %1449 = vst.msk [vmem:[#allocation2 + $0x188] sm:$0xff] %vm1399, 0.0
        %1450 = vst.msk [vmem:[#allocation2 + $0x190] sm:$0xff] %vm1399, 0.0
        %1451 = vst.msk [vmem:[#allocation2 + $0x198] sm:$0xff] %vm1399, 0.0
        %1452 = vst.msk [vmem:[#allocation2 + $0x1a0] sm:$0xff] %vm1399, 0.0
        %1453 = vst.msk [vmem:[#allocation2 + $0x1a8] sm:$0xff] %vm1399, 0.0
        %1454 = vst.msk [vmem:[#allocation2 + $0x1b0] sm:$0xff] %vm1399, 0.0
        %1455 = vst.msk [vmem:[#allocation2 + $0x1b8] sm:$0xff] %vm1399, 0.0
        %1456 = vst.msk [vmem:[#allocation2 + $0x1c0] sm:$0xff] %vm1399, 0.0
        %1457 = vst.msk [vmem:[#allocation2 + $0x1c8] sm:$0xff] %vm1399, 0.0
        %1458 = vst.msk [vmem:[#allocation2 + $0x1d0] sm:$0xff] %vm1399, 0.0
        %1459 = vst.msk [vmem:[#allocation2 + $0x1d8] sm:$0xff] %vm1399, 0.0
        %1460 = vst.msk [vmem:[#allocation2 + $0x1e0] sm:$0xff] %vm1399, 0.0
        %1461 = vst.msk [vmem:[#allocation2 + $0x1e8] sm:$0xff] %vm1399, 0.0
        %1462 = vst.msk [vmem:[#allocation2 + $0x1f0] sm:$0xff] %vm1399, 0.0
        %1463 = vst.msk [vmem:[#allocation2 + $0x1f8] sm:$0xff] %vm1399, 0.0
        %1464 = vst.msk [vmem:[#allocation2 + $0x200] sm:$0xff] %vm1399, 0.0
        %1465 = vst.msk [vmem:[#allocation2 + $0x208] sm:$0xff] %vm1399, 0.0
        %1466 = vst.msk [vmem:[#allocation2 + $0x210] sm:$0xff] %vm1399, 0.0
        %1467 = vst.msk [vmem:[#allocation2 + $0x218] sm:$0xff] %vm1399, 0.0
        %1468 = vst.msk [vmem:[#allocation2 + $0x220] sm:$0xff] %vm1399, 0.0
        %1469 = vst.msk [vmem:[#allocation2 + $0x228] sm:$0xff] %vm1399, 0.0
        %1470 = vst.msk [vmem:[#allocation2 + $0x230] sm:$0xff] %vm1399, 0.0
        %1471 = vst.msk [vmem:[#allocation2 + $0x238] sm:$0xff] %vm1399, 0.0
        %s1472 = scalar_lea.vmem [#allocation2], 32
        %1473 = vst.msk [vmem:[%s1472 + $0x8] sm:$0xff] %vm1399, %v1367
        %1474 = vst.msk [vmem:[%s1472 + $0x10] sm:$0xff] %vm1399, %v1368
        %1475 = vst.msk [vmem:[%s1472 + $0x28] sm:$0xff] %vm1399, %v1369
        %1476 = vst.msk [vmem:[%s1472 + $0x30] sm:$0xff] %vm1399, %v1370
        %1477 = vst.msk [vmem:[%s1472 + $0x48] sm:$0xff] %vm1399, %v1371
        %1478 = vst.msk [vmem:[%s1472 + $0x50] sm:$0xff] %vm1399, %v1372
        %1479 = vst.msk [vmem:[%s1472 + $0x68] sm:$0xff] %vm1399, %v1373
        %1480 = vst.msk [vmem:[%s1472 + $0x70] sm:$0xff] %vm1399, %v1374
        %1481 = vst.msk [vmem:[%s1472 + $0x88] sm:$0xff] %vm1399, %v1375
        %1482 = vst.msk [vmem:[%s1472 + $0x90] sm:$0xff] %vm1399, %v1376
        %1483 = vst.msk [vmem:[%s1472 + $0xa8] sm:$0xff] %vm1399, %v1377
        %1484 = vst.msk [vmem:[%s1472 + $0xb0] sm:$0xff] %vm1399, %v1378
        %1485 = vst.msk [vmem:[%s1472 + $0xc8] sm:$0xff] %vm1399, %v1379
        %1486 = vst.msk [vmem:[%s1472 + $0xd0] sm:$0xff] %vm1399, %v1380
        %1487 = vst.msk [vmem:[%s1472 + $0xe8] sm:$0xff] %vm1399, %v1381
        %1488 = vst.msk [vmem:[%s1472 + $0xf0] sm:$0xff] %vm1399, %v1382
        %1489 = vst.msk [vmem:[%s1472 + $0x108] sm:$0xff] %vm1399, %v1383
        %1490 = vst.msk [vmem:[%s1472 + $0x110] sm:$0xff] %vm1399, %v1384
        %1491 = vst.msk [vmem:[%s1472 + $0x128] sm:$0xff] %vm1399, %v1385
        %1492 = vst.msk [vmem:[%s1472 + $0x130] sm:$0xff] %vm1399, %v1386
        %1493 = vst.msk [vmem:[%s1472 + $0x148] sm:$0xff] %vm1399, %v1387
        %1494 = vst.msk [vmem:[%s1472 + $0x150] sm:$0xff] %vm1399, %v1388
        %1495 = vst.msk [vmem:[%s1472 + $0x168] sm:$0xff] %vm1399, %v1389
        %1496 = vst.msk [vmem:[%s1472 + $0x170] sm:$0xff] %vm1399, %v1390
        %1497 = vst.msk [vmem:[%s1472 + $0x188] sm:$0xff] %vm1399, %v1391
        %1498 = vst.msk [vmem:[%s1472 + $0x190] sm:$0xff] %vm1399, %v1392
        %1499 = vst.msk [vmem:[%s1472 + $0x1a8] sm:$0xff] %vm1399, %v1393
        %1500 = vst.msk [vmem:[%s1472 + $0x1b0] sm:$0xff] %vm1399, %v1394
        %1501 = vst.msk [vmem:[%s1472 + $0x1c8] sm:$0xff] %vm1399, %v1395
        %1502 = vst.msk [vmem:[%s1472 + $0x1d0] sm:$0xff] %vm1399, %v1396
        %1503 = vst.msk [vmem:[%s1472 + $0x1e8] sm:$0xff] %vm1399, %v1397
        %1504 = vst.msk [vmem:[%s1472 + $0x1f0] sm:$0xff] %vm1399, %v1398
        %v1505 = vld [vmem:[#allocation2] sm:$0xff]
        %v1506 = vld [vmem:[#allocation2 + $0x8] sm:$0xff]
        %v1507 = vld [vmem:[#allocation2 + $0x10] sm:$0xff]
        %v1508 = vld [vmem:[#allocation2 + $0x18] sm:$0xff]
        %v1509 = vld [vmem:[#allocation2 + $0x20] sm:$0xff]
        %v1510 = vld [vmem:[#allocation2 + $0x28] sm:$0xff]
        %v1511 = vld [vmem:[#allocation2 + $0x30] sm:$0xff]
        %v1512 = vld [vmem:[#allocation2 + $0x38] sm:$0xff]
        %v1513 = vld [vmem:[#allocation2 + $0x40] sm:$0xff]
        %v1514 = vld [vmem:[#allocation2 + $0x48] sm:$0xff]
        %v1515 = vld [vmem:[#allocation2 + $0x50] sm:$0xff]
        %v1516 = vld [vmem:[#allocation2 + $0x58] sm:$0xff]
        %v1517 = vld [vmem:[#allocation2 + $0x60] sm:$0xff]
        %v1518 = vld [vmem:[#allocation2 + $0x68] sm:$0xff]
        %v1519 = vld [vmem:[#allocation2 + $0x70] sm:$0xff]
        %v1520 = vld [vmem:[#allocation2 + $0x78] sm:$0xff]
        %v1521 = vld [vmem:[#allocation2 + $0x80] sm:$0xff]
        %v1522 = vld [vmem:[#allocation2 + $0x88] sm:$0xff]
        %v1523 = vld [vmem:[#allocation2 + $0x90] sm:$0xff]
        %v1524 = vld [vmem:[#allocation2 + $0x98] sm:$0xff]
        %v1525 = vld [vmem:[#allocation2 + $0xa0] sm:$0xff]
        %v1526 = vld [vmem:[#allocation2 + $0xa8] sm:$0xff]
        %v1527 = vld [vmem:[#allocation2 + $0xb0] sm:$0xff]
        %v1528 = vld [vmem:[#allocation2 + $0xb8] sm:$0xff]
        %v1529 = vld [vmem:[#allocation2 + $0xc0] sm:$0xff]
        %v1530 = vld [vmem:[#allocation2 + $0xc8] sm:$0xff]
        %v1531 = vld [vmem:[#allocation2 + $0xd0] sm:$0xff]
        %v1532 = vld [vmem:[#allocation2 + $0xd8] sm:$0xff]
        %v1533 = vld [vmem:[#allocation2 + $0xe0] sm:$0xff]
        %v1534 = vld [vmem:[#allocation2 + $0xe8] sm:$0xff]
        %v1535 = vld [vmem:[#allocation2 + $0xf0] sm:$0xff]
        %v1536 = vld [vmem:[#allocation2 + $0xf8] sm:$0xff]
        %v1537 = vld [vmem:[#allocation2 + $0x100] sm:$0xff]
        %v1538 = vld [vmem:[#allocation2 + $0x108] sm:$0xff]
        %v1539 = vld [vmem:[#allocation2 + $0x110] sm:$0xff]
        %v1540 = vld [vmem:[#allocation2 + $0x118] sm:$0xff]
        %v1541 = vld [vmem:[#allocation2 + $0x120] sm:$0xff]
        %v1542 = vld [vmem:[#allocation2 + $0x128] sm:$0xff]
        %v1543 = vld [vmem:[#allocation2 + $0x130] sm:$0xff]
        %v1544 = vld [vmem:[#allocation2 + $0x138] sm:$0xff]
        %v1545 = vld [vmem:[#allocation2 + $0x140] sm:$0xff]
        %v1546 = vld [vmem:[#allocation2 + $0x148] sm:$0xff]
        %v1547 = vld [vmem:[#allocation2 + $0x150] sm:$0xff]
        %v1548 = vld [vmem:[#allocation2 + $0x158] sm:$0xff]
        %v1549 = vld [vmem:[#allocation2 + $0x160] sm:$0xff]
        %v1550 = vld [vmem:[#allocation2 + $0x168] sm:$0xff]
        %v1551 = vld [vmem:[#allocation2 + $0x170] sm:$0xff]
        %v1552 = vld [vmem:[#allocation2 + $0x178] sm:$0xff]
        %v1553 = vld [vmem:[#allocation2 + $0x180] sm:$0xff]
        %v1554 = vld [vmem:[#allocation2 + $0x188] sm:$0xff]
        %v1555 = vld [vmem:[#allocation2 + $0x190] sm:$0xff]
        %v1556 = vld [vmem:[#allocation2 + $0x198] sm:$0xff]
        %v1557 = vld [vmem:[#allocation2 + $0x1a0] sm:$0xff]
        %v1558 = vld [vmem:[#allocation2 + $0x1a8] sm:$0xff]
        %v1559 = vld [vmem:[#allocation2 + $0x1b0] sm:$0xff]
        %v1560 = vld [vmem:[#allocation2 + $0x1b8] sm:$0xff]
        %v1561 = vld [vmem:[#allocation2 + $0x1c0] sm:$0xff]
        %v1562 = vld [vmem:[#allocation2 + $0x1c8] sm:$0xff]
        %v1563 = vld [vmem:[#allocation2 + $0x1d0] sm:$0xff]
        %v1564 = vld [vmem:[#allocation2 + $0x1d8] sm:$0xff]
        %v1565 = vld [vmem:[#allocation2 + $0x1e0] sm:$0xff]
        %v1566 = vld [vmem:[#allocation2 + $0x1e8] sm:$0xff]
        %v1567 = vld [vmem:[#allocation2 + $0x1f0] sm:$0xff]
        %v1568 = vld [vmem:[#allocation2 + $0x1f8] sm:$0xff]
        %v1569 = vld [vmem:[#allocation2 + $0x200] sm:$0xff]
        %v1570 = vld [vmem:[#allocation2 + $0x208] sm:$0xff]
        %v1571 = vld [vmem:[#allocation2 + $0x210] sm:$0xff]
        %v1572 = vld [vmem:[#allocation2 + $0x218] sm:$0xff]
        %v1573 = vld [vmem:[#allocation2 + $0x220] sm:$0xff]
        %v1574 = vld [vmem:[#allocation2 + $0x228] sm:$0xff]
        %v1575 = vld [vmem:[#allocation2 + $0x230] sm:$0xff]
        %v1576 = vld [vmem:[#allocation2 + $0x238] sm:$0xff]
        %vm1625 = vcmask 1040384
        %v1626 = vrot.slane %v1505, 7
        %v1627 = vrot.slane %v1506, 7
        %v1628 = vsel %vm1625, %v1626, %v1627
        %v1629 = vrot.slane %v1507, 7
        %v1630 = vsel %vm1625, %v1627, %v1629
        %v1631 = vrot.slane %v1509, 7
        %v1632 = vrot.slane %v1510, 7
        %v1633 = vsel %vm1625, %v1631, %v1632
        %v1634 = vrot.slane %v1511, 7
        %v1635 = vsel %vm1625, %v1632, %v1634
        %v1636 = vrot.slane %v1513, 7
        %v1637 = vrot.slane %v1514, 7
        %v1638 = vsel %vm1625, %v1636, %v1637
        %v1639 = vrot.slane %v1515, 7
        %v1640 = vsel %vm1625, %v1637, %v1639
        %v1641 = vrot.slane %v1517, 7
        %v1642 = vrot.slane %v1518, 7
        %v1643 = vsel %vm1625, %v1641, %v1642
        %v1644 = vrot.slane %v1519, 7
        %v1645 = vsel %vm1625, %v1642, %v1644
        %v1646 = vrot.slane %v1521, 7
        %v1647 = vrot.slane %v1522, 7
        %v1648 = vsel %vm1625, %v1646, %v1647
        %v1649 = vrot.slane %v1523, 7
        %v1650 = vsel %vm1625, %v1647, %v1649
        %v1651 = vrot.slane %v1525, 7
        %v1652 = vrot.slane %v1526, 7
        %v1653 = vsel %vm1625, %v1651, %v1652
        %v1654 = vrot.slane %v1527, 7
        %v1655 = vsel %vm1625, %v1652, %v1654
        %v1656 = vrot.slane %v1529, 7
        %v1657 = vrot.slane %v1530, 7
        %v1658 = vsel %vm1625, %v1656, %v1657
        %v1659 = vrot.slane %v1531, 7
        %v1660 = vsel %vm1625, %v1657, %v1659
        %v1661 = vrot.slane %v1533, 7
        %v1662 = vrot.slane %v1534, 7
        %v1663 = vsel %vm1625, %v1661, %v1662
        %v1664 = vrot.slane %v1535, 7
        %v1665 = vsel %vm1625, %v1662, %v1664
        %v1666 = vrot.slane %v1537, 7
        %v1667 = vrot.slane %v1538, 7
        %v1668 = vsel %vm1625, %v1666, %v1667
        %v1669 = vrot.slane %v1539, 7
        %v1670 = vsel %vm1625, %v1667, %v1669
        %v1671 = vrot.slane %v1541, 7
        %v1672 = vrot.slane %v1542, 7
        %v1673 = vsel %vm1625, %v1671, %v1672
        %v1674 = vrot.slane %v1543, 7
        %v1675 = vsel %vm1625, %v1672, %v1674
        %v1676 = vrot.slane %v1545, 7
        %v1677 = vrot.slane %v1546, 7
        %v1678 = vsel %vm1625, %v1676, %v1677
        %v1679 = vrot.slane %v1547, 7
        %v1680 = vsel %vm1625, %v1677, %v1679
        %v1681 = vrot.slane %v1549, 7
        %v1682 = vrot.slane %v1550, 7
        %v1683 = vsel %vm1625, %v1681, %v1682
        %v1684 = vrot.slane %v1551, 7
        %v1685 = vsel %vm1625, %v1682, %v1684
        %v1686 = vrot.slane %v1553, 7
        %v1687 = vrot.slane %v1554, 7
        %v1688 = vsel %vm1625, %v1686, %v1687
        %v1689 = vrot.slane %v1555, 7
        %v1690 = vsel %vm1625, %v1687, %v1689
        %v1691 = vrot.slane %v1557, 7
        %v1692 = vrot.slane %v1558, 7
        %v1693 = vsel %vm1625, %v1691, %v1692
        %v1694 = vrot.slane %v1559, 7
        %v1695 = vsel %vm1625, %v1692, %v1694
        %v1696 = vrot.slane %v1561, 7
        %v1697 = vrot.slane %v1562, 7
        %v1698 = vsel %vm1625, %v1696, %v1697
        %v1699 = vrot.slane %v1563, 7
        %v1700 = vsel %vm1625, %v1697, %v1699
        %v1701 = vrot.slane %v1565, 7
        %v1702 = vrot.slane %v1566, 7
        %v1703 = vsel %vm1625, %v1701, %v1702
        %v1704 = vrot.slane %v1567, 7
        %v1705 = vsel %vm1625, %v1702, %v1704
        %v1738 = vpack.c.bf16 %v1630, %v1628
        %v1739 = vpack.c.bf16 %v1635, %v1633
        %v1740 = vpack.c.bf16 %v1640, %v1638
        %v1741 = vpack.c.bf16 %v1645, %v1643
        %v1742 = vpack.c.bf16 %v1650, %v1648
        %v1743 = vpack.c.bf16 %v1655, %v1653
        %v1744 = vpack.c.bf16 %v1660, %v1658
        %v1745 = vpack.c.bf16 %v1665, %v1663
        %v1746 = vpack.c.bf16 %v1670, %v1668
        %v1747 = vpack.c.bf16 %v1675, %v1673
        %v1748 = vpack.c.bf16 %v1680, %v1678
        %v1749 = vpack.c.bf16 %v1685, %v1683
        %v1750 = vpack.c.bf16 %v1690, %v1688
        %v1751 = vpack.c.bf16 %v1695, %v1693
        %v1752 = vpack.c.bf16 %v1700, %v1698
        %v1753 = vpack.c.bf16 %v1705, %v1703
        %v1754 = vld [vmem:[%s4] sm:$0x7]
        %v1755 = vpack.c.bf16 %v1754, %v1754
        %v1756 = vpack.c.bf16 %v1507, %v1506
        %v1757 = vpack.c.bf16 %v1511, %v1510
        %v1758 = vpack.c.bf16 %v1515, %v1514
        %v1759 = vpack.c.bf16 %v1519, %v1518
        %v1760 = vpack.c.bf16 %v1523, %v1522
        %v1761 = vpack.c.bf16 %v1527, %v1526
        %v1762 = vpack.c.bf16 %v1531, %v1530
        %v1763 = vpack.c.bf16 %v1535, %v1534
        %v1764 = vpack.c.bf16 %v1539, %v1538
        %v1765 = vpack.c.bf16 %v1543, %v1542
        %v1766 = vpack.c.bf16 %v1547, %v1546
        %v1767 = vpack.c.bf16 %v1551, %v1550
        %v1768 = vpack.c.bf16 %v1555, %v1554
        %v1769 = vpack.c.bf16 %v1559, %v1558
        %v1770 = vpack.c.bf16 %v1563, %v1562
        %v1771 = vpack.c.bf16 %v1567, %v1566
        %s1772 = scalar_lea.vmem %s4, 4
        %v1773 = vld [vmem:[%s1772] sm:$0x7]
        %v1774 = vpack.c.bf16 %v1773, %v1773
        %v1776 = vsel %vm1399, %v1756, 0
        %v1779 = vsel %vm1399, %v1757, 0
        %v1782 = vsel %vm1399, %v1758, 0
        %v1785 = vsel %vm1399, %v1759, 0
        %v1788 = vsel %vm1399, %v1760, 0
        %v1791 = vsel %vm1399, %v1761, 0
        %v1794 = vsel %vm1399, %v1762, 0
        %v1797 = vsel %vm1399, %v1763, 0
        %v1800 = vsel %vm1399, %v1764, 0
        %v1803 = vsel %vm1399, %v1765, 0
        %v1806 = vsel %vm1399, %v1766, 0
        %v1809 = vsel %vm1399, %v1767, 0
        %v1812 = vsel %vm1399, %v1768, 0
        %v1815 = vsel %vm1399, %v1769, 0
        %v1818 = vsel %vm1399, %v1770, 0
        %v1821 = vsel %vm1399, %v1771, 0
        %vm1823 = vcmask 1041408
        %v1824 = vsel %vm1625, 4294967295, 65535
        %v1825 = vsel %vm1823, %v1824, 0
        %v1827 = vand.u32 %v1774, %v1825
        %1829 = vmatpush.bf16.msra.mxu0 0
        %1830 = vmatpush.bf16.msra.mxu0 0
        %1831 = vmatpush.bf16.msra.mxu0 0
        %1832 = vmatpush.bf16.msra.mxu0 0
        %1833 = vmatpush.bf16.msra.mxu0 0
        %1834 = vmatpush.bf16.msra.mxu0 0
        %1835 = vmatpush.bf16.msra.mxu0 0
        %1836 = vmatpush.bf16.msra.mxu0 %v1827
        %1837 = vmatmul.bf16.gmra.mxu0 %v1776
        %v1838 = vpop.f32.mrf.mxu0
        %v1839 = vadd.f32 0.0, %v1838
        %v1840 = vpop.f32.mrf.mxu0
        %v1841 = vadd.f32 0.0, %v1840
        %1842 = vmatmul.bf16.gmra.mxu0 %v1779
        %v1843 = vpop.f32.mrf.mxu0
        %v1844 = vadd.f32 0.0, %v1843
        %v1845 = vpop.f32.mrf.mxu0
        %v1846 = vadd.f32 0.0, %v1845
        %1847 = vmatmul.bf16.gmra.mxu0 %v1782
        %v1848 = vpop.f32.mrf.mxu0
        %v1849 = vadd.f32 0.0, %v1848
        %v1850 = vpop.f32.mrf.mxu0
        %v1851 = vadd.f32 0.0, %v1850
        %1852 = vmatmul.bf16.gmra.mxu0 %v1785
        %v1853 = vpop.f32.mrf.mxu0
        %v1854 = vadd.f32 0.0, %v1853
        %v1855 = vpop.f32.mrf.mxu0
        %v1856 = vadd.f32 0.0, %v1855
        %1857 = vmatmul.bf16.gmra.mxu0 %v1788
        %v1858 = vpop.f32.mrf.mxu0
        %v1859 = vadd.f32 0.0, %v1858
        %v1860 = vpop.f32.mrf.mxu0
        %v1861 = vadd.f32 0.0, %v1860
        %1862 = vmatmul.bf16.gmra.mxu0 %v1791
        %v1863 = vpop.f32.mrf.mxu0
        %v1864 = vadd.f32 0.0, %v1863
        %v1865 = vpop.f32.mrf.mxu0
        %v1866 = vadd.f32 0.0, %v1865
        %1867 = vmatmul.bf16.gmra.mxu0 %v1794
        %v1868 = vpop.f32.mrf.mxu0
        %v1869 = vadd.f32 0.0, %v1868
        %v1870 = vpop.f32.mrf.mxu0
        %v1871 = vadd.f32 0.0, %v1870
        %1872 = vmatmul.bf16.gmra.mxu0 %v1797
        %v1873 = vpop.f32.mrf.mxu0
        %v1874 = vadd.f32 0.0, %v1873
        %v1875 = vpop.f32.mrf.mxu0
        %v1876 = vadd.f32 0.0, %v1875
        %1877 = vmatmul.bf16.gmra.mxu0 %v1800
        %v1878 = vpop.f32.mrf.mxu0
        %v1879 = vadd.f32 0.0, %v1878
        %v1880 = vpop.f32.mrf.mxu0
        %v1881 = vadd.f32 0.0, %v1880
        %1882 = vmatmul.bf16.gmra.mxu0 %v1803
        %v1883 = vpop.f32.mrf.mxu0
        %v1884 = vadd.f32 0.0, %v1883
        %v1885 = vpop.f32.mrf.mxu0
        %v1886 = vadd.f32 0.0, %v1885
        %1887 = vmatmul.bf16.gmra.mxu0 %v1806
        %v1888 = vpop.f32.mrf.mxu0
        %v1889 = vadd.f32 0.0, %v1888
        %v1890 = vpop.f32.mrf.mxu0
        %v1891 = vadd.f32 0.0, %v1890
        %1892 = vmatmul.bf16.gmra.mxu0 %v1809
        %v1893 = vpop.f32.mrf.mxu0
        %v1894 = vadd.f32 0.0, %v1893
        %v1895 = vpop.f32.mrf.mxu0
        %v1896 = vadd.f32 0.0, %v1895
        %1897 = vmatmul.bf16.gmra.mxu0 %v1812
        %v1898 = vpop.f32.mrf.mxu0
        %v1899 = vadd.f32 0.0, %v1898
        %v1900 = vpop.f32.mrf.mxu0
        %v1901 = vadd.f32 0.0, %v1900
        %1902 = vmatmul.bf16.gmra.mxu0 %v1815
        %v1903 = vpop.f32.mrf.mxu0
        %v1904 = vadd.f32 0.0, %v1903
        %v1905 = vpop.f32.mrf.mxu0
        %v1906 = vadd.f32 0.0, %v1905
        %1907 = vmatmul.bf16.gmra.mxu0 %v1818
        %v1908 = vpop.f32.mrf.mxu0
        %v1909 = vadd.f32 0.0, %v1908
        %v1910 = vpop.f32.mrf.mxu0
        %v1911 = vadd.f32 0.0, %v1910
        %1912 = vmatmul.bf16.gmra.mxu0 %v1821
        %v1913 = vpop.f32.mrf.mxu0
        %v1914 = vadd.f32 0.0, %v1913
        %v1915 = vpop.f32.mrf.mxu0
        %v1916 = vadd.f32 0.0, %v1915
        %1917 = vdwg.mxu0
        %v1919 = vsel %vm1399, %v1738, 0
        %v1922 = vsel %vm1399, %v1739, 0
        %v1925 = vsel %vm1399, %v1740, 0
        %v1928 = vsel %vm1399, %v1741, 0
        %v1931 = vsel %vm1399, %v1742, 0
        %v1934 = vsel %vm1399, %v1743, 0
        %v1937 = vsel %vm1399, %v1744, 0
        %v1940 = vsel %vm1399, %v1745, 0
        %v1943 = vsel %vm1399, %v1746, 0
        %v1946 = vsel %vm1399, %v1747, 0
        %v1949 = vsel %vm1399, %v1748, 0
        %v1952 = vsel %vm1399, %v1749, 0
        %v1955 = vsel %vm1399, %v1750, 0
        %v1958 = vsel %vm1399, %v1751, 0
        %v1961 = vsel %vm1399, %v1752, 0
        %v1964 = vsel %vm1399, %v1753, 0
        %v1967 = vand.u32 %v1755, %v1825
        %1969 = vmatpush.bf16.msra.mxu0 0
        %1970 = vmatpush.bf16.msra.mxu0 0
        %1971 = vmatpush.bf16.msra.mxu0 0
        %1972 = vmatpush.bf16.msra.mxu0 0
        %1973 = vmatpush.bf16.msra.mxu0 0
        %1974 = vmatpush.bf16.msra.mxu0 0
        %1975 = vmatpush.bf16.msra.mxu0 0
        %1976 = vmatpush.bf16.msra.mxu0 %v1967
        %1977 = vmatmul.bf16.gmra.mxu0 %v1919
        %v1978 = vpop.f32.mrf.mxu0
        %v1979 = vadd.f32 %v1839, %v1978
        %v1980 = vpop.f32.mrf.mxu0
        %v1981 = vadd.f32 %v1841, %v1980
        %1982 = vmatmul.bf16.gmra.mxu0 %v1922
        %v1983 = vpop.f32.mrf.mxu0
        %v1984 = vadd.f32 %v1844, %v1983
        %v1985 = vpop.f32.mrf.mxu0
        %v1986 = vadd.f32 %v1846, %v1985
        %1987 = vmatmul.bf16.gmra.mxu0 %v1925
        %v1988 = vpop.f32.mrf.mxu0
        %v1989 = vadd.f32 %v1849, %v1988
        %v1990 = vpop.f32.mrf.mxu0
        %v1991 = vadd.f32 %v1851, %v1990
        %1992 = vmatmul.bf16.gmra.mxu0 %v1928
        %v1993 = vpop.f32.mrf.mxu0
        %v1994 = vadd.f32 %v1854, %v1993
        %v1995 = vpop.f32.mrf.mxu0
        %v1996 = vadd.f32 %v1856, %v1995
        %1997 = vmatmul.bf16.gmra.mxu0 %v1931
        %v1998 = vpop.f32.mrf.mxu0
        %v1999 = vadd.f32 %v1859, %v1998
        %v2000 = vpop.f32.mrf.mxu0
        %v2001 = vadd.f32 %v1861, %v2000
        %2002 = vmatmul.bf16.gmra.mxu0 %v1934
        %v2003 = vpop.f32.mrf.mxu0
        %v2004 = vadd.f32 %v1864, %v2003
        %v2005 = vpop.f32.mrf.mxu0
        %v2006 = vadd.f32 %v1866, %v2005
        %2007 = vmatmul.bf16.gmra.mxu0 %v1937
        %v2008 = vpop.f32.mrf.mxu0
        %v2009 = vadd.f32 %v1869, %v2008
        %v2010 = vpop.f32.mrf.mxu0
        %v2011 = vadd.f32 %v1871, %v2010
        %2012 = vmatmul.bf16.gmra.mxu0 %v1940
        %v2013 = vpop.f32.mrf.mxu0
        %v2014 = vadd.f32 %v1874, %v2013
        %v2015 = vpop.f32.mrf.mxu0
        %v2016 = vadd.f32 %v1876, %v2015
        %2017 = vmatmul.bf16.gmra.mxu0 %v1943
        %v2018 = vpop.f32.mrf.mxu0
        %v2019 = vadd.f32 %v1879, %v2018
        %v2020 = vpop.f32.mrf.mxu0
        %v2021 = vadd.f32 %v1881, %v2020
        %2022 = vmatmul.bf16.gmra.mxu0 %v1946
        %v2023 = vpop.f32.mrf.mxu0
        %v2024 = vadd.f32 %v1884, %v2023
        %v2025 = vpop.f32.mrf.mxu0
        %v2026 = vadd.f32 %v1886, %v2025
        %2027 = vmatmul.bf16.gmra.mxu0 %v1949
        %v2028 = vpop.f32.mrf.mxu0
        %v2029 = vadd.f32 %v1889, %v2028
        %v2030 = vpop.f32.mrf.mxu0
        %v2031 = vadd.f32 %v1891, %v2030
        %2032 = vmatmul.bf16.gmra.mxu0 %v1952
        %v2033 = vpop.f32.mrf.mxu0
        %v2034 = vadd.f32 %v1894, %v2033
        %v2035 = vpop.f32.mrf.mxu0
        %v2036 = vadd.f32 %v1896, %v2035
        %2037 = vmatmul.bf16.gmra.mxu0 %v1955
        %v2038 = vpop.f32.mrf.mxu0
        %v2039 = vadd.f32 %v1899, %v2038
        %v2040 = vpop.f32.mrf.mxu0
        %v2041 = vadd.f32 %v1901, %v2040
        %2042 = vmatmul.bf16.gmra.mxu0 %v1958
        %v2043 = vpop.f32.mrf.mxu0
        %v2044 = vadd.f32 %v1904, %v2043
        %v2045 = vpop.f32.mrf.mxu0
        %v2046 = vadd.f32 %v1906, %v2045
        %2047 = vmatmul.bf16.gmra.mxu0 %v1961
        %v2048 = vpop.f32.mrf.mxu0
        %v2049 = vadd.f32 %v1909, %v2048
        %v2050 = vpop.f32.mrf.mxu0
        %v2051 = vadd.f32 %v1911, %v2050
        %2052 = vmatmul.bf16.gmra.mxu0 %v1964
        %v2053 = vpop.f32.mrf.mxu0
        %v2054 = vadd.f32 %v1914, %v2053
        %v2055 = vpop.f32.mrf.mxu0
        %v2056 = vadd.f32 %v1916, %v2055
        %2057 = vdwg.mxu0
        %vm2074 = vcmask 1046528
        %v2075 = vrot.slane %v1506, 1
        %v2076 = vrot.slane %v1507, 1
        %v2077 = vsel %vm2074, %v2075, %v2076
        %v2078 = vrot.slane %v1508, 1
        %v2079 = vsel %vm2074, %v2076, %v2078
        %v2080 = vrot.slane %v1510, 1
        %v2081 = vrot.slane %v1511, 1
        %v2082 = vsel %vm2074, %v2080, %v2081
        %v2083 = vrot.slane %v1512, 1
        %v2084 = vsel %vm2074, %v2081, %v2083
        %v2085 = vrot.slane %v1514, 1
        %v2086 = vrot.slane %v1515, 1
        %v2087 = vsel %vm2074, %v2085, %v2086
        %v2088 = vrot.slane %v1516, 1
        %v2089 = vsel %vm2074, %v2086, %v2088
        %v2090 = vrot.slane %v1518, 1
        %v2091 = vrot.slane %v1519, 1
        %v2092 = vsel %vm2074, %v2090, %v2091
        %v2093 = vrot.slane %v1520, 1
        %v2094 = vsel %vm2074, %v2091, %v2093
        %v2095 = vrot.slane %v1522, 1
        %v2096 = vrot.slane %v1523, 1
        %v2097 = vsel %vm2074, %v2095, %v2096
        %v2098 = vrot.slane %v1524, 1
        %v2099 = vsel %vm2074, %v2096, %v2098
        %v2100 = vrot.slane %v1526, 1
        %v2101 = vrot.slane %v1527, 1
        %v2102 = vsel %vm2074, %v2100, %v2101
        %v2103 = vrot.slane %v1528, 1
        %v2104 = vsel %vm2074, %v2101, %v2103
        %v2105 = vrot.slane %v1530, 1
        %v2106 = vrot.slane %v1531, 1
        %v2107 = vsel %vm2074, %v2105, %v2106
        %v2108 = vrot.slane %v1532, 1
        %v2109 = vsel %vm2074, %v2106, %v2108
        %v2110 = vrot.slane %v1534, 1
        %v2111 = vrot.slane %v1535, 1
        %v2112 = vsel %vm2074, %v2110, %v2111
        %v2113 = vrot.slane %v1536, 1
        %v2114 = vsel %vm2074, %v2111, %v2113
        %v2115 = vrot.slane %v1538, 1
        %v2116 = vrot.slane %v1539, 1
        %v2117 = vsel %vm2074, %v2115, %v2116
        %v2118 = vrot.slane %v1540, 1
        %v2119 = vsel %vm2074, %v2116, %v2118
        %v2120 = vrot.slane %v1542, 1
        %v2121 = vrot.slane %v1543, 1
        %v2122 = vsel %vm2074, %v2120, %v2121
        %v2123 = vrot.slane %v1544, 1
        %v2124 = vsel %vm2074, %v2121, %v2123
        %v2125 = vrot.slane %v1546, 1
        %v2126 = vrot.slane %v1547, 1
        %v2127 = vsel %vm2074, %v2125, %v2126
        %v2128 = vrot.slane %v1548, 1
        %v2129 = vsel %vm2074, %v2126, %v2128
        %v2130 = vrot.slane %v1550, 1
        %v2131 = vrot.slane %v1551, 1
        %v2132 = vsel %vm2074, %v2130, %v2131
        %v2133 = vrot.slane %v1552, 1
        %v2134 = vsel %vm2074, %v2131, %v2133
        %v2135 = vrot.slane %v1554, 1
        %v2136 = vrot.slane %v1555, 1
        %v2137 = vsel %vm2074, %v2135, %v2136
        %v2138 = vrot.slane %v1556, 1
        %v2139 = vsel %vm2074, %v2136, %v2138
        %v2140 = vrot.slane %v1558, 1
        %v2141 = vrot.slane %v1559, 1
        %v2142 = vsel %vm2074, %v2140, %v2141
        %v2143 = vrot.slane %v1560, 1
        %v2144 = vsel %vm2074, %v2141, %v2143
        %v2145 = vrot.slane %v1562, 1
        %v2146 = vrot.slane %v1563, 1
        %v2147 = vsel %vm2074, %v2145, %v2146
        %v2148 = vrot.slane %v1564, 1
        %v2149 = vsel %vm2074, %v2146, %v2148
        %v2150 = vrot.slane %v1566, 1
        %v2151 = vrot.slane %v1567, 1
        %v2152 = vsel %vm2074, %v2150, %v2151
        %v2153 = vrot.slane %v1568, 1
        %v2154 = vsel %vm2074, %v2151, %v2153
        %v2187 = vpack.c.bf16 %v2079, %v2077
        %v2188 = vpack.c.bf16 %v2084, %v2082
        %v2189 = vpack.c.bf16 %v2089, %v2087
        %v2190 = vpack.c.bf16 %v2094, %v2092
        %v2191 = vpack.c.bf16 %v2099, %v2097
        %v2192 = vpack.c.bf16 %v2104, %v2102
        %v2193 = vpack.c.bf16 %v2109, %v2107
        %v2194 = vpack.c.bf16 %v2114, %v2112
        %v2195 = vpack.c.bf16 %v2119, %v2117
        %v2196 = vpack.c.bf16 %v2124, %v2122
        %v2197 = vpack.c.bf16 %v2129, %v2127
        %v2198 = vpack.c.bf16 %v2134, %v2132
        %v2199 = vpack.c.bf16 %v2139, %v2137
        %v2200 = vpack.c.bf16 %v2144, %v2142
        %v2201 = vpack.c.bf16 %v2149, %v2147
        %v2202 = vpack.c.bf16 %v2154, %v2152
        %s2203 = scalar_lea.vmem %s4, 8
        %v2204 = vld [vmem:[%s2203] sm:$0x7]
        %v2205 = vpack.c.bf16 %v2204, %v2204
        %v2207 = vsel %vm1399, %v2187, 0
        %v2210 = vsel %vm1399, %v2188, 0
        %v2213 = vsel %vm1399, %v2189, 0
        %v2216 = vsel %vm1399, %v2190, 0
        %v2219 = vsel %vm1399, %v2191, 0
        %v2222 = vsel %vm1399, %v2192, 0
        %v2225 = vsel %vm1399, %v2193, 0
        %v2228 = vsel %vm1399, %v2194, 0
        %v2231 = vsel %vm1399, %v2195, 0
        %v2234 = vsel %vm1399, %v2196, 0
        %v2237 = vsel %vm1399, %v2197, 0
        %v2240 = vsel %vm1399, %v2198, 0
        %v2243 = vsel %vm1399, %v2199, 0
        %v2246 = vsel %vm1399, %v2200, 0
        %v2249 = vsel %vm1399, %v2201, 0
        %v2252 = vsel %vm1399, %v2202, 0
        %v2255 = vand.u32 %v2205, %v1825
        %2257 = vmatpush.bf16.msra.mxu0 0
        %2258 = vmatpush.bf16.msra.mxu0 0
        %2259 = vmatpush.bf16.msra.mxu0 0
        %2260 = vmatpush.bf16.msra.mxu0 0
        %2261 = vmatpush.bf16.msra.mxu0 0
        %2262 = vmatpush.bf16.msra.mxu0 0
        %2263 = vmatpush.bf16.msra.mxu0 0
        %2264 = vmatpush.bf16.msra.mxu0 %v2255
        %2265 = vmatmul.bf16.gmra.mxu0 %v2207
        %v2266 = vpop.f32.mrf.mxu0
        %v2267 = vadd.f32 0.0, %v2266
        %v2268 = vpop.f32.mrf.mxu0
        %v2269 = vadd.f32 0.0, %v2268
        %2270 = vmatmul.bf16.gmra.mxu0 %v2210
        %v2271 = vpop.f32.mrf.mxu0
        %v2272 = vadd.f32 0.0, %v2271
        %v2273 = vpop.f32.mrf.mxu0
        %v2274 = vadd.f32 0.0, %v2273
        %2275 = vmatmul.bf16.gmra.mxu0 %v2213
        %v2276 = vpop.f32.mrf.mxu0
        %v2277 = vadd.f32 0.0, %v2276
        %v2278 = vpop.f32.mrf.mxu0
        %v2279 = vadd.f32 0.0, %v2278
        %2280 = vmatmul.bf16.gmra.mxu0 %v2216
        %v2281 = vpop.f32.mrf.mxu0
        %v2282 = vadd.f32 0.0, %v2281
        %v2283 = vpop.f32.mrf.mxu0
        %v2284 = vadd.f32 0.0, %v2283
        %2285 = vmatmul.bf16.gmra.mxu0 %v2219
        %v2286 = vpop.f32.mrf.mxu0
        %v2287 = vadd.f32 0.0, %v2286
        %v2288 = vpop.f32.mrf.mxu0
        %v2289 = vadd.f32 0.0, %v2288
        %2290 = vmatmul.bf16.gmra.mxu0 %v2222
        %v2291 = vpop.f32.mrf.mxu0
        %v2292 = vadd.f32 0.0, %v2291
        %v2293 = vpop.f32.mrf.mxu0
        %v2294 = vadd.f32 0.0, %v2293
        %2295 = vmatmul.bf16.gmra.mxu0 %v2225
        %v2296 = vpop.f32.mrf.mxu0
        %v2297 = vadd.f32 0.0, %v2296
        %v2298 = vpop.f32.mrf.mxu0
        %v2299 = vadd.f32 0.0, %v2298
        %2300 = vmatmul.bf16.gmra.mxu0 %v2228
        %v2301 = vpop.f32.mrf.mxu0
        %v2302 = vadd.f32 0.0, %v2301
        %v2303 = vpop.f32.mrf.mxu0
        %v2304 = vadd.f32 0.0, %v2303
        %2305 = vmatmul.bf16.gmra.mxu0 %v2231
        %v2306 = vpop.f32.mrf.mxu0
        %v2307 = vadd.f32 0.0, %v2306
        %v2308 = vpop.f32.mrf.mxu0
        %v2309 = vadd.f32 0.0, %v2308
        %2310 = vmatmul.bf16.gmra.mxu0 %v2234
        %v2311 = vpop.f32.mrf.mxu0
        %v2312 = vadd.f32 0.0, %v2311
        %v2313 = vpop.f32.mrf.mxu0
        %v2314 = vadd.f32 0.0, %v2313
        %2315 = vmatmul.bf16.gmra.mxu0 %v2237
        %v2316 = vpop.f32.mrf.mxu0
        %v2317 = vadd.f32 0.0, %v2316
        %v2318 = vpop.f32.mrf.mxu0
        %v2319 = vadd.f32 0.0, %v2318
        %2320 = vmatmul.bf16.gmra.mxu0 %v2240
        %v2321 = vpop.f32.mrf.mxu0
        %v2322 = vadd.f32 0.0, %v2321
        %v2323 = vpop.f32.mrf.mxu0
        %v2324 = vadd.f32 0.0, %v2323
        %2325 = vmatmul.bf16.gmra.mxu0 %v2243
        %v2326 = vpop.f32.mrf.mxu0
        %v2327 = vadd.f32 0.0, %v2326
        %v2328 = vpop.f32.mrf.mxu0
        %v2329 = vadd.f32 0.0, %v2328
        %2330 = vmatmul.bf16.gmra.mxu0 %v2246
        %v2331 = vpop.f32.mrf.mxu0
        %v2332 = vadd.f32 0.0, %v2331
        %v2333 = vpop.f32.mrf.mxu0
        %v2334 = vadd.f32 0.0, %v2333
        %2335 = vmatmul.bf16.gmra.mxu0 %v2249
        %v2336 = vpop.f32.mrf.mxu0
        %v2337 = vadd.f32 0.0, %v2336
        %v2338 = vpop.f32.mrf.mxu0
        %v2339 = vadd.f32 0.0, %v2338
        %2340 = vmatmul.bf16.gmra.mxu0 %v2252
        %v2341 = vpop.f32.mrf.mxu0
        %v2342 = vadd.f32 0.0, %v2341
        %v2343 = vpop.f32.mrf.mxu0
        %v2344 = vadd.f32 0.0, %v2343
        %2345 = vdwg.mxu0
        %v2346 = vadd.f32 %v1979, %v2267
        %v2347 = vadd.f32 %v1981, %v2269
        %v2348 = vadd.f32 %v1984, %v2272
        %v2349 = vadd.f32 %v1986, %v2274
        %v2350 = vadd.f32 %v1989, %v2277
        %v2351 = vadd.f32 %v1991, %v2279
        %v2352 = vadd.f32 %v1994, %v2282
        %v2353 = vadd.f32 %v1996, %v2284
        %v2354 = vadd.f32 %v1999, %v2287
        %v2355 = vadd.f32 %v2001, %v2289
        %v2356 = vadd.f32 %v2004, %v2292
        %v2357 = vadd.f32 %v2006, %v2294
        %v2358 = vadd.f32 %v2009, %v2297
        %v2359 = vadd.f32 %v2011, %v2299
        %v2360 = vadd.f32 %v2014, %v2302
        %v2361 = vadd.f32 %v2016, %v2304
        %v2362 = vadd.f32 %v2019, %v2307
        %v2363 = vadd.f32 %v2021, %v2309
        %v2364 = vadd.f32 %v2024, %v2312
        %v2365 = vadd.f32 %v2026, %v2314
        %v2366 = vadd.f32 %v2029, %v2317
        %v2367 = vadd.f32 %v2031, %v2319
        %v2368 = vadd.f32 %v2034, %v2322
        %v2369 = vadd.f32 %v2036, %v2324
        %v2370 = vadd.f32 %v2039, %v2327
        %v2371 = vadd.f32 %v2041, %v2329
        %v2372 = vadd.f32 %v2044, %v2332
        %v2373 = vadd.f32 %v2046, %v2334
        %v2374 = vadd.f32 %v2049, %v2337
        %v2375 = vadd.f32 %v2051, %v2339
        %v2376 = vadd.f32 %v2054, %v2342
        %v2377 = vadd.f32 %v2056, %v2344
        %v2381 = vrot.slane %v1569, 7
        %v2382 = vrot.slane %v1570, 7
        %v2383 = vsel %vm1625, %v2381, %v2382
        %v2384 = vrot.slane %v1571, 7
        %v2385 = vsel %vm1625, %v2382, %v2384
        %v2388 = vpack.c.bf16 %v2385, %v2383
        %s2389 = scalar_lea.vmem %s4, 12
        %v2390 = vld [vmem:[%s2389] sm:$0x7]
        %v2391 = vpack.c.bf16 %v2390, %v2390
        %v2393 = vsel %vm1399, %v2388, 0
        %v2396 = vand.u32 %v2391, %v1825
        %2398 = vmatpush.bf16.msra.mxu0 0
        %2399 = vmatpush.bf16.msra.mxu0 0
        %2400 = vmatpush.bf16.msra.mxu0 0
        %2401 = vmatpush.bf16.msra.mxu0 0
        %2402 = vmatpush.bf16.msra.mxu0 0
        %2403 = vmatpush.bf16.msra.mxu0 0
        %2404 = vmatpush.bf16.msra.mxu0 0
        %2405 = vmatpush.bf16.msra.mxu0 %v2396
        %2406 = vmatmul.bf16.gmra.mxu0 %v1922
        %v2407 = vpop.f32.mrf.mxu0
        %v2408 = vadd.f32 0.0, %v2407
        %v2409 = vpop.f32.mrf.mxu0
        %v2410 = vadd.f32 0.0, %v2409
        %2411 = vmatmul.bf16.gmra.mxu0 %v1925
        %v2412 = vpop.f32.mrf.mxu0
        %v2413 = vadd.f32 0.0, %v2412
        %v2414 = vpop.f32.mrf.mxu0
        %v2415 = vadd.f32 0.0, %v2414
        %2416 = vmatmul.bf16.gmra.mxu0 %v1928
        %v2417 = vpop.f32.mrf.mxu0
        %v2418 = vadd.f32 0.0, %v2417
        %v2419 = vpop.f32.mrf.mxu0
        %v2420 = vadd.f32 0.0, %v2419
        %2421 = vmatmul.bf16.gmra.mxu0 %v1931
        %v2422 = vpop.f32.mrf.mxu0
        %v2423 = vadd.f32 0.0, %v2422
        %v2424 = vpop.f32.mrf.mxu0
        %v2425 = vadd.f32 0.0, %v2424
        %2426 = vmatmul.bf16.gmra.mxu0 %v1934
        %v2427 = vpop.f32.mrf.mxu0
        %v2428 = vadd.f32 0.0, %v2427
        %v2429 = vpop.f32.mrf.mxu0
        %v2430 = vadd.f32 0.0, %v2429
        %2431 = vmatmul.bf16.gmra.mxu0 %v1937
        %v2432 = vpop.f32.mrf.mxu0
        %v2433 = vadd.f32 0.0, %v2432
        %v2434 = vpop.f32.mrf.mxu0
        %v2435 = vadd.f32 0.0, %v2434
        %2436 = vmatmul.bf16.gmra.mxu0 %v1940
        %v2437 = vpop.f32.mrf.mxu0
        %v2438 = vadd.f32 0.0, %v2437
        %v2439 = vpop.f32.mrf.mxu0
        %v2440 = vadd.f32 0.0, %v2439
        %2441 = vmatmul.bf16.gmra.mxu0 %v1943
        %v2442 = vpop.f32.mrf.mxu0
        %v2443 = vadd.f32 0.0, %v2442
        %v2444 = vpop.f32.mrf.mxu0
        %v2445 = vadd.f32 0.0, %v2444
        %2446 = vmatmul.bf16.gmra.mxu0 %v1946
        %v2447 = vpop.f32.mrf.mxu0
        %v2448 = vadd.f32 0.0, %v2447
        %v2449 = vpop.f32.mrf.mxu0
        %v2450 = vadd.f32 0.0, %v2449
        %2451 = vmatmul.bf16.gmra.mxu0 %v1949
        %v2452 = vpop.f32.mrf.mxu0
        %v2453 = vadd.f32 0.0, %v2452
        %v2454 = vpop.f32.mrf.mxu0
        %v2455 = vadd.f32 0.0, %v2454
        %2456 = vmatmul.bf16.gmra.mxu0 %v1952
        %v2457 = vpop.f32.mrf.mxu0
        %v2458 = vadd.f32 0.0, %v2457
        %v2459 = vpop.f32.mrf.mxu0
        %v2460 = vadd.f32 0.0, %v2459
        %2461 = vmatmul.bf16.gmra.mxu0 %v1955
        %v2462 = vpop.f32.mrf.mxu0
        %v2463 = vadd.f32 0.0, %v2462
        %v2464 = vpop.f32.mrf.mxu0
        %v2465 = vadd.f32 0.0, %v2464
        %2466 = vmatmul.bf16.gmra.mxu0 %v1958
        %v2467 = vpop.f32.mrf.mxu0
        %v2468 = vadd.f32 0.0, %v2467
        %v2469 = vpop.f32.mrf.mxu0
        %v2470 = vadd.f32 0.0, %v2469
        %2471 = vmatmul.bf16.gmra.mxu0 %v1961
        %v2472 = vpop.f32.mrf.mxu0
        %v2473 = vadd.f32 0.0, %v2472
        %v2474 = vpop.f32.mrf.mxu0
        %v2475 = vadd.f32 0.0, %v2474
        %2476 = vmatmul.bf16.gmra.mxu0 %v1964
        %v2477 = vpop.f32.mrf.mxu0
        %v2478 = vadd.f32 0.0, %v2477
        %v2479 = vpop.f32.mrf.mxu0
        %v2480 = vadd.f32 0.0, %v2479
        %2481 = vmatmul.bf16.gmra.mxu0 %v2393
        %v2482 = vpop.f32.mrf.mxu0
        %v2483 = vadd.f32 0.0, %v2482
        %v2484 = vpop.f32.mrf.mxu0
        %v2485 = vadd.f32 0.0, %v2484
        %2486 = vdwg.mxu0
        %v2487 = vadd.f32 %v2346, %v2408
        %v2488 = vadd.f32 %v2347, %v2410
        %v2489 = vadd.f32 %v2348, %v2413
        %v2490 = vadd.f32 %v2349, %v2415
        %v2491 = vadd.f32 %v2350, %v2418
        %v2492 = vadd.f32 %v2351, %v2420
        %v2493 = vadd.f32 %v2352, %v2423
        %v2494 = vadd.f32 %v2353, %v2425
        %v2495 = vadd.f32 %v2354, %v2428
        %v2496 = vadd.f32 %v2355, %v2430
        %v2497 = vadd.f32 %v2356, %v2433
        %v2498 = vadd.f32 %v2357, %v2435
        %v2499 = vadd.f32 %v2358, %v2438
        %v2500 = vadd.f32 %v2359, %v2440
        %v2501 = vadd.f32 %v2360, %v2443
        %v2502 = vadd.f32 %v2361, %v2445
        %v2503 = vadd.f32 %v2362, %v2448
        %v2504 = vadd.f32 %v2363, %v2450
        %v2505 = vadd.f32 %v2364, %v2453
        %v2506 = vadd.f32 %v2365, %v2455
        %v2507 = vadd.f32 %v2366, %v2458
        %v2508 = vadd.f32 %v2367, %v2460
        %v2509 = vadd.f32 %v2368, %v2463
        %v2510 = vadd.f32 %v2369, %v2465
        %v2511 = vadd.f32 %v2370, %v2468
        %v2512 = vadd.f32 %v2371, %v2470
        %v2513 = vadd.f32 %v2372, %v2473
        %v2514 = vadd.f32 %v2373, %v2475
        %v2515 = vadd.f32 %v2374, %v2478
        %v2516 = vadd.f32 %v2375, %v2480
        %v2517 = vadd.f32 %v2376, %v2483
        %v2518 = vadd.f32 %v2377, %v2485
        %v2519 = vpack.c.bf16 %v1571, %v1570
        %s2520 = scalar_lea.vmem %s4, 16
        %v2521 = vld [vmem:[%s2520] sm:$0x7]
        %v2522 = vpack.c.bf16 %v2521, %v2521
        %v2524 = vsel %vm1399, %v2519, 0
        %v2527 = vand.u32 %v2522, %v1825
        %2529 = vmatpush.bf16.msra.mxu0 0
        %2530 = vmatpush.bf16.msra.mxu0 0
        %2531 = vmatpush.bf16.msra.mxu0 0
        %2532 = vmatpush.bf16.msra.mxu0 0
        %2533 = vmatpush.bf16.msra.mxu0 0
        %2534 = vmatpush.bf16.msra.mxu0 0
        %2535 = vmatpush.bf16.msra.mxu0 0
        %2536 = vmatpush.bf16.msra.mxu0 %v2527
        %2537 = vmatmul.bf16.gmra.mxu0 %v1779
        %v2538 = vpop.f32.mrf.mxu0
        %v2539 = vadd.f32 0.0, %v2538
        %v2540 = vpop.f32.mrf.mxu0
        %v2541 = vadd.f32 0.0, %v2540
        %2542 = vmatmul.bf16.gmra.mxu0 %v1782
        %v2543 = vpop.f32.mrf.mxu0
        %v2544 = vadd.f32 0.0, %v2543
        %v2545 = vpop.f32.mrf.mxu0
        %v2546 = vadd.f32 0.0, %v2545
        %2547 = vmatmul.bf16.gmra.mxu0 %v1785
        %v2548 = vpop.f32.mrf.mxu0
        %v2549 = vadd.f32 0.0, %v2548
        %v2550 = vpop.f32.mrf.mxu0
        %v2551 = vadd.f32 0.0, %v2550
        %2552 = vmatmul.bf16.gmra.mxu0 %v1788
        %v2553 = vpop.f32.mrf.mxu0
        %v2554 = vadd.f32 0.0, %v2553
        %v2555 = vpop.f32.mrf.mxu0
        %v2556 = vadd.f32 0.0, %v2555
        %2557 = vmatmul.bf16.gmra.mxu0 %v1791
        %v2558 = vpop.f32.mrf.mxu0
        %v2559 = vadd.f32 0.0, %v2558
        %v2560 = vpop.f32.mrf.mxu0
        %v2561 = vadd.f32 0.0, %v2560
        %2562 = vmatmul.bf16.gmra.mxu0 %v1794
        %v2563 = vpop.f32.mrf.mxu0
        %v2564 = vadd.f32 0.0, %v2563
        %v2565 = vpop.f32.mrf.mxu0
        %v2566 = vadd.f32 0.0, %v2565
        %2567 = vmatmul.bf16.gmra.mxu0 %v1797
        %v2568 = vpop.f32.mrf.mxu0
        %v2569 = vadd.f32 0.0, %v2568
        %v2570 = vpop.f32.mrf.mxu0
        %v2571 = vadd.f32 0.0, %v2570
        %2572 = vmatmul.bf16.gmra.mxu0 %v1800
        %v2573 = vpop.f32.mrf.mxu0
        %v2574 = vadd.f32 0.0, %v2573
        %v2575 = vpop.f32.mrf.mxu0
        %v2576 = vadd.f32 0.0, %v2575
        %2577 = vmatmul.bf16.gmra.mxu0 %v1803
        %v2578 = vpop.f32.mrf.mxu0
        %v2579 = vadd.f32 0.0, %v2578
        %v2580 = vpop.f32.mrf.mxu0
        %v2581 = vadd.f32 0.0, %v2580
        %2582 = vmatmul.bf16.gmra.mxu0 %v1806
        %v2583 = vpop.f32.mrf.mxu0
        %v2584 = vadd.f32 0.0, %v2583
        %v2585 = vpop.f32.mrf.mxu0
        %v2586 = vadd.f32 0.0, %v2585
        %2587 = vmatmul.bf16.gmra.mxu0 %v1809
        %v2588 = vpop.f32.mrf.mxu0
        %v2589 = vadd.f32 0.0, %v2588
        %v2590 = vpop.f32.mrf.mxu0
        %v2591 = vadd.f32 0.0, %v2590
        %2592 = vmatmul.bf16.gmra.mxu0 %v1812
        %v2593 = vpop.f32.mrf.mxu0
        %v2594 = vadd.f32 0.0, %v2593
        %v2595 = vpop.f32.mrf.mxu0
        %v2596 = vadd.f32 0.0, %v2595
        %2597 = vmatmul.bf16.gmra.mxu0 %v1815
        %v2598 = vpop.f32.mrf.mxu0
        %v2599 = vadd.f32 0.0, %v2598
        %v2600 = vpop.f32.mrf.mxu0
        %v2601 = vadd.f32 0.0, %v2600
        %2602 = vmatmul.bf16.gmra.mxu0 %v1818
        %v2603 = vpop.f32.mrf.mxu0
        %v2604 = vadd.f32 0.0, %v2603
        %v2605 = vpop.f32.mrf.mxu0
        %v2606 = vadd.f32 0.0, %v2605
        %2607 = vmatmul.bf16.gmra.mxu0 %v1821
        %v2608 = vpop.f32.mrf.mxu0
        %v2609 = vadd.f32 0.0, %v2608
        %v2610 = vpop.f32.mrf.mxu0
        %v2611 = vadd.f32 0.0, %v2610
        %2612 = vmatmul.bf16.gmra.mxu0 %v2524
        %v2613 = vpop.f32.mrf.mxu0
        %v2614 = vadd.f32 0.0, %v2613
        %v2615 = vpop.f32.mrf.mxu0
        %v2616 = vadd.f32 0.0, %v2615
        %2617 = vdwg.mxu0
        %v2618 = vadd.f32 %v2487, %v2539
        %v2619 = vadd.f32 %v2488, %v2541
        %v2620 = vadd.f32 %v2489, %v2544
        %v2621 = vadd.f32 %v2490, %v2546
        %v2622 = vadd.f32 %v2491, %v2549
        %v2623 = vadd.f32 %v2492, %v2551
        %v2624 = vadd.f32 %v2493, %v2554
        %v2625 = vadd.f32 %v2494, %v2556
        %v2626 = vadd.f32 %v2495, %v2559
        %v2627 = vadd.f32 %v2496, %v2561
        %v2628 = vadd.f32 %v2497, %v2564
        %v2629 = vadd.f32 %v2498, %v2566
        %v2630 = vadd.f32 %v2499, %v2569
        %v2631 = vadd.f32 %v2500, %v2571
        %v2632 = vadd.f32 %v2501, %v2574
        %v2633 = vadd.f32 %v2502, %v2576
        %v2634 = vadd.f32 %v2503, %v2579
        %v2635 = vadd.f32 %v2504, %v2581
        %v2636 = vadd.f32 %v2505, %v2584
        %v2637 = vadd.f32 %v2506, %v2586
        %v2638 = vadd.f32 %v2507, %v2589
        %v2639 = vadd.f32 %v2508, %v2591
        %v2640 = vadd.f32 %v2509, %v2594
        %v2641 = vadd.f32 %v2510, %v2596
        %v2642 = vadd.f32 %v2511, %v2599
        %v2643 = vadd.f32 %v2512, %v2601
        %v2644 = vadd.f32 %v2513, %v2604
        %v2645 = vadd.f32 %v2514, %v2606
        %v2646 = vadd.f32 %v2515, %v2609
        %v2647 = vadd.f32 %v2516, %v2611
        %v2648 = vadd.f32 %v2517, %v2614
        %v2649 = vadd.f32 %v2518, %v2616
        %v2651 = vrot.slane %v1570, 1
        %v2652 = vrot.slane %v1571, 1
        %v2653 = vsel %vm2074, %v2651, %v2652
        %v2654 = vrot.slane %v1572, 1
        %v2655 = vsel %vm2074, %v2652, %v2654
        %v2658 = vpack.c.bf16 %v2655, %v2653
        %s2659 = scalar_lea.vmem %s4, 20
        %v2660 = vld [vmem:[%s2659] sm:$0x7]
        %v2661 = vpack.c.bf16 %v2660, %v2660
        %v2663 = vsel %vm1399, %v2658, 0
        %v2666 = vand.u32 %v2661, %v1825
        %2668 = vmatpush.bf16.msra.mxu0 0
        %2669 = vmatpush.bf16.msra.mxu0 0
        %2670 = vmatpush.bf16.msra.mxu0 0
        %2671 = vmatpush.bf16.msra.mxu0 0
        %2672 = vmatpush.bf16.msra.mxu0 0
        %2673 = vmatpush.bf16.msra.mxu0 0
        %2674 = vmatpush.bf16.msra.mxu0 0
        %2675 = vmatpush.bf16.msra.mxu0 %v2666
        %2676 = vmatmul.bf16.gmra.mxu0 %v2210
        %v2677 = vpop.f32.mrf.mxu0
        %v2678 = vadd.f32 0.0, %v2677
        %v2679 = vpop.f32.mrf.mxu0
        %v2680 = vadd.f32 0.0, %v2679
        %2681 = vmatmul.bf16.gmra.mxu0 %v2213
        %v2682 = vpop.f32.mrf.mxu0
        %v2683 = vadd.f32 0.0, %v2682
        %v2684 = vpop.f32.mrf.mxu0
        %v2685 = vadd.f32 0.0, %v2684
        %2686 = vmatmul.bf16.gmra.mxu0 %v2216
        %v2687 = vpop.f32.mrf.mxu0
        %v2688 = vadd.f32 0.0, %v2687
        %v2689 = vpop.f32.mrf.mxu0
        %v2690 = vadd.f32 0.0, %v2689
        %2691 = vmatmul.bf16.gmra.mxu0 %v2219
        %v2692 = vpop.f32.mrf.mxu0
        %v2693 = vadd.f32 0.0, %v2692
        %v2694 = vpop.f32.mrf.mxu0
        %v2695 = vadd.f32 0.0, %v2694
        %2696 = vmatmul.bf16.gmra.mxu0 %v2222
        %v2697 = vpop.f32.mrf.mxu0
        %v2698 = vadd.f32 0.0, %v2697
        %v2699 = vpop.f32.mrf.mxu0
        %v2700 = vadd.f32 0.0, %v2699
        %2701 = vmatmul.bf16.gmra.mxu0 %v2225
        %v2702 = vpop.f32.mrf.mxu0
        %v2703 = vadd.f32 0.0, %v2702
        %v2704 = vpop.f32.mrf.mxu0
        %v2705 = vadd.f32 0.0, %v2704
        %2706 = vmatmul.bf16.gmra.mxu0 %v2228
        %v2707 = vpop.f32.mrf.mxu0
        %v2708 = vadd.f32 0.0, %v2707
        %v2709 = vpop.f32.mrf.mxu0
        %v2710 = vadd.f32 0.0, %v2709
        %2711 = vmatmul.bf16.gmra.mxu0 %v2231
        %v2712 = vpop.f32.mrf.mxu0
        %v2713 = vadd.f32 0.0, %v2712
        %v2714 = vpop.f32.mrf.mxu0
        %v2715 = vadd.f32 0.0, %v2714
        %2716 = vmatmul.bf16.gmra.mxu0 %v2234
        %v2717 = vpop.f32.mrf.mxu0
        %v2718 = vadd.f32 0.0, %v2717
        %v2719 = vpop.f32.mrf.mxu0
        %v2720 = vadd.f32 0.0, %v2719
        %2721 = vmatmul.bf16.gmra.mxu0 %v2237
        %v2722 = vpop.f32.mrf.mxu0
        %v2723 = vadd.f32 0.0, %v2722
        %v2724 = vpop.f32.mrf.mxu0
        %v2725 = vadd.f32 0.0, %v2724
        %2726 = vmatmul.bf16.gmra.mxu0 %v2240
        %v2727 = vpop.f32.mrf.mxu0
        %v2728 = vadd.f32 0.0, %v2727
        %v2729 = vpop.f32.mrf.mxu0
        %v2730 = vadd.f32 0.0, %v2729
        %2731 = vmatmul.bf16.gmra.mxu0 %v2243
        %v2732 = vpop.f32.mrf.mxu0
        %v2733 = vadd.f32 0.0, %v2732
        %v2734 = vpop.f32.mrf.mxu0
        %v2735 = vadd.f32 0.0, %v2734
        %2736 = vmatmul.bf16.gmra.mxu0 %v2246
        %v2737 = vpop.f32.mrf.mxu0
        %v2738 = vadd.f32 0.0, %v2737
        %v2739 = vpop.f32.mrf.mxu0
        %v2740 = vadd.f32 0.0, %v2739
        %2741 = vmatmul.bf16.gmra.mxu0 %v2249
        %v2742 = vpop.f32.mrf.mxu0
        %v2743 = vadd.f32 0.0, %v2742
        %v2744 = vpop.f32.mrf.mxu0
        %v2745 = vadd.f32 0.0, %v2744
        %2746 = vmatmul.bf16.gmra.mxu0 %v2252
        %v2747 = vpop.f32.mrf.mxu0
        %v2748 = vadd.f32 0.0, %v2747
        %v2749 = vpop.f32.mrf.mxu0
        %v2750 = vadd.f32 0.0, %v2749
        %2751 = vmatmul.bf16.gmra.mxu0 %v2663
        %v2752 = vpop.f32.mrf.mxu0
        %v2753 = vadd.f32 0.0, %v2752
        %v2754 = vpop.f32.mrf.mxu0
        %v2755 = vadd.f32 0.0, %v2754
        %2756 = vdwg.mxu0
        %v2757 = vadd.f32 %v2618, %v2678
        %v2758 = vadd.f32 %v2619, %v2680
        %v2759 = vadd.f32 %v2620, %v2683
        %v2760 = vadd.f32 %v2621, %v2685
        %v2761 = vadd.f32 %v2622, %v2688
        %v2762 = vadd.f32 %v2623, %v2690
        %v2763 = vadd.f32 %v2624, %v2693
        %v2764 = vadd.f32 %v2625, %v2695
        %v2765 = vadd.f32 %v2626, %v2698
        %v2766 = vadd.f32 %v2627, %v2700
        %v2767 = vadd.f32 %v2628, %v2703
        %v2768 = vadd.f32 %v2629, %v2705
        %v2769 = vadd.f32 %v2630, %v2708
        %v2770 = vadd.f32 %v2631, %v2710
        %v2771 = vadd.f32 %v2632, %v2713
        %v2772 = vadd.f32 %v2633, %v2715
        %v2773 = vadd.f32 %v2634, %v2718
        %v2774 = vadd.f32 %v2635, %v2720
        %v2775 = vadd.f32 %v2636, %v2723
        %v2776 = vadd.f32 %v2637, %v2725
        %v2777 = vadd.f32 %v2638, %v2728
        %v2778 = vadd.f32 %v2639, %v2730
        %v2779 = vadd.f32 %v2640, %v2733
        %v2780 = vadd.f32 %v2641, %v2735
        %v2781 = vadd.f32 %v2642, %v2738
        %v2782 = vadd.f32 %v2643, %v2740
        %v2783 = vadd.f32 %v2644, %v2743
        %v2784 = vadd.f32 %v2645, %v2745
        %v2785 = vadd.f32 %v2646, %v2748
        %v2786 = vadd.f32 %v2647, %v2750
        %v2787 = vadd.f32 %v2648, %v2753
        %v2788 = vadd.f32 %v2649, %v2755
        %v2792 = vrot.slane %v1573, 7
        %v2793 = vrot.slane %v1574, 7
        %v2794 = vsel %vm1625, %v2792, %v2793
        %v2795 = vrot.slane %v1575, 7
        %v2796 = vsel %vm1625, %v2793, %v2795
        %v2799 = vpack.c.bf16 %v2796, %v2794
        %s2800 = scalar_lea.vmem %s4, 24
        %v2801 = vld [vmem:[%s2800] sm:$0x7]
        %v2802 = vpack.c.bf16 %v2801, %v2801
        %v2804 = vsel %vm1399, %v2799, 0
        %v2807 = vand.u32 %v2802, %v1825
        %2809 = vmatpush.bf16.msra.mxu0 0
        %2810 = vmatpush.bf16.msra.mxu0 0
        %2811 = vmatpush.bf16.msra.mxu0 0
        %2812 = vmatpush.bf16.msra.mxu0 0
        %2813 = vmatpush.bf16.msra.mxu0 0
        %2814 = vmatpush.bf16.msra.mxu0 0
        %2815 = vmatpush.bf16.msra.mxu0 0
        %2816 = vmatpush.bf16.msra.mxu0 %v2807
        %2817 = vmatmul.bf16.gmra.mxu0 %v1925
        %v2818 = vpop.f32.mrf.mxu0
        %v2819 = vadd.f32 0.0, %v2818
        %v2820 = vpop.f32.mrf.mxu0
        %v2821 = vadd.f32 0.0, %v2820
        %2822 = vmatmul.bf16.gmra.mxu0 %v1928
        %v2823 = vpop.f32.mrf.mxu0
        %v2824 = vadd.f32 0.0, %v2823
        %v2825 = vpop.f32.mrf.mxu0
        %v2826 = vadd.f32 0.0, %v2825
        %2827 = vmatmul.bf16.gmra.mxu0 %v1931
        %v2828 = vpop.f32.mrf.mxu0
        %v2829 = vadd.f32 0.0, %v2828
        %v2830 = vpop.f32.mrf.mxu0
        %v2831 = vadd.f32 0.0, %v2830
        %2832 = vmatmul.bf16.gmra.mxu0 %v1934
        %v2833 = vpop.f32.mrf.mxu0
        %v2834 = vadd.f32 0.0, %v2833
        %v2835 = vpop.f32.mrf.mxu0
        %v2836 = vadd.f32 0.0, %v2835
        %2837 = vmatmul.bf16.gmra.mxu0 %v1937
        %v2838 = vpop.f32.mrf.mxu0
        %v2839 = vadd.f32 0.0, %v2838
        %v2840 = vpop.f32.mrf.mxu0
        %v2841 = vadd.f32 0.0, %v2840
        %2842 = vmatmul.bf16.gmra.mxu0 %v1940
        %v2843 = vpop.f32.mrf.mxu0
        %v2844 = vadd.f32 0.0, %v2843
        %v2845 = vpop.f32.mrf.mxu0
        %v2846 = vadd.f32 0.0, %v2845
        %2847 = vmatmul.bf16.gmra.mxu0 %v1943
        %v2848 = vpop.f32.mrf.mxu0
        %v2849 = vadd.f32 0.0, %v2848
        %v2850 = vpop.f32.mrf.mxu0
        %v2851 = vadd.f32 0.0, %v2850
        %2852 = vmatmul.bf16.gmra.mxu0 %v1946
        %v2853 = vpop.f32.mrf.mxu0
        %v2854 = vadd.f32 0.0, %v2853
        %v2855 = vpop.f32.mrf.mxu0
        %v2856 = vadd.f32 0.0, %v2855
        %2857 = vmatmul.bf16.gmra.mxu0 %v1949
        %v2858 = vpop.f32.mrf.mxu0
        %v2859 = vadd.f32 0.0, %v2858
        %v2860 = vpop.f32.mrf.mxu0
        %v2861 = vadd.f32 0.0, %v2860
        %2862 = vmatmul.bf16.gmra.mxu0 %v1952
        %v2863 = vpop.f32.mrf.mxu0
        %v2864 = vadd.f32 0.0, %v2863
        %v2865 = vpop.f32.mrf.mxu0
        %v2866 = vadd.f32 0.0, %v2865
        %2867 = vmatmul.bf16.gmra.mxu0 %v1955
        %v2868 = vpop.f32.mrf.mxu0
        %v2869 = vadd.f32 0.0, %v2868
        %v2870 = vpop.f32.mrf.mxu0
        %v2871 = vadd.f32 0.0, %v2870
        %2872 = vmatmul.bf16.gmra.mxu0 %v1958
        %v2873 = vpop.f32.mrf.mxu0
        %v2874 = vadd.f32 0.0, %v2873
        %v2875 = vpop.f32.mrf.mxu0
        %v2876 = vadd.f32 0.0, %v2875
        %2877 = vmatmul.bf16.gmra.mxu0 %v1961
        %v2878 = vpop.f32.mrf.mxu0
        %v2879 = vadd.f32 0.0, %v2878
        %v2880 = vpop.f32.mrf.mxu0
        %v2881 = vadd.f32 0.0, %v2880
        %2882 = vmatmul.bf16.gmra.mxu0 %v1964
        %v2883 = vpop.f32.mrf.mxu0
        %v2884 = vadd.f32 0.0, %v2883
        %v2885 = vpop.f32.mrf.mxu0
        %v2886 = vadd.f32 0.0, %v2885
        %2887 = vmatmul.bf16.gmra.mxu0 %v2393
        %v2888 = vpop.f32.mrf.mxu0
        %v2889 = vadd.f32 0.0, %v2888
        %v2890 = vpop.f32.mrf.mxu0
        %v2891 = vadd.f32 0.0, %v2890
        %2892 = vmatmul.bf16.gmra.mxu0 %v2804
        %v2893 = vpop.f32.mrf.mxu0
        %v2894 = vadd.f32 0.0, %v2893
        %v2895 = vpop.f32.mrf.mxu0
        %v2896 = vadd.f32 0.0, %v2895
        %2897 = vdwg.mxu0
        %v2898 = vadd.f32 %v2757, %v2819
        %v2899 = vadd.f32 %v2758, %v2821
        %v2900 = vadd.f32 %v2759, %v2824
        %v2901 = vadd.f32 %v2760, %v2826
        %v2902 = vadd.f32 %v2761, %v2829
        %v2903 = vadd.f32 %v2762, %v2831
        %v2904 = vadd.f32 %v2763, %v2834
        %v2905 = vadd.f32 %v2764, %v2836
        %v2906 = vadd.f32 %v2765, %v2839
        %v2907 = vadd.f32 %v2766, %v2841
        %v2908 = vadd.f32 %v2767, %v2844
        %v2909 = vadd.f32 %v2768, %v2846
        %v2910 = vadd.f32 %v2769, %v2849
        %v2911 = vadd.f32 %v2770, %v2851
        %v2912 = vadd.f32 %v2771, %v2854
        %v2913 = vadd.f32 %v2772, %v2856
        %v2914 = vadd.f32 %v2773, %v2859
        %v2915 = vadd.f32 %v2774, %v2861
        %v2916 = vadd.f32 %v2775, %v2864
        %v2917 = vadd.f32 %v2776, %v2866
        %v2918 = vadd.f32 %v2777, %v2869
        %v2919 = vadd.f32 %v2778, %v2871
        %v2920 = vadd.f32 %v2779, %v2874
        %v2921 = vadd.f32 %v2780, %v2876
        %v2922 = vadd.f32 %v2781, %v2879
        %v2923 = vadd.f32 %v2782, %v2881
        %v2924 = vadd.f32 %v2783, %v2884
        %v2925 = vadd.f32 %v2784, %v2886
        %v2926 = vadd.f32 %v2785, %v2889
        %v2927 = vadd.f32 %v2786, %v2891
        %v2928 = vadd.f32 %v2787, %v2894
        %v2929 = vadd.f32 %v2788, %v2896
        %v2930 = vpack.c.bf16 %v1575, %v1574
        %s2931 = scalar_lea.vmem %s4, 28
        %v2932 = vld [vmem:[%s2931] sm:$0x7]
        %v2933 = vpack.c.bf16 %v2932, %v2932
        %v2935 = vsel %vm1399, %v2930, 0
        %v2938 = vand.u32 %v2933, %v1825
        %2940 = vmatpush.bf16.msra.mxu0 0
        %2941 = vmatpush.bf16.msra.mxu0 0
        %2942 = vmatpush.bf16.msra.mxu0 0
        %2943 = vmatpush.bf16.msra.mxu0 0
        %2944 = vmatpush.bf16.msra.mxu0 0
        %2945 = vmatpush.bf16.msra.mxu0 0
        %2946 = vmatpush.bf16.msra.mxu0 0
        %2947 = vmatpush.bf16.msra.mxu0 %v2938
        %2948 = vmatmul.bf16.gmra.mxu0 %v1782
        %v2949 = vpop.f32.mrf.mxu0
        %v2950 = vadd.f32 0.0, %v2949
        %v2951 = vpop.f32.mrf.mxu0
        %v2952 = vadd.f32 0.0, %v2951
        %2953 = vmatmul.bf16.gmra.mxu0 %v1785
        %v2954 = vpop.f32.mrf.mxu0
        %v2955 = vadd.f32 0.0, %v2954
        %v2956 = vpop.f32.mrf.mxu0
        %v2957 = vadd.f32 0.0, %v2956
        %2958 = vmatmul.bf16.gmra.mxu0 %v1788
        %v2959 = vpop.f32.mrf.mxu0
        %v2960 = vadd.f32 0.0, %v2959
        %v2961 = vpop.f32.mrf.mxu0
        %v2962 = vadd.f32 0.0, %v2961
        %2963 = vmatmul.bf16.gmra.mxu0 %v1791
        %v2964 = vpop.f32.mrf.mxu0
        %v2965 = vadd.f32 0.0, %v2964
        %v2966 = vpop.f32.mrf.mxu0
        %v2967 = vadd.f32 0.0, %v2966
        %2968 = vmatmul.bf16.gmra.mxu0 %v1794
        %v2969 = vpop.f32.mrf.mxu0
        %v2970 = vadd.f32 0.0, %v2969
        %v2971 = vpop.f32.mrf.mxu0
        %v2972 = vadd.f32 0.0, %v2971
        %2973 = vmatmul.bf16.gmra.mxu0 %v1797
        %v2974 = vpop.f32.mrf.mxu0
        %v2975 = vadd.f32 0.0, %v2974
        %v2976 = vpop.f32.mrf.mxu0
        %v2977 = vadd.f32 0.0, %v2976
        %2978 = vmatmul.bf16.gmra.mxu0 %v1800
        %v2979 = vpop.f32.mrf.mxu0
        %v2980 = vadd.f32 0.0, %v2979
        %v2981 = vpop.f32.mrf.mxu0
        %v2982 = vadd.f32 0.0, %v2981
        %2983 = vmatmul.bf16.gmra.mxu0 %v1803
        %v2984 = vpop.f32.mrf.mxu0
        %v2985 = vadd.f32 0.0, %v2984
        %v2986 = vpop.f32.mrf.mxu0
        %v2987 = vadd.f32 0.0, %v2986
        %2988 = vmatmul.bf16.gmra.mxu0 %v1806
        %v2989 = vpop.f32.mrf.mxu0
        %v2990 = vadd.f32 0.0, %v2989
        %v2991 = vpop.f32.mrf.mxu0
        %v2992 = vadd.f32 0.0, %v2991
        %2993 = vmatmul.bf16.gmra.mxu0 %v1809
        %v2994 = vpop.f32.mrf.mxu0
        %v2995 = vadd.f32 0.0, %v2994
        %v2996 = vpop.f32.mrf.mxu0
        %v2997 = vadd.f32 0.0, %v2996
        %2998 = vmatmul.bf16.gmra.mxu0 %v1812
        %v2999 = vpop.f32.mrf.mxu0
        %v3000 = vadd.f32 0.0, %v2999
        %v3001 = vpop.f32.mrf.mxu0
        %v3002 = vadd.f32 0.0, %v3001
        %3003 = vmatmul.bf16.gmra.mxu0 %v1815
        %v3004 = vpop.f32.mrf.mxu0
        %v3005 = vadd.f32 0.0, %v3004
        %v3006 = vpop.f32.mrf.mxu0
        %v3007 = vadd.f32 0.0, %v3006
        %3008 = vmatmul.bf16.gmra.mxu0 %v1818
        %v3009 = vpop.f32.mrf.mxu0
        %v3010 = vadd.f32 0.0, %v3009
        %v3011 = vpop.f32.mrf.mxu0
        %v3012 = vadd.f32 0.0, %v3011
        %3013 = vmatmul.bf16.gmra.mxu0 %v1821
        %v3014 = vpop.f32.mrf.mxu0
        %v3015 = vadd.f32 0.0, %v3014
        %v3016 = vpop.f32.mrf.mxu0
        %v3017 = vadd.f32 0.0, %v3016
        %3018 = vmatmul.bf16.gmra.mxu0 %v2524
        %v3019 = vpop.f32.mrf.mxu0
        %v3020 = vadd.f32 0.0, %v3019
        %v3021 = vpop.f32.mrf.mxu0
        %v3022 = vadd.f32 0.0, %v3021
        %3023 = vmatmul.bf16.gmra.mxu0 %v2935
        %v3024 = vpop.f32.mrf.mxu0
        %v3025 = vadd.f32 0.0, %v3024
        %v3026 = vpop.f32.mrf.mxu0
        %v3027 = vadd.f32 0.0, %v3026
        %3028 = vdwg.mxu0
        %v3029 = vadd.f32 %v2898, %v2950
        %v3030 = vadd.f32 %v2899, %v2952
        %v3031 = vadd.f32 %v2900, %v2955
        %v3032 = vadd.f32 %v2901, %v2957
        %v3033 = vadd.f32 %v2902, %v2960
        %v3034 = vadd.f32 %v2903, %v2962
        %v3035 = vadd.f32 %v2904, %v2965
        %v3036 = vadd.f32 %v2905, %v2967
        %v3037 = vadd.f32 %v2906, %v2970
        %v3038 = vadd.f32 %v2907, %v2972
        %v3039 = vadd.f32 %v2908, %v2975
        %v3040 = vadd.f32 %v2909, %v2977
        %v3041 = vadd.f32 %v2910, %v2980
        %v3042 = vadd.f32 %v2911, %v2982
        %v3043 = vadd.f32 %v2912, %v2985
        %v3044 = vadd.f32 %v2913, %v2987
        %v3045 = vadd.f32 %v2914, %v2990
        %v3046 = vadd.f32 %v2915, %v2992
        %v3047 = vadd.f32 %v2916, %v2995
        %v3048 = vadd.f32 %v2917, %v2997
        %v3049 = vadd.f32 %v2918, %v3000
        %v3050 = vadd.f32 %v2919, %v3002
        %v3051 = vadd.f32 %v2920, %v3005
        %v3052 = vadd.f32 %v2921, %v3007
        %v3053 = vadd.f32 %v2922, %v3010
        %v3054 = vadd.f32 %v2923, %v3012
        %v3055 = vadd.f32 %v2924, %v3015
        %v3056 = vadd.f32 %v2925, %v3017
        %v3057 = vadd.f32 %v2926, %v3020
        %v3058 = vadd.f32 %v2927, %v3022
        %v3059 = vadd.f32 %v2928, %v3025
        %v3060 = vadd.f32 %v2929, %v3027
        %v3062 = vrot.slane %v1574, 1
        %v3063 = vrot.slane %v1575, 1
        %v3064 = vsel %vm2074, %v3062, %v3063
        %v3065 = vrot.slane %v1576, 1
        %v3066 = vsel %vm2074, %v3063, %v3065
        %v3069 = vpack.c.bf16 %v3066, %v3064
        %s3070 = scalar_lea.vmem %s4, 32
        %v3071 = vld [vmem:[%s3070] sm:$0x7]
        %v3072 = vpack.c.bf16 %v3071, %v3071
        %v3074 = vsel %vm1399, %v3069, 0
        %v3077 = vand.u32 %v3072, %v1825
        %3079 = vmatpush.bf16.msra.mxu0 0
        %3080 = vmatpush.bf16.msra.mxu0 0
        %3081 = vmatpush.bf16.msra.mxu0 0
        %3082 = vmatpush.bf16.msra.mxu0 0
        %3083 = vmatpush.bf16.msra.mxu0 0
        %3084 = vmatpush.bf16.msra.mxu0 0
        %3085 = vmatpush.bf16.msra.mxu0 0
        %3086 = vmatpush.bf16.msra.mxu0 %v3077
        %3087 = vmatmul.bf16.gmra.mxu0 %v2213
        %v3088 = vpop.f32.mrf.mxu0
        %v3089 = vadd.f32 0.0, %v3088
        %v3090 = vpop.f32.mrf.mxu0
        %v3091 = vadd.f32 0.0, %v3090
        %3092 = vmatmul.bf16.gmra.mxu0 %v2216
        %v3093 = vpop.f32.mrf.mxu0
        %v3094 = vadd.f32 0.0, %v3093
        %v3095 = vpop.f32.mrf.mxu0
        %v3096 = vadd.f32 0.0, %v3095
        %3097 = vmatmul.bf16.gmra.mxu0 %v2219
        %v3098 = vpop.f32.mrf.mxu0
        %v3099 = vadd.f32 0.0, %v3098
        %v3100 = vpop.f32.mrf.mxu0
        %v3101 = vadd.f32 0.0, %v3100
        %3102 = vmatmul.bf16.gmra.mxu0 %v2222
        %v3103 = vpop.f32.mrf.mxu0
        %v3104 = vadd.f32 0.0, %v3103
        %v3105 = vpop.f32.mrf.mxu0
        %v3106 = vadd.f32 0.0, %v3105
        %3107 = vmatmul.bf16.gmra.mxu0 %v2225
        %v3108 = vpop.f32.mrf.mxu0
        %v3109 = vadd.f32 0.0, %v3108
        %v3110 = vpop.f32.mrf.mxu0
        %v3111 = vadd.f32 0.0, %v3110
        %3112 = vmatmul.bf16.gmra.mxu0 %v2228
        %v3113 = vpop.f32.mrf.mxu0
        %v3114 = vadd.f32 0.0, %v3113
        %v3115 = vpop.f32.mrf.mxu0
        %v3116 = vadd.f32 0.0, %v3115
        %3117 = vmatmul.bf16.gmra.mxu0 %v2231
        %v3118 = vpop.f32.mrf.mxu0
        %v3119 = vadd.f32 0.0, %v3118
        %v3120 = vpop.f32.mrf.mxu0
        %v3121 = vadd.f32 0.0, %v3120
        %3122 = vmatmul.bf16.gmra.mxu0 %v2234
        %v3123 = vpop.f32.mrf.mxu0
        %v3124 = vadd.f32 0.0, %v3123
        %v3125 = vpop.f32.mrf.mxu0
        %v3126 = vadd.f32 0.0, %v3125
        %3127 = vmatmul.bf16.gmra.mxu0 %v2237
        %v3128 = vpop.f32.mrf.mxu0
        %v3129 = vadd.f32 0.0, %v3128
        %v3130 = vpop.f32.mrf.mxu0
        %v3131 = vadd.f32 0.0, %v3130
        %3132 = vmatmul.bf16.gmra.mxu0 %v2240
        %v3133 = vpop.f32.mrf.mxu0
        %v3134 = vadd.f32 0.0, %v3133
        %v3135 = vpop.f32.mrf.mxu0
        %v3136 = vadd.f32 0.0, %v3135
        %3137 = vmatmul.bf16.gmra.mxu0 %v2243
        %v3138 = vpop.f32.mrf.mxu0
        %v3139 = vadd.f32 0.0, %v3138
        %v3140 = vpop.f32.mrf.mxu0
        %v3141 = vadd.f32 0.0, %v3140
        %3142 = vmatmul.bf16.gmra.mxu0 %v2246
        %v3143 = vpop.f32.mrf.mxu0
        %v3144 = vadd.f32 0.0, %v3143
        %v3145 = vpop.f32.mrf.mxu0
        %v3146 = vadd.f32 0.0, %v3145
        %3147 = vmatmul.bf16.gmra.mxu0 %v2249
        %v3148 = vpop.f32.mrf.mxu0
        %v3149 = vadd.f32 0.0, %v3148
        %v3150 = vpop.f32.mrf.mxu0
        %v3151 = vadd.f32 0.0, %v3150
        %3152 = vmatmul.bf16.gmra.mxu0 %v2252
        %v3153 = vpop.f32.mrf.mxu0
        %v3154 = vadd.f32 0.0, %v3153
        %v3155 = vpop.f32.mrf.mxu0
        %v3156 = vadd.f32 0.0, %v3155
        %3157 = vmatmul.bf16.gmra.mxu0 %v2663
        %v3158 = vpop.f32.mrf.mxu0
        %v3159 = vadd.f32 0.0, %v3158
        %v3160 = vpop.f32.mrf.mxu0
        %v3161 = vadd.f32 0.0, %v3160
        %3162 = vmatmul.bf16.gmra.mxu0 %v3074
        %v3163 = vpop.f32.mrf.mxu0
        %v3164 = vadd.f32 0.0, %v3163
        %v3165 = vpop.f32.mrf.mxu0
        %v3166 = vadd.f32 0.0, %v3165
        %3167 = vdwg.mxu0
        %v3168 = vadd.f32 %v3029, %v3089
        %v3169 = vadd.f32 %v3030, %v3091
        %v3170 = vadd.f32 %v3031, %v3094
        %v3171 = vadd.f32 %v3032, %v3096
        %v3172 = vadd.f32 %v3033, %v3099
        %v3173 = vadd.f32 %v3034, %v3101
        %v3174 = vadd.f32 %v3035, %v3104
        %v3175 = vadd.f32 %v3036, %v3106
        %v3176 = vadd.f32 %v3037, %v3109
        %v3177 = vadd.f32 %v3038, %v3111
        %v3178 = vadd.f32 %v3039, %v3114
        %v3179 = vadd.f32 %v3040, %v3116
        %v3180 = vadd.f32 %v3041, %v3119
        %v3181 = vadd.f32 %v3042, %v3121
        %v3182 = vadd.f32 %v3043, %v3124
        %v3183 = vadd.f32 %v3044, %v3126
        %v3184 = vadd.f32 %v3045, %v3129
        %v3185 = vadd.f32 %v3046, %v3131
        %v3186 = vadd.f32 %v3047, %v3134
        %v3187 = vadd.f32 %v3048, %v3136
        %v3188 = vadd.f32 %v3049, %v3139
        %v3189 = vadd.f32 %v3050, %v3141
        %v3190 = vadd.f32 %v3051, %v3144
        %v3191 = vadd.f32 %v3052, %v3146
        %v3192 = vadd.f32 %v3053, %v3149
        %v3193 = vadd.f32 %v3054, %v3151
        %v3194 = vadd.f32 %v3055, %v3154
        %v3195 = vadd.f32 %v3056, %v3156
        %v3196 = vadd.f32 %v3057, %v3159
        %v3197 = vadd.f32 %v3058, %v3161
        %v3198 = vadd.f32 %v3059, %v3164
        %v3199 = vadd.f32 %v3060, %v3166
        %v3200 = vld [vmem:[%s5] sm:$0x1]
        %v3202 = vperm.slane %v3200, 0
        %v3204 = vadd.f32 %v3168, %v3202
        %v3205 = vadd.f32 %v3169, %v3202
        %v3206 = vadd.f32 %v3170, %v3202
        %v3207 = vadd.f32 %v3171, %v3202
        %v3208 = vadd.f32 %v3172, %v3202
        %v3209 = vadd.f32 %v3173, %v3202
        %v3210 = vadd.f32 %v3174, %v3202
        %v3211 = vadd.f32 %v3175, %v3202
        %v3212 = vadd.f32 %v3176, %v3202
        %v3213 = vadd.f32 %v3177, %v3202
        %v3214 = vadd.f32 %v3178, %v3202
        %v3215 = vadd.f32 %v3179, %v3202
        %v3216 = vadd.f32 %v3180, %v3202
        %v3217 = vadd.f32 %v3181, %v3202
        %v3218 = vadd.f32 %v3182, %v3202
        %v3219 = vadd.f32 %v3183, %v3202
        %v3220 = vadd.f32 %v3184, %v3202
        %v3221 = vadd.f32 %v3185, %v3202
        %v3222 = vadd.f32 %v3186, %v3202
        %v3223 = vadd.f32 %v3187, %v3202
        %v3224 = vadd.f32 %v3188, %v3202
        %v3225 = vadd.f32 %v3189, %v3202
        %v3226 = vadd.f32 %v3190, %v3202
        %v3227 = vadd.f32 %v3191, %v3202
        %v3228 = vadd.f32 %v3192, %v3202
        %v3229 = vadd.f32 %v3193, %v3202
        %v3230 = vadd.f32 %v3194, %v3202
        %v3231 = vadd.f32 %v3195, %v3202
        %v3232 = vadd.f32 %v3196, %v3202
        %v3233 = vadd.f32 %v3197, %v3202
        %v3234 = vadd.f32 %v3198, %v3202
        %v3235 = vadd.f32 %v3199, %v3202
        %v3236 = vmax.f32 %v3204, 0.0
        %v3237 = vmax.f32 %v3205, 0.0
        %v3238 = vmax.f32 %v3206, 0.0
        %v3239 = vmax.f32 %v3207, 0.0
        %v3240 = vmax.f32 %v3208, 0.0
        %v3241 = vmax.f32 %v3209, 0.0
        %v3242 = vmax.f32 %v3210, 0.0
        %v3243 = vmax.f32 %v3211, 0.0
        %v3244 = vmax.f32 %v3212, 0.0
        %v3245 = vmax.f32 %v3213, 0.0
        %v3246 = vmax.f32 %v3214, 0.0
        %v3247 = vmax.f32 %v3215, 0.0
        %v3248 = vmax.f32 %v3216, 0.0
        %v3249 = vmax.f32 %v3217, 0.0
        %v3250 = vmax.f32 %v3218, 0.0
        %v3251 = vmax.f32 %v3219, 0.0
        %v3252 = vmax.f32 %v3220, 0.0
        %v3253 = vmax.f32 %v3221, 0.0
        %v3254 = vmax.f32 %v3222, 0.0
        %v3255 = vmax.f32 %v3223, 0.0
        %v3256 = vmax.f32 %v3224, 0.0
        %v3257 = vmax.f32 %v3225, 0.0
        %v3258 = vmax.f32 %v3226, 0.0
        %v3259 = vmax.f32 %v3227, 0.0
        %v3260 = vmax.f32 %v3228, 0.0
        %v3261 = vmax.f32 %v3229, 0.0
        %v3262 = vmax.f32 %v3230, 0.0
        %v3263 = vmax.f32 %v3231, 0.0
        %v3264 = vmax.f32 %v3232, 0.0
        %v3265 = vmax.f32 %v3233, 0.0
        %v3266 = vmax.f32 %v3234, 0.0
        %v3267 = vmax.f32 %v3235, 0.0
        %vm3268 = vcmask 261120
        %3269 = vst.msk [vmem:[#allocation3] sm:$0xff] %vm3268, 0.0
        %3270 = vst.msk [vmem:[#allocation3 + $0x8] sm:$0xff] %vm3268, 0.0
        %3271 = vst.msk [vmem:[#allocation3 + $0x10] sm:$0xff] %vm3268, 0.0
        %3272 = vst.msk [vmem:[#allocation3 + $0x18] sm:$0xff] %vm3268, 0.0
        %3273 = vst.msk [vmem:[#allocation3 + $0x20] sm:$0xff] %vm3268, 0.0
        %3274 = vst.msk [vmem:[#allocation3 + $0x28] sm:$0xff] %vm3268, 0.0
        %3275 = vst.msk [vmem:[#allocation3 + $0x30] sm:$0xff] %vm3268, 0.0
        %3276 = vst.msk [vmem:[#allocation3 + $0x38] sm:$0xff] %vm3268, 0.0
        %3277 = vst.msk [vmem:[#allocation3 + $0x40] sm:$0xff] %vm3268, 0.0
        %3278 = vst.msk [vmem:[#allocation3 + $0x48] sm:$0xff] %vm3268, 0.0
        %3279 = vst.msk [vmem:[#allocation3 + $0x50] sm:$0xff] %vm3268, 0.0
        %3280 = vst.msk [vmem:[#allocation3 + $0x58] sm:$0xff] %vm3268, 0.0
        %3281 = vst.msk [vmem:[#allocation3 + $0x60] sm:$0xff] %vm3268, 0.0
        %3282 = vst.msk [vmem:[#allocation3 + $0x68] sm:$0xff] %vm3268, 0.0
        %3283 = vst.msk [vmem:[#allocation3 + $0x70] sm:$0xff] %vm3268, 0.0
        %3284 = vst.msk [vmem:[#allocation3 + $0x78] sm:$0xff] %vm3268, 0.0
        %3285 = vst.msk [vmem:[#allocation3 + $0x80] sm:$0xff] %vm3268, 0.0
        %3286 = vst.msk [vmem:[#allocation3 + $0x88] sm:$0xff] %vm3268, 0.0
        %3287 = vst.msk [vmem:[#allocation3 + $0x90] sm:$0xff] %vm3268, 0.0
        %3288 = vst.msk [vmem:[#allocation3 + $0x98] sm:$0xff] %vm3268, 0.0
        %3289 = vst.msk [vmem:[#allocation3 + $0xa0] sm:$0xff] %vm3268, 0.0
        %3290 = vst.msk [vmem:[#allocation3 + $0xa8] sm:$0xff] %vm3268, 0.0
        %3291 = vst.msk [vmem:[#allocation3 + $0xb0] sm:$0xff] %vm3268, 0.0
        %3292 = vst.msk [vmem:[#allocation3 + $0xb8] sm:$0xff] %vm3268, 0.0
        %3293 = vst.msk [vmem:[#allocation3 + $0xc0] sm:$0xff] %vm3268, 0.0
        %3294 = vst.msk [vmem:[#allocation3 + $0xc8] sm:$0xff] %vm3268, 0.0
        %3295 = vst.msk [vmem:[#allocation3 + $0xd0] sm:$0xff] %vm3268, 0.0
        %3296 = vst.msk [vmem:[#allocation3 + $0xd8] sm:$0xff] %vm3268, 0.0
        %3297 = vst.msk [vmem:[#allocation3 + $0xe0] sm:$0xff] %vm3268, 0.0
        %3298 = vst.msk [vmem:[#allocation3 + $0xe8] sm:$0xff] %vm3268, 0.0
        %3299 = vst.msk [vmem:[#allocation3 + $0xf0] sm:$0xff] %vm3268, 0.0
        %3300 = vst.msk [vmem:[#allocation3 + $0xf8] sm:$0xff] %vm3268, 0.0
        %3301 = vst.msk [vmem:[#allocation3 + $0x100] sm:$0xff] %vm3268, 0.0
        %3302 = vst.msk [vmem:[#allocation3 + $0x108] sm:$0xff] %vm3268, 0.0
        %3303 = vst.msk [vmem:[#allocation3 + $0x110] sm:$0xff] %vm3268, 0.0
        %3304 = vst.msk [vmem:[#allocation3 + $0x118] sm:$0xff] %vm3268, 0.0
        %3305 = vst.msk [vmem:[#allocation3 + $0x120] sm:$0xff] %vm3268, 0.0
        %3306 = vst.msk [vmem:[#allocation3 + $0x128] sm:$0xff] %vm3268, 0.0
        %3307 = vst.msk [vmem:[#allocation3 + $0x130] sm:$0xff] %vm3268, 0.0
        %3308 = vst.msk [vmem:[#allocation3 + $0x138] sm:$0xff] %vm3268, 0.0
        %3309 = vst.msk [vmem:[#allocation3 + $0x140] sm:$0xff] %vm3268, 0.0
        %3310 = vst.msk [vmem:[#allocation3 + $0x148] sm:$0xff] %vm3268, 0.0
        %3311 = vst.msk [vmem:[#allocation3 + $0x150] sm:$0xff] %vm3268, 0.0
        %3312 = vst.msk [vmem:[#allocation3 + $0x158] sm:$0xff] %vm3268, 0.0
        %3313 = vst.msk [vmem:[#allocation3 + $0x160] sm:$0xff] %vm3268, 0.0
        %3314 = vst.msk [vmem:[#allocation3 + $0x168] sm:$0xff] %vm3268, 0.0
        %3315 = vst.msk [vmem:[#allocation3 + $0x170] sm:$0xff] %vm3268, 0.0
        %3316 = vst.msk [vmem:[#allocation3 + $0x178] sm:$0xff] %vm3268, 0.0
        %3317 = vst.msk [vmem:[#allocation3 + $0x180] sm:$0xff] %vm3268, 0.0
        %3318 = vst.msk [vmem:[#allocation3 + $0x188] sm:$0xff] %vm3268, 0.0
        %3319 = vst.msk [vmem:[#allocation3 + $0x190] sm:$0xff] %vm3268, 0.0
        %3320 = vst.msk [vmem:[#allocation3 + $0x198] sm:$0xff] %vm3268, 0.0
        %3321 = vst.msk [vmem:[#allocation3 + $0x1a0] sm:$0xff] %vm3268, 0.0
        %3322 = vst.msk [vmem:[#allocation3 + $0x1a8] sm:$0xff] %vm3268, 0.0
        %3323 = vst.msk [vmem:[#allocation3 + $0x1b0] sm:$0xff] %vm3268, 0.0
        %3324 = vst.msk [vmem:[#allocation3 + $0x1b8] sm:$0xff] %vm3268, 0.0
        %3325 = vst.msk [vmem:[#allocation3 + $0x1c0] sm:$0xff] %vm3268, 0.0
        %3326 = vst.msk [vmem:[#allocation3 + $0x1c8] sm:$0xff] %vm3268, 0.0
        %3327 = vst.msk [vmem:[#allocation3 + $0x1d0] sm:$0xff] %vm3268, 0.0
        %3328 = vst.msk [vmem:[#allocation3 + $0x1d8] sm:$0xff] %vm3268, 0.0
        %3329 = vst.msk [vmem:[#allocation3 + $0x1e0] sm:$0xff] %vm3268, 0.0
        %3330 = vst.msk [vmem:[#allocation3 + $0x1e8] sm:$0xff] %vm3268, 0.0
        %3331 = vst.msk [vmem:[#allocation3 + $0x1f0] sm:$0xff] %vm3268, 0.0
        %3332 = vst.msk [vmem:[#allocation3 + $0x1f8] sm:$0xff] %vm3268, 0.0
        %3333 = vst.msk [vmem:[#allocation3 + $0x200] sm:$0xff] %vm3268, 0.0
        %3334 = vst.msk [vmem:[#allocation3 + $0x208] sm:$0xff] %vm3268, 0.0
        %3335 = vst.msk [vmem:[#allocation3 + $0x210] sm:$0xff] %vm3268, 0.0
        %3336 = vst.msk [vmem:[#allocation3 + $0x218] sm:$0xff] %vm3268, 0.0
        %3337 = vst.msk [vmem:[#allocation3 + $0x220] sm:$0xff] %vm3268, 0.0
        %3338 = vst.msk [vmem:[#allocation3 + $0x228] sm:$0xff] %vm3268, 0.0
        %3339 = vst.msk [vmem:[#allocation3 + $0x230] sm:$0xff] %vm3268, 0.0
        %3340 = vst.msk [vmem:[#allocation3 + $0x238] sm:$0xff] %vm3268, 0.0
        %s3341 = scalar_lea.vmem [#allocation3], 32
        %3342 = vst.msk [vmem:[%s3341 + $0x8] sm:$0xff] %vm3268, %v3236
        %3343 = vst.msk [vmem:[%s3341 + $0x10] sm:$0xff] %vm3268, %v3237
        %3344 = vst.msk [vmem:[%s3341 + $0x28] sm:$0xff] %vm3268, %v3238
        %3345 = vst.msk [vmem:[%s3341 + $0x30] sm:$0xff] %vm3268, %v3239
        %3346 = vst.msk [vmem:[%s3341 + $0x48] sm:$0xff] %vm3268, %v3240
        %3347 = vst.msk [vmem:[%s3341 + $0x50] sm:$0xff] %vm3268, %v3241
        %3348 = vst.msk [vmem:[%s3341 + $0x68] sm:$0xff] %vm3268, %v3242
        %3349 = vst.msk [vmem:[%s3341 + $0x70] sm:$0xff] %vm3268, %v3243
        %3350 = vst.msk [vmem:[%s3341 + $0x88] sm:$0xff] %vm3268, %v3244
        %3351 = vst.msk [vmem:[%s3341 + $0x90] sm:$0xff] %vm3268, %v3245
        %3352 = vst.msk [vmem:[%s3341 + $0xa8] sm:$0xff] %vm3268, %v3246
        %3353 = vst.msk [vmem:[%s3341 + $0xb0] sm:$0xff] %vm3268, %v3247
        %3354 = vst.msk [vmem:[%s3341 + $0xc8] sm:$0xff] %vm3268, %v3248
        %3355 = vst.msk [vmem:[%s3341 + $0xd0] sm:$0xff] %vm3268, %v3249
        %3356 = vst.msk [vmem:[%s3341 + $0xe8] sm:$0xff] %vm3268, %v3250
        %3357 = vst.msk [vmem:[%s3341 + $0xf0] sm:$0xff] %vm3268, %v3251
        %3358 = vst.msk [vmem:[%s3341 + $0x108] sm:$0xff] %vm3268, %v3252
        %3359 = vst.msk [vmem:[%s3341 + $0x110] sm:$0xff] %vm3268, %v3253
        %3360 = vst.msk [vmem:[%s3341 + $0x128] sm:$0xff] %vm3268, %v3254
        %3361 = vst.msk [vmem:[%s3341 + $0x130] sm:$0xff] %vm3268, %v3255
        %3362 = vst.msk [vmem:[%s3341 + $0x148] sm:$0xff] %vm3268, %v3256
        %3363 = vst.msk [vmem:[%s3341 + $0x150] sm:$0xff] %vm3268, %v3257
        %3364 = vst.msk [vmem:[%s3341 + $0x168] sm:$0xff] %vm3268, %v3258
        %3365 = vst.msk [vmem:[%s3341 + $0x170] sm:$0xff] %vm3268, %v3259
        %3366 = vst.msk [vmem:[%s3341 + $0x188] sm:$0xff] %vm3268, %v3260
        %3367 = vst.msk [vmem:[%s3341 + $0x190] sm:$0xff] %vm3268, %v3261
        %3368 = vst.msk [vmem:[%s3341 + $0x1a8] sm:$0xff] %vm3268, %v3262
        %3369 = vst.msk [vmem:[%s3341 + $0x1b0] sm:$0xff] %vm3268, %v3263
        %3370 = vst.msk [vmem:[%s3341 + $0x1c8] sm:$0xff] %vm3268, %v3264
        %3371 = vst.msk [vmem:[%s3341 + $0x1d0] sm:$0xff] %vm3268, %v3265
        %3372 = vst.msk [vmem:[%s3341 + $0x1e8] sm:$0xff] %vm3268, %v3266
        %3373 = vst.msk [vmem:[%s3341 + $0x1f0] sm:$0xff] %vm3268, %v3267
        %v3374 = vld [vmem:[#allocation3] sm:$0xff]
        %v3375 = vld [vmem:[#allocation3 + $0x8] sm:$0xff]
        %v3376 = vld [vmem:[#allocation3 + $0x10] sm:$0xff]
        %v3377 = vld [vmem:[#allocation3 + $0x18] sm:$0xff]
        %v3378 = vld [vmem:[#allocation3 + $0x20] sm:$0xff]
        %v3379 = vld [vmem:[#allocation3 + $0x28] sm:$0xff]
        %v3380 = vld [vmem:[#allocation3 + $0x30] sm:$0xff]
        %v3381 = vld [vmem:[#allocation3 + $0x38] sm:$0xff]
        %v3382 = vld [vmem:[#allocation3 + $0x40] sm:$0xff]
        %v3383 = vld [vmem:[#allocation3 + $0x48] sm:$0xff]
        %v3384 = vld [vmem:[#allocation3 + $0x50] sm:$0xff]
        %v3385 = vld [vmem:[#allocation3 + $0x58] sm:$0xff]
        %v3386 = vld [vmem:[#allocation3 + $0x60] sm:$0xff]
        %v3387 = vld [vmem:[#allocation3 + $0x68] sm:$0xff]
        %v3388 = vld [vmem:[#allocation3 + $0x70] sm:$0xff]
        %v3389 = vld [vmem:[#allocation3 + $0x78] sm:$0xff]
        %v3390 = vld [vmem:[#allocation3 + $0x80] sm:$0xff]
        %v3391 = vld [vmem:[#allocation3 + $0x88] sm:$0xff]
        %v3392 = vld [vmem:[#allocation3 + $0x90] sm:$0xff]
        %v3393 = vld [vmem:[#allocation3 + $0x98] sm:$0xff]
        %v3394 = vld [vmem:[#allocation3 + $0xa0] sm:$0xff]
        %v3395 = vld [vmem:[#allocation3 + $0xa8] sm:$0xff]
        %v3396 = vld [vmem:[#allocation3 + $0xb0] sm:$0xff]
        %v3397 = vld [vmem:[#allocation3 + $0xb8] sm:$0xff]
        %v3398 = vld [vmem:[#allocation3 + $0xc0] sm:$0xff]
        %v3399 = vld [vmem:[#allocation3 + $0xc8] sm:$0xff]
        %v3400 = vld [vmem:[#allocation3 + $0xd0] sm:$0xff]
        %v3401 = vld [vmem:[#allocation3 + $0xd8] sm:$0xff]
        %v3402 = vld [vmem:[#allocation3 + $0xe0] sm:$0xff]
        %v3403 = vld [vmem:[#allocation3 + $0xe8] sm:$0xff]
        %v3404 = vld [vmem:[#allocation3 + $0xf0] sm:$0xff]
        %v3405 = vld [vmem:[#allocation3 + $0xf8] sm:$0xff]
        %v3406 = vld [vmem:[#allocation3 + $0x100] sm:$0xff]
        %v3407 = vld [vmem:[#allocation3 + $0x108] sm:$0xff]
        %v3408 = vld [vmem:[#allocation3 + $0x110] sm:$0xff]
        %v3409 = vld [vmem:[#allocation3 + $0x118] sm:$0xff]
        %v3410 = vld [vmem:[#allocation3 + $0x120] sm:$0xff]
        %v3411 = vld [vmem:[#allocation3 + $0x128] sm:$0xff]
        %v3412 = vld [vmem:[#allocation3 + $0x130] sm:$0xff]
        %v3413 = vld [vmem:[#allocation3 + $0x138] sm:$0xff]
        %v3414 = vld [vmem:[#allocation3 + $0x140] sm:$0xff]
        %v3415 = vld [vmem:[#allocation3 + $0x148] sm:$0xff]
        %v3416 = vld [vmem:[#allocation3 + $0x150] sm:$0xff]
        %v3417 = vld [vmem:[#allocation3 + $0x158] sm:$0xff]
        %v3418 = vld [vmem:[#allocation3 + $0x160] sm:$0xff]
        %v3419 = vld [vmem:[#allocation3 + $0x168] sm:$0xff]
        %v3420 = vld [vmem:[#allocation3 + $0x170] sm:$0xff]
        %v3421 = vld [vmem:[#allocation3 + $0x178] sm:$0xff]
        %v3422 = vld [vmem:[#allocation3 + $0x180] sm:$0xff]
        %v3423 = vld [vmem:[#allocation3 + $0x188] sm:$0xff]
        %v3424 = vld [vmem:[#allocation3 + $0x190] sm:$0xff]
        %v3425 = vld [vmem:[#allocation3 + $0x198] sm:$0xff]
        %v3426 = vld [vmem:[#allocation3 + $0x1a0] sm:$0xff]
        %v3427 = vld [vmem:[#allocation3 + $0x1a8] sm:$0xff]
        %v3428 = vld [vmem:[#allocation3 + $0x1b0] sm:$0xff]
        %v3429 = vld [vmem:[#allocation3 + $0x1b8] sm:$0xff]
        %v3430 = vld [vmem:[#allocation3 + $0x1c0] sm:$0xff]
        %v3431 = vld [vmem:[#allocation3 + $0x1c8] sm:$0xff]
        %v3432 = vld [vmem:[#allocation3 + $0x1d0] sm:$0xff]
        %v3433 = vld [vmem:[#allocation3 + $0x1d8] sm:$0xff]
        %v3434 = vld [vmem:[#allocation3 + $0x1e0] sm:$0xff]
        %v3435 = vld [vmem:[#allocation3 + $0x1e8] sm:$0xff]
        %v3436 = vld [vmem:[#allocation3 + $0x1f0] sm:$0xff]
        %v3437 = vld [vmem:[#allocation3 + $0x1f8] sm:$0xff]
        %v3438 = vld [vmem:[#allocation3 + $0x200] sm:$0xff]
        %v3439 = vld [vmem:[#allocation3 + $0x208] sm:$0xff]
        %v3440 = vld [vmem:[#allocation3 + $0x210] sm:$0xff]
        %v3441 = vld [vmem:[#allocation3 + $0x218] sm:$0xff]
        %v3442 = vld [vmem:[#allocation3 + $0x220] sm:$0xff]
        %v3443 = vld [vmem:[#allocation3 + $0x228] sm:$0xff]
        %v3444 = vld [vmem:[#allocation3 + $0x230] sm:$0xff]
        %v3445 = vld [vmem:[#allocation3 + $0x238] sm:$0xff]
        %v3494 = vrot.slane %v3374, 7
        %v3495 = vrot.slane %v3375, 7
        %v3496 = vsel %vm1625, %v3494, %v3495
        %v3497 = vrot.slane %v3376, 7
        %v3498 = vsel %vm1625, %v3495, %v3497
        %v3499 = vrot.slane %v3378, 7
        %v3500 = vrot.slane %v3379, 7
        %v3501 = vsel %vm1625, %v3499, %v3500
        %v3502 = vrot.slane %v3380, 7
        %v3503 = vsel %vm1625, %v3500, %v3502
        %v3504 = vrot.slane %v3382, 7
        %v3505 = vrot.slane %v3383, 7
        %v3506 = vsel %vm1625, %v3504, %v3505
        %v3507 = vrot.slane %v3384, 7
        %v3508 = vsel %vm1625, %v3505, %v3507
        %v3509 = vrot.slane %v3386, 7
        %v3510 = vrot.slane %v3387, 7
        %v3511 = vsel %vm1625, %v3509, %v3510
        %v3512 = vrot.slane %v3388, 7
        %v3513 = vsel %vm1625, %v3510, %v3512
        %v3514 = vrot.slane %v3390, 7
        %v3515 = vrot.slane %v3391, 7
        %v3516 = vsel %vm1625, %v3514, %v3515
        %v3517 = vrot.slane %v3392, 7
        %v3518 = vsel %vm1625, %v3515, %v3517
        %v3519 = vrot.slane %v3394, 7
        %v3520 = vrot.slane %v3395, 7
        %v3521 = vsel %vm1625, %v3519, %v3520
        %v3522 = vrot.slane %v3396, 7
        %v3523 = vsel %vm1625, %v3520, %v3522
        %v3524 = vrot.slane %v3398, 7
        %v3525 = vrot.slane %v3399, 7
        %v3526 = vsel %vm1625, %v3524, %v3525
        %v3527 = vrot.slane %v3400, 7
        %v3528 = vsel %vm1625, %v3525, %v3527
        %v3529 = vrot.slane %v3402, 7
        %v3530 = vrot.slane %v3403, 7
        %v3531 = vsel %vm1625, %v3529, %v3530
        %v3532 = vrot.slane %v3404, 7
        %v3533 = vsel %vm1625, %v3530, %v3532
        %v3534 = vrot.slane %v3406, 7
        %v3535 = vrot.slane %v3407, 7
        %v3536 = vsel %vm1625, %v3534, %v3535
        %v3537 = vrot.slane %v3408, 7
        %v3538 = vsel %vm1625, %v3535, %v3537
        %v3539 = vrot.slane %v3410, 7
        %v3540 = vrot.slane %v3411, 7
        %v3541 = vsel %vm1625, %v3539, %v3540
        %v3542 = vrot.slane %v3412, 7
        %v3543 = vsel %vm1625, %v3540, %v3542
        %v3544 = vrot.slane %v3414, 7
        %v3545 = vrot.slane %v3415, 7
        %v3546 = vsel %vm1625, %v3544, %v3545
        %v3547 = vrot.slane %v3416, 7
        %v3548 = vsel %vm1625, %v3545, %v3547
        %v3549 = vrot.slane %v3418, 7
        %v3550 = vrot.slane %v3419, 7
        %v3551 = vsel %vm1625, %v3549, %v3550
        %v3552 = vrot.slane %v3420, 7
        %v3553 = vsel %vm1625, %v3550, %v3552
        %v3554 = vrot.slane %v3422, 7
        %v3555 = vrot.slane %v3423, 7
        %v3556 = vsel %vm1625, %v3554, %v3555
        %v3557 = vrot.slane %v3424, 7
        %v3558 = vsel %vm1625, %v3555, %v3557
        %v3559 = vrot.slane %v3426, 7
        %v3560 = vrot.slane %v3427, 7
        %v3561 = vsel %vm1625, %v3559, %v3560
        %v3562 = vrot.slane %v3428, 7
        %v3563 = vsel %vm1625, %v3560, %v3562
        %v3564 = vrot.slane %v3430, 7
        %v3565 = vrot.slane %v3431, 7
        %v3566 = vsel %vm1625, %v3564, %v3565
        %v3567 = vrot.slane %v3432, 7
        %v3568 = vsel %vm1625, %v3565, %v3567
        %v3569 = vrot.slane %v3434, 7
        %v3570 = vrot.slane %v3435, 7
        %v3571 = vsel %vm1625, %v3569, %v3570
        %v3572 = vrot.slane %v3436, 7
        %v3573 = vsel %vm1625, %v3570, %v3572
        %v3606 = vpack.c.bf16 %v3498, %v3496
        %v3607 = vpack.c.bf16 %v3503, %v3501
        %v3608 = vpack.c.bf16 %v3508, %v3506
        %v3609 = vpack.c.bf16 %v3513, %v3511
        %v3610 = vpack.c.bf16 %v3518, %v3516
        %v3611 = vpack.c.bf16 %v3523, %v3521
        %v3612 = vpack.c.bf16 %v3528, %v3526
        %v3613 = vpack.c.bf16 %v3533, %v3531
        %v3614 = vpack.c.bf16 %v3538, %v3536
        %v3615 = vpack.c.bf16 %v3543, %v3541
        %v3616 = vpack.c.bf16 %v3548, %v3546
        %v3617 = vpack.c.bf16 %v3553, %v3551
        %v3618 = vpack.c.bf16 %v3558, %v3556
        %v3619 = vpack.c.bf16 %v3563, %v3561
        %v3620 = vpack.c.bf16 %v3568, %v3566
        %v3621 = vpack.c.bf16 %v3573, %v3571
        %v3622 = vld [vmem:[%s6] sm:$0xff]
        %v3623 = vld [vmem:[%s6 + $0x8] sm:$0xff]
        %v3624 = vld [vmem:[%s6 + $0x10] sm:$0xff]
        %v3625 = vld [vmem:[%s6 + $0x18] sm:$0xff]
        %v3626 = vpack.c.bf16 %v3623, %v3622
        %v3627 = vpack.c.bf16 %v3625, %v3624
        %v3628 = vpack.c.bf16 %v3376, %v3375
        %v3629 = vpack.c.bf16 %v3380, %v3379
        %v3630 = vpack.c.bf16 %v3384, %v3383
        %v3631 = vpack.c.bf16 %v3388, %v3387
        %v3632 = vpack.c.bf16 %v3392, %v3391
        %v3633 = vpack.c.bf16 %v3396, %v3395
        %v3634 = vpack.c.bf16 %v3400, %v3399
        %v3635 = vpack.c.bf16 %v3404, %v3403
        %v3636 = vpack.c.bf16 %v3408, %v3407
        %v3637 = vpack.c.bf16 %v3412, %v3411
        %v3638 = vpack.c.bf16 %v3416, %v3415
        %v3639 = vpack.c.bf16 %v3420, %v3419
        %v3640 = vpack.c.bf16 %v3424, %v3423
        %v3641 = vpack.c.bf16 %v3428, %v3427
        %v3642 = vpack.c.bf16 %v3432, %v3431
        %v3643 = vpack.c.bf16 %v3436, %v3435
        %s3644 = scalar_lea.vmem %s6, 32
        %v3645 = vld [vmem:[%s3644] sm:$0xff]
        %v3646 = vld [vmem:[%s3644 + $0x8] sm:$0xff]
        %v3647 = vld [vmem:[%s3644 + $0x10] sm:$0xff]
        %v3648 = vld [vmem:[%s3644 + $0x18] sm:$0xff]
        %v3649 = vpack.c.bf16 %v3646, %v3645
        %v3650 = vpack.c.bf16 %v3648, %v3647
        %v3652 = vsel %vm3268, %v3628, 0
        %v3655 = vsel %vm3268, %v3629, 0
        %v3658 = vsel %vm3268, %v3630, 0
        %v3661 = vsel %vm3268, %v3631, 0
        %v3664 = vsel %vm3268, %v3632, 0
        %v3667 = vsel %vm3268, %v3633, 0
        %v3670 = vsel %vm3268, %v3634, 0
        %v3673 = vsel %vm3268, %v3635, 0
        %v3676 = vsel %vm3268, %v3636, 0
        %v3679 = vsel %vm3268, %v3637, 0
        %v3682 = vsel %vm3268, %v3638, 0
        %v3685 = vsel %vm3268, %v3639, 0
        %v3688 = vsel %vm3268, %v3640, 0
        %v3691 = vsel %vm3268, %v3641, 0
        %v3694 = vsel %vm3268, %v3642, 0
        %v3697 = vsel %vm3268, %v3643, 0
        %3699 = vmatpush.bf16.msra.mxu0 0
        %3700 = vmatpush.bf16.msra.mxu0 0
        %3701 = vmatpush.bf16.msra.mxu0 0
        %3702 = vmatpush.bf16.msra.mxu0 0
        %3703 = vmatpush.bf16.msra.mxu0 0
        %3704 = vmatpush.bf16.msra.mxu0 0
        %3705 = vmatpush.bf16.msra.mxu0 %v3650
        %3706 = vmatpush.bf16.msra.mxu0 %v3649
        %3707 = vmatmul.bf16.gmra.mxu0 %v3652
        %v3708 = vpop.f32.mrf.mxu0
        %v3709 = vadd.f32 0.0, %v3708
        %v3710 = vpop.f32.mrf.mxu0
        %v3711 = vadd.f32 0.0, %v3710
        %3712 = vmatmul.bf16.gmra.mxu0 %v3655
        %v3713 = vpop.f32.mrf.mxu0
        %v3714 = vadd.f32 0.0, %v3713
        %v3715 = vpop.f32.mrf.mxu0
        %v3716 = vadd.f32 0.0, %v3715
        %3717 = vmatmul.bf16.gmra.mxu0 %v3658
        %v3718 = vpop.f32.mrf.mxu0
        %v3719 = vadd.f32 0.0, %v3718
        %v3720 = vpop.f32.mrf.mxu0
        %v3721 = vadd.f32 0.0, %v3720
        %3722 = vmatmul.bf16.gmra.mxu0 %v3661
        %v3723 = vpop.f32.mrf.mxu0
        %v3724 = vadd.f32 0.0, %v3723
        %v3725 = vpop.f32.mrf.mxu0
        %v3726 = vadd.f32 0.0, %v3725
        %3727 = vmatmul.bf16.gmra.mxu0 %v3664
        %v3728 = vpop.f32.mrf.mxu0
        %v3729 = vadd.f32 0.0, %v3728
        %v3730 = vpop.f32.mrf.mxu0
        %v3731 = vadd.f32 0.0, %v3730
        %3732 = vmatmul.bf16.gmra.mxu0 %v3667
        %v3733 = vpop.f32.mrf.mxu0
        %v3734 = vadd.f32 0.0, %v3733
        %v3735 = vpop.f32.mrf.mxu0
        %v3736 = vadd.f32 0.0, %v3735
        %3737 = vmatmul.bf16.gmra.mxu0 %v3670
        %v3738 = vpop.f32.mrf.mxu0
        %v3739 = vadd.f32 0.0, %v3738
        %v3740 = vpop.f32.mrf.mxu0
        %v3741 = vadd.f32 0.0, %v3740
        %3742 = vmatmul.bf16.gmra.mxu0 %v3673
        %v3743 = vpop.f32.mrf.mxu0
        %v3744 = vadd.f32 0.0, %v3743
        %v3745 = vpop.f32.mrf.mxu0
        %v3746 = vadd.f32 0.0, %v3745
        %3747 = vmatmul.bf16.gmra.mxu0 %v3676
        %v3748 = vpop.f32.mrf.mxu0
        %v3749 = vadd.f32 0.0, %v3748
        %v3750 = vpop.f32.mrf.mxu0
        %v3751 = vadd.f32 0.0, %v3750
        %3752 = vmatmul.bf16.gmra.mxu0 %v3679
        %v3753 = vpop.f32.mrf.mxu0
        %v3754 = vadd.f32 0.0, %v3753
        %v3755 = vpop.f32.mrf.mxu0
        %v3756 = vadd.f32 0.0, %v3755
        %3757 = vmatmul.bf16.gmra.mxu0 %v3682
        %v3758 = vpop.f32.mrf.mxu0
        %v3759 = vadd.f32 0.0, %v3758
        %v3760 = vpop.f32.mrf.mxu0
        %v3761 = vadd.f32 0.0, %v3760
        %3762 = vmatmul.bf16.gmra.mxu0 %v3685
        %v3763 = vpop.f32.mrf.mxu0
        %v3764 = vadd.f32 0.0, %v3763
        %v3765 = vpop.f32.mrf.mxu0
        %v3766 = vadd.f32 0.0, %v3765
        %3767 = vmatmul.bf16.gmra.mxu0 %v3688
        %v3768 = vpop.f32.mrf.mxu0
        %v3769 = vadd.f32 0.0, %v3768
        %v3770 = vpop.f32.mrf.mxu0
        %v3771 = vadd.f32 0.0, %v3770
        %3772 = vmatmul.bf16.gmra.mxu0 %v3691
        %v3773 = vpop.f32.mrf.mxu0
        %v3774 = vadd.f32 0.0, %v3773
        %v3775 = vpop.f32.mrf.mxu0
        %v3776 = vadd.f32 0.0, %v3775
        %3777 = vmatmul.bf16.gmra.mxu0 %v3694
        %v3778 = vpop.f32.mrf.mxu0
        %v3779 = vadd.f32 0.0, %v3778
        %v3780 = vpop.f32.mrf.mxu0
        %v3781 = vadd.f32 0.0, %v3780
        %3782 = vmatmul.bf16.gmra.mxu0 %v3697
        %v3783 = vpop.f32.mrf.mxu0
        %v3784 = vadd.f32 0.0, %v3783
        %v3785 = vpop.f32.mrf.mxu0
        %v3786 = vadd.f32 0.0, %v3785
        %3787 = vdwg.mxu0
        %v3789 = vsel %vm3268, %v3606, 0
        %v3792 = vsel %vm3268, %v3607, 0
        %v3795 = vsel %vm3268, %v3608, 0
        %v3798 = vsel %vm3268, %v3609, 0
        %v3801 = vsel %vm3268, %v3610, 0
        %v3804 = vsel %vm3268, %v3611, 0
        %v3807 = vsel %vm3268, %v3612, 0
        %v3810 = vsel %vm3268, %v3613, 0
        %v3813 = vsel %vm3268, %v3614, 0
        %v3816 = vsel %vm3268, %v3615, 0
        %v3819 = vsel %vm3268, %v3616, 0
        %v3822 = vsel %vm3268, %v3617, 0
        %v3825 = vsel %vm3268, %v3618, 0
        %v3828 = vsel %vm3268, %v3619, 0
        %v3831 = vsel %vm3268, %v3620, 0
        %v3834 = vsel %vm3268, %v3621, 0
        %3836 = vmatpush.bf16.msra.mxu0 0
        %3837 = vmatpush.bf16.msra.mxu0 0
        %3838 = vmatpush.bf16.msra.mxu0 0
        %3839 = vmatpush.bf16.msra.mxu0 0
        %3840 = vmatpush.bf16.msra.mxu0 0
        %3841 = vmatpush.bf16.msra.mxu0 0
        %3842 = vmatpush.bf16.msra.mxu0 %v3627
        %3843 = vmatpush.bf16.msra.mxu0 %v3626
        %3844 = vmatmul.bf16.gmra.mxu0 %v3789
        %v3845 = vpop.f32.mrf.mxu0
        %v3846 = vadd.f32 %v3709, %v3845
        %v3847 = vpop.f32.mrf.mxu0
        %v3848 = vadd.f32 %v3711, %v3847
        %3849 = vmatmul.bf16.gmra.mxu0 %v3792
        %v3850 = vpop.f32.mrf.mxu0
        %v3851 = vadd.f32 %v3714, %v3850
        %v3852 = vpop.f32.mrf.mxu0
        %v3853 = vadd.f32 %v3716, %v3852
        %3854 = vmatmul.bf16.gmra.mxu0 %v3795
        %v3855 = vpop.f32.mrf.mxu0
        %v3856 = vadd.f32 %v3719, %v3855
        %v3857 = vpop.f32.mrf.mxu0
        %v3858 = vadd.f32 %v3721, %v3857
        %3859 = vmatmul.bf16.gmra.mxu0 %v3798
        %v3860 = vpop.f32.mrf.mxu0
        %v3861 = vadd.f32 %v3724, %v3860
        %v3862 = vpop.f32.mrf.mxu0
        %v3863 = vadd.f32 %v3726, %v3862
        %3864 = vmatmul.bf16.gmra.mxu0 %v3801
        %v3865 = vpop.f32.mrf.mxu0
        %v3866 = vadd.f32 %v3729, %v3865
        %v3867 = vpop.f32.mrf.mxu0
        %v3868 = vadd.f32 %v3731, %v3867
        %3869 = vmatmul.bf16.gmra.mxu0 %v3804
        %v3870 = vpop.f32.mrf.mxu0
        %v3871 = vadd.f32 %v3734, %v3870
        %v3872 = vpop.f32.mrf.mxu0
        %v3873 = vadd.f32 %v3736, %v3872
        %3874 = vmatmul.bf16.gmra.mxu0 %v3807
        %v3875 = vpop.f32.mrf.mxu0
        %v3876 = vadd.f32 %v3739, %v3875
        %v3877 = vpop.f32.mrf.mxu0
        %v3878 = vadd.f32 %v3741, %v3877
        %3879 = vmatmul.bf16.gmra.mxu0 %v3810
        %v3880 = vpop.f32.mrf.mxu0
        %v3881 = vadd.f32 %v3744, %v3880
        %v3882 = vpop.f32.mrf.mxu0
        %v3883 = vadd.f32 %v3746, %v3882
        %3884 = vmatmul.bf16.gmra.mxu0 %v3813
        %v3885 = vpop.f32.mrf.mxu0
        %v3886 = vadd.f32 %v3749, %v3885
        %v3887 = vpop.f32.mrf.mxu0
        %v3888 = vadd.f32 %v3751, %v3887
        %3889 = vmatmul.bf16.gmra.mxu0 %v3816
        %v3890 = vpop.f32.mrf.mxu0
        %v3891 = vadd.f32 %v3754, %v3890
        %v3892 = vpop.f32.mrf.mxu0
        %v3893 = vadd.f32 %v3756, %v3892
        %3894 = vmatmul.bf16.gmra.mxu0 %v3819
        %v3895 = vpop.f32.mrf.mxu0
        %v3896 = vadd.f32 %v3759, %v3895
        %v3897 = vpop.f32.mrf.mxu0
        %v3898 = vadd.f32 %v3761, %v3897
        %3899 = vmatmul.bf16.gmra.mxu0 %v3822
        %v3900 = vpop.f32.mrf.mxu0
        %v3901 = vadd.f32 %v3764, %v3900
        %v3902 = vpop.f32.mrf.mxu0
        %v3903 = vadd.f32 %v3766, %v3902
        %3904 = vmatmul.bf16.gmra.mxu0 %v3825
        %v3905 = vpop.f32.mrf.mxu0
        %v3906 = vadd.f32 %v3769, %v3905
        %v3907 = vpop.f32.mrf.mxu0
        %v3908 = vadd.f32 %v3771, %v3907
        %3909 = vmatmul.bf16.gmra.mxu0 %v3828
        %v3910 = vpop.f32.mrf.mxu0
        %v3911 = vadd.f32 %v3774, %v3910
        %v3912 = vpop.f32.mrf.mxu0
        %v3913 = vadd.f32 %v3776, %v3912
        %3914 = vmatmul.bf16.gmra.mxu0 %v3831
        %v3915 = vpop.f32.mrf.mxu0
        %v3916 = vadd.f32 %v3779, %v3915
        %v3917 = vpop.f32.mrf.mxu0
        %v3918 = vadd.f32 %v3781, %v3917
        %3919 = vmatmul.bf16.gmra.mxu0 %v3834
        %v3920 = vpop.f32.mrf.mxu0
        %v3921 = vadd.f32 %v3784, %v3920
        %v3922 = vpop.f32.mrf.mxu0
        %v3923 = vadd.f32 %v3786, %v3922
        %3924 = vdwg.mxu0
        %v3941 = vrot.slane %v3375, 1
        %v3942 = vrot.slane %v3376, 1
        %v3943 = vsel %vm2074, %v3941, %v3942
        %v3944 = vrot.slane %v3377, 1
        %v3945 = vsel %vm2074, %v3942, %v3944
        %v3946 = vrot.slane %v3379, 1
        %v3947 = vrot.slane %v3380, 1
        %v3948 = vsel %vm2074, %v3946, %v3947
        %v3949 = vrot.slane %v3381, 1
        %v3950 = vsel %vm2074, %v3947, %v3949
        %v3951 = vrot.slane %v3383, 1
        %v3952 = vrot.slane %v3384, 1
        %v3953 = vsel %vm2074, %v3951, %v3952
        %v3954 = vrot.slane %v3385, 1
        %v3955 = vsel %vm2074, %v3952, %v3954
        %v3956 = vrot.slane %v3387, 1
        %v3957 = vrot.slane %v3388, 1
        %v3958 = vsel %vm2074, %v3956, %v3957
        %v3959 = vrot.slane %v3389, 1
        %v3960 = vsel %vm2074, %v3957, %v3959
        %v3961 = vrot.slane %v3391, 1
        %v3962 = vrot.slane %v3392, 1
        %v3963 = vsel %vm2074, %v3961, %v3962
        %v3964 = vrot.slane %v3393, 1
        %v3965 = vsel %vm2074, %v3962, %v3964
        %v3966 = vrot.slane %v3395, 1
        %v3967 = vrot.slane %v3396, 1
        %v3968 = vsel %vm2074, %v3966, %v3967
        %v3969 = vrot.slane %v3397, 1
        %v3970 = vsel %vm2074, %v3967, %v3969
        %v3971 = vrot.slane %v3399, 1
        %v3972 = vrot.slane %v3400, 1
        %v3973 = vsel %vm2074, %v3971, %v3972
        %v3974 = vrot.slane %v3401, 1
        %v3975 = vsel %vm2074, %v3972, %v3974
        %v3976 = vrot.slane %v3403, 1
        %v3977 = vrot.slane %v3404, 1
        %v3978 = vsel %vm2074, %v3976, %v3977
        %v3979 = vrot.slane %v3405, 1
        %v3980 = vsel %vm2074, %v3977, %v3979
        %v3981 = vrot.slane %v3407, 1
        %v3982 = vrot.slane %v3408, 1
        %v3983 = vsel %vm2074, %v3981, %v3982
        %v3984 = vrot.slane %v3409, 1
        %v3985 = vsel %vm2074, %v3982, %v3984
        %v3986 = vrot.slane %v3411, 1
        %v3987 = vrot.slane %v3412, 1
        %v3988 = vsel %vm2074, %v3986, %v3987
        %v3989 = vrot.slane %v3413, 1
        %v3990 = vsel %vm2074, %v3987, %v3989
        %v3991 = vrot.slane %v3415, 1
        %v3992 = vrot.slane %v3416, 1
        %v3993 = vsel %vm2074, %v3991, %v3992
        %v3994 = vrot.slane %v3417, 1
        %v3995 = vsel %vm2074, %v3992, %v3994
        %v3996 = vrot.slane %v3419, 1
        %v3997 = vrot.slane %v3420, 1
        %v3998 = vsel %vm2074, %v3996, %v3997
        %v3999 = vrot.slane %v3421, 1
        %v4000 = vsel %vm2074, %v3997, %v3999
        %v4001 = vrot.slane %v3423, 1
        %v4002 = vrot.slane %v3424, 1
        %v4003 = vsel %vm2074, %v4001, %v4002
        %v4004 = vrot.slane %v3425, 1
        %v4005 = vsel %vm2074, %v4002, %v4004
        %v4006 = vrot.slane %v3427, 1
        %v4007 = vrot.slane %v3428, 1
        %v4008 = vsel %vm2074, %v4006, %v4007
        %v4009 = vrot.slane %v3429, 1
        %v4010 = vsel %vm2074, %v4007, %v4009
        %v4011 = vrot.slane %v3431, 1
        %v4012 = vrot.slane %v3432, 1
        %v4013 = vsel %vm2074, %v4011, %v4012
        %v4014 = vrot.slane %v3433, 1
        %v4015 = vsel %vm2074, %v4012, %v4014
        %v4016 = vrot.slane %v3435, 1
        %v4017 = vrot.slane %v3436, 1
        %v4018 = vsel %vm2074, %v4016, %v4017
        %v4019 = vrot.slane %v3437, 1
        %v4020 = vsel %vm2074, %v4017, %v4019
        %v4053 = vpack.c.bf16 %v3945, %v3943
        %v4054 = vpack.c.bf16 %v3950, %v3948
        %v4055 = vpack.c.bf16 %v3955, %v3953
        %v4056 = vpack.c.bf16 %v3960, %v3958
        %v4057 = vpack.c.bf16 %v3965, %v3963
        %v4058 = vpack.c.bf16 %v3970, %v3968
        %v4059 = vpack.c.bf16 %v3975, %v3973
        %v4060 = vpack.c.bf16 %v3980, %v3978
        %v4061 = vpack.c.bf16 %v3985, %v3983
        %v4062 = vpack.c.bf16 %v3990, %v3988
        %v4063 = vpack.c.bf16 %v3995, %v3993
        %v4064 = vpack.c.bf16 %v4000, %v3998
        %v4065 = vpack.c.bf16 %v4005, %v4003
        %v4066 = vpack.c.bf16 %v4010, %v4008
        %v4067 = vpack.c.bf16 %v4015, %v4013
        %v4068 = vpack.c.bf16 %v4020, %v4018
        %s4069 = scalar_lea.vmem %s6, 64
        %v4070 = vld [vmem:[%s4069] sm:$0xff]
        %v4071 = vld [vmem:[%s4069 + $0x8] sm:$0xff]
        %v4072 = vld [vmem:[%s4069 + $0x10] sm:$0xff]
        %v4073 = vld [vmem:[%s4069 + $0x18] sm:$0xff]
        %v4074 = vpack.c.bf16 %v4071, %v4070
        %v4075 = vpack.c.bf16 %v4073, %v4072
        %v4077 = vsel %vm3268, %v4053, 0
        %v4080 = vsel %vm3268, %v4054, 0
        %v4083 = vsel %vm3268, %v4055, 0
        %v4086 = vsel %vm3268, %v4056, 0
        %v4089 = vsel %vm3268, %v4057, 0
        %v4092 = vsel %vm3268, %v4058, 0
        %v4095 = vsel %vm3268, %v4059, 0
        %v4098 = vsel %vm3268, %v4060, 0
        %v4101 = vsel %vm3268, %v4061, 0
        %v4104 = vsel %vm3268, %v4062, 0
        %v4107 = vsel %vm3268, %v4063, 0
        %v4110 = vsel %vm3268, %v4064, 0
        %v4113 = vsel %vm3268, %v4065, 0
        %v4116 = vsel %vm3268, %v4066, 0
        %v4119 = vsel %vm3268, %v4067, 0
        %v4122 = vsel %vm3268, %v4068, 0
        %4124 = vmatpush.bf16.msra.mxu0 0
        %4125 = vmatpush.bf16.msra.mxu0 0
        %4126 = vmatpush.bf16.msra.mxu0 0
        %4127 = vmatpush.bf16.msra.mxu0 0
        %4128 = vmatpush.bf16.msra.mxu0 0
        %4129 = vmatpush.bf16.msra.mxu0 0
        %4130 = vmatpush.bf16.msra.mxu0 %v4075
        %4131 = vmatpush.bf16.msra.mxu0 %v4074
        %4132 = vmatmul.bf16.gmra.mxu0 %v4077
        %v4133 = vpop.f32.mrf.mxu0
        %v4134 = vadd.f32 0.0, %v4133
        %v4135 = vpop.f32.mrf.mxu0
        %v4136 = vadd.f32 0.0, %v4135
        %4137 = vmatmul.bf16.gmra.mxu0 %v4080
        %v4138 = vpop.f32.mrf.mxu0
        %v4139 = vadd.f32 0.0, %v4138
        %v4140 = vpop.f32.mrf.mxu0
        %v4141 = vadd.f32 0.0, %v4140
        %4142 = vmatmul.bf16.gmra.mxu0 %v4083
        %v4143 = vpop.f32.mrf.mxu0
        %v4144 = vadd.f32 0.0, %v4143
        %v4145 = vpop.f32.mrf.mxu0
        %v4146 = vadd.f32 0.0, %v4145
        %4147 = vmatmul.bf16.gmra.mxu0 %v4086
        %v4148 = vpop.f32.mrf.mxu0
        %v4149 = vadd.f32 0.0, %v4148
        %v4150 = vpop.f32.mrf.mxu0
        %v4151 = vadd.f32 0.0, %v4150
        %4152 = vmatmul.bf16.gmra.mxu0 %v4089
        %v4153 = vpop.f32.mrf.mxu0
        %v4154 = vadd.f32 0.0, %v4153
        %v4155 = vpop.f32.mrf.mxu0
        %v4156 = vadd.f32 0.0, %v4155
        %4157 = vmatmul.bf16.gmra.mxu0 %v4092
        %v4158 = vpop.f32.mrf.mxu0
        %v4159 = vadd.f32 0.0, %v4158
        %v4160 = vpop.f32.mrf.mxu0
        %v4161 = vadd.f32 0.0, %v4160
        %4162 = vmatmul.bf16.gmra.mxu0 %v4095
        %v4163 = vpop.f32.mrf.mxu0
        %v4164 = vadd.f32 0.0, %v4163
        %v4165 = vpop.f32.mrf.mxu0
        %v4166 = vadd.f32 0.0, %v4165
        %4167 = vmatmul.bf16.gmra.mxu0 %v4098
        %v4168 = vpop.f32.mrf.mxu0
        %v4169 = vadd.f32 0.0, %v4168
        %v4170 = vpop.f32.mrf.mxu0
        %v4171 = vadd.f32 0.0, %v4170
        %4172 = vmatmul.bf16.gmra.mxu0 %v4101
        %v4173 = vpop.f32.mrf.mxu0
        %v4174 = vadd.f32 0.0, %v4173
        %v4175 = vpop.f32.mrf.mxu0
        %v4176 = vadd.f32 0.0, %v4175
        %4177 = vmatmul.bf16.gmra.mxu0 %v4104
        %v4178 = vpop.f32.mrf.mxu0
        %v4179 = vadd.f32 0.0, %v4178
        %v4180 = vpop.f32.mrf.mxu0
        %v4181 = vadd.f32 0.0, %v4180
        %4182 = vmatmul.bf16.gmra.mxu0 %v4107
        %v4183 = vpop.f32.mrf.mxu0
        %v4184 = vadd.f32 0.0, %v4183
        %v4185 = vpop.f32.mrf.mxu0
        %v4186 = vadd.f32 0.0, %v4185
        %4187 = vmatmul.bf16.gmra.mxu0 %v4110
        %v4188 = vpop.f32.mrf.mxu0
        %v4189 = vadd.f32 0.0, %v4188
        %v4190 = vpop.f32.mrf.mxu0
        %v4191 = vadd.f32 0.0, %v4190
        %4192 = vmatmul.bf16.gmra.mxu0 %v4113
        %v4193 = vpop.f32.mrf.mxu0
        %v4194 = vadd.f32 0.0, %v4193
        %v4195 = vpop.f32.mrf.mxu0
        %v4196 = vadd.f32 0.0, %v4195
        %4197 = vmatmul.bf16.gmra.mxu0 %v4116
        %v4198 = vpop.f32.mrf.mxu0
        %v4199 = vadd.f32 0.0, %v4198
        %v4200 = vpop.f32.mrf.mxu0
        %v4201 = vadd.f32 0.0, %v4200
        %4202 = vmatmul.bf16.gmra.mxu0 %v4119
        %v4203 = vpop.f32.mrf.mxu0
        %v4204 = vadd.f32 0.0, %v4203
        %v4205 = vpop.f32.mrf.mxu0
        %v4206 = vadd.f32 0.0, %v4205
        %4207 = vmatmul.bf16.gmra.mxu0 %v4122
        %v4208 = vpop.f32.mrf.mxu0
        %v4209 = vadd.f32 0.0, %v4208
        %v4210 = vpop.f32.mrf.mxu0
        %v4211 = vadd.f32 0.0, %v4210
        %4212 = vdwg.mxu0
        %v4213 = vadd.f32 %v3846, %v4134
        %v4214 = vadd.f32 %v3848, %v4136
        %v4215 = vadd.f32 %v3851, %v4139
        %v4216 = vadd.f32 %v3853, %v4141
        %v4217 = vadd.f32 %v3856, %v4144
        %v4218 = vadd.f32 %v3858, %v4146
        %v4219 = vadd.f32 %v3861, %v4149
        %v4220 = vadd.f32 %v3863, %v4151
        %v4221 = vadd.f32 %v3866, %v4154
        %v4222 = vadd.f32 %v3868, %v4156
        %v4223 = vadd.f32 %v3871, %v4159
        %v4224 = vadd.f32 %v3873, %v4161
        %v4225 = vadd.f32 %v3876, %v4164
        %v4226 = vadd.f32 %v3878, %v4166
        %v4227 = vadd.f32 %v3881, %v4169
        %v4228 = vadd.f32 %v3883, %v4171
        %v4229 = vadd.f32 %v3886, %v4174
        %v4230 = vadd.f32 %v3888, %v4176
        %v4231 = vadd.f32 %v3891, %v4179
        %v4232 = vadd.f32 %v3893, %v4181
        %v4233 = vadd.f32 %v3896, %v4184
        %v4234 = vadd.f32 %v3898, %v4186
        %v4235 = vadd.f32 %v3901, %v4189
        %v4236 = vadd.f32 %v3903, %v4191
        %v4237 = vadd.f32 %v3906, %v4194
        %v4238 = vadd.f32 %v3908, %v4196
        %v4239 = vadd.f32 %v3911, %v4199
        %v4240 = vadd.f32 %v3913, %v4201
        %v4241 = vadd.f32 %v3916, %v4204
        %v4242 = vadd.f32 %v3918, %v4206
        %v4243 = vadd.f32 %v3921, %v4209
        %v4244 = vadd.f32 %v3923, %v4211
        %v4248 = vrot.slane %v3438, 7
        %v4249 = vrot.slane %v3439, 7
        %v4250 = vsel %vm1625, %v4248, %v4249
        %v4251 = vrot.slane %v3440, 7
        %v4252 = vsel %vm1625, %v4249, %v4251
        %v4255 = vpack.c.bf16 %v4252, %v4250
        %s4256 = scalar_lea.vmem %s6, 96
        %v4257 = vld [vmem:[%s4256] sm:$0xff]
        %v4258 = vld [vmem:[%s4256 + $0x8] sm:$0xff]
        %v4259 = vld [vmem:[%s4256 + $0x10] sm:$0xff]
        %v4260 = vld [vmem:[%s4256 + $0x18] sm:$0xff]
        %v4261 = vpack.c.bf16 %v4258, %v4257
        %v4262 = vpack.c.bf16 %v4260, %v4259
        %v4264 = vsel %vm3268, %v4255, 0
        %4266 = vmatpush.bf16.msra.mxu0 0
        %4267 = vmatpush.bf16.msra.mxu0 0
        %4268 = vmatpush.bf16.msra.mxu0 0
        %4269 = vmatpush.bf16.msra.mxu0 0
        %4270 = vmatpush.bf16.msra.mxu0 0
        %4271 = vmatpush.bf16.msra.mxu0 0
        %4272 = vmatpush.bf16.msra.mxu0 %v4262
        %4273 = vmatpush.bf16.msra.mxu0 %v4261
        %4274 = vmatmul.bf16.gmra.mxu0 %v3792
        %v4275 = vpop.f32.mrf.mxu0
        %v4276 = vadd.f32 0.0, %v4275
        %v4277 = vpop.f32.mrf.mxu0
        %v4278 = vadd.f32 0.0, %v4277
        %4279 = vmatmul.bf16.gmra.mxu0 %v3795
        %v4280 = vpop.f32.mrf.mxu0
        %v4281 = vadd.f32 0.0, %v4280
        %v4282 = vpop.f32.mrf.mxu0
        %v4283 = vadd.f32 0.0, %v4282
        %4284 = vmatmul.bf16.gmra.mxu0 %v3798
        %v4285 = vpop.f32.mrf.mxu0
        %v4286 = vadd.f32 0.0, %v4285
        %v4287 = vpop.f32.mrf.mxu0
        %v4288 = vadd.f32 0.0, %v4287
        %4289 = vmatmul.bf16.gmra.mxu0 %v3801
        %v4290 = vpop.f32.mrf.mxu0
        %v4291 = vadd.f32 0.0, %v4290
        %v4292 = vpop.f32.mrf.mxu0
        %v4293 = vadd.f32 0.0, %v4292
        %4294 = vmatmul.bf16.gmra.mxu0 %v3804
        %v4295 = vpop.f32.mrf.mxu0
        %v4296 = vadd.f32 0.0, %v4295
        %v4297 = vpop.f32.mrf.mxu0
        %v4298 = vadd.f32 0.0, %v4297
        %4299 = vmatmul.bf16.gmra.mxu0 %v3807
        %v4300 = vpop.f32.mrf.mxu0
        %v4301 = vadd.f32 0.0, %v4300
        %v4302 = vpop.f32.mrf.mxu0
        %v4303 = vadd.f32 0.0, %v4302
        %4304 = vmatmul.bf16.gmra.mxu0 %v3810
        %v4305 = vpop.f32.mrf.mxu0
        %v4306 = vadd.f32 0.0, %v4305
        %v4307 = vpop.f32.mrf.mxu0
        %v4308 = vadd.f32 0.0, %v4307
        %4309 = vmatmul.bf16.gmra.mxu0 %v3813
        %v4310 = vpop.f32.mrf.mxu0
        %v4311 = vadd.f32 0.0, %v4310
        %v4312 = vpop.f32.mrf.mxu0
        %v4313 = vadd.f32 0.0, %v4312
        %4314 = vmatmul.bf16.gmra.mxu0 %v3816
        %v4315 = vpop.f32.mrf.mxu0
        %v4316 = vadd.f32 0.0, %v4315
        %v4317 = vpop.f32.mrf.mxu0
        %v4318 = vadd.f32 0.0, %v4317
        %4319 = vmatmul.bf16.gmra.mxu0 %v3819
        %v4320 = vpop.f32.mrf.mxu0
        %v4321 = vadd.f32 0.0, %v4320
        %v4322 = vpop.f32.mrf.mxu0
        %v4323 = vadd.f32 0.0, %v4322
        %4324 = vmatmul.bf16.gmra.mxu0 %v3822
        %v4325 = vpop.f32.mrf.mxu0
        %v4326 = vadd.f32 0.0, %v4325
        %v4327 = vpop.f32.mrf.mxu0
        %v4328 = vadd.f32 0.0, %v4327
        %4329 = vmatmul.bf16.gmra.mxu0 %v3825
        %v4330 = vpop.f32.mrf.mxu0
        %v4331 = vadd.f32 0.0, %v4330
        %v4332 = vpop.f32.mrf.mxu0
        %v4333 = vadd.f32 0.0, %v4332
        %4334 = vmatmul.bf16.gmra.mxu0 %v3828
        %v4335 = vpop.f32.mrf.mxu0
        %v4336 = vadd.f32 0.0, %v4335
        %v4337 = vpop.f32.mrf.mxu0
        %v4338 = vadd.f32 0.0, %v4337
        %4339 = vmatmul.bf16.gmra.mxu0 %v3831
        %v4340 = vpop.f32.mrf.mxu0
        %v4341 = vadd.f32 0.0, %v4340
        %v4342 = vpop.f32.mrf.mxu0
        %v4343 = vadd.f32 0.0, %v4342
        %4344 = vmatmul.bf16.gmra.mxu0 %v3834
        %v4345 = vpop.f32.mrf.mxu0
        %v4346 = vadd.f32 0.0, %v4345
        %v4347 = vpop.f32.mrf.mxu0
        %v4348 = vadd.f32 0.0, %v4347
        %4349 = vmatmul.bf16.gmra.mxu0 %v4264
        %v4350 = vpop.f32.mrf.mxu0
        %v4351 = vadd.f32 0.0, %v4350
        %v4352 = vpop.f32.mrf.mxu0
        %v4353 = vadd.f32 0.0, %v4352
        %4354 = vdwg.mxu0
        %v4355 = vadd.f32 %v4213, %v4276
        %v4356 = vadd.f32 %v4214, %v4278
        %v4357 = vadd.f32 %v4215, %v4281
        %v4358 = vadd.f32 %v4216, %v4283
        %v4359 = vadd.f32 %v4217, %v4286
        %v4360 = vadd.f32 %v4218, %v4288
        %v4361 = vadd.f32 %v4219, %v4291
        %v4362 = vadd.f32 %v4220, %v4293
        %v4363 = vadd.f32 %v4221, %v4296
        %v4364 = vadd.f32 %v4222, %v4298
        %v4365 = vadd.f32 %v4223, %v4301
        %v4366 = vadd.f32 %v4224, %v4303
        %v4367 = vadd.f32 %v4225, %v4306
        %v4368 = vadd.f32 %v4226, %v4308
        %v4369 = vadd.f32 %v4227, %v4311
        %v4370 = vadd.f32 %v4228, %v4313
        %v4371 = vadd.f32 %v4229, %v4316
        %v4372 = vadd.f32 %v4230, %v4318
        %v4373 = vadd.f32 %v4231, %v4321
        %v4374 = vadd.f32 %v4232, %v4323
        %v4375 = vadd.f32 %v4233, %v4326
        %v4376 = vadd.f32 %v4234, %v4328
        %v4377 = vadd.f32 %v4235, %v4331
        %v4378 = vadd.f32 %v4236, %v4333
        %v4379 = vadd.f32 %v4237, %v4336
        %v4380 = vadd.f32 %v4238, %v4338
        %v4381 = vadd.f32 %v4239, %v4341
        %v4382 = vadd.f32 %v4240, %v4343
        %v4383 = vadd.f32 %v4241, %v4346
        %v4384 = vadd.f32 %v4242, %v4348
        %v4385 = vadd.f32 %v4243, %v4351
        %v4386 = vadd.f32 %v4244, %v4353
        %v4387 = vpack.c.bf16 %v3440, %v3439
        %s4388 = scalar_lea.vmem %s6, 128
        %v4389 = vld [vmem:[%s4388] sm:$0xff]
        %v4390 = vld [vmem:[%s4388 + $0x8] sm:$0xff]
        %v4391 = vld [vmem:[%s4388 + $0x10] sm:$0xff]
        %v4392 = vld [vmem:[%s4388 + $0x18] sm:$0xff]
        %v4393 = vpack.c.bf16 %v4390, %v4389
        %v4394 = vpack.c.bf16 %v4392, %v4391
        %v4396 = vsel %vm3268, %v4387, 0
        %4398 = vmatpush.bf16.msra.mxu0 0
        %4399 = vmatpush.bf16.msra.mxu0 0
        %4400 = vmatpush.bf16.msra.mxu0 0
        %4401 = vmatpush.bf16.msra.mxu0 0
        %4402 = vmatpush.bf16.msra.mxu0 0
        %4403 = vmatpush.bf16.msra.mxu0 0
        %4404 = vmatpush.bf16.msra.mxu0 %v4394
        %4405 = vmatpush.bf16.msra.mxu0 %v4393
        %4406 = vmatmul.bf16.gmra.mxu0 %v3655
        %v4407 = vpop.f32.mrf.mxu0
        %v4408 = vadd.f32 0.0, %v4407
        %v4409 = vpop.f32.mrf.mxu0
        %v4410 = vadd.f32 0.0, %v4409
        %4411 = vmatmul.bf16.gmra.mxu0 %v3658
        %v4412 = vpop.f32.mrf.mxu0
        %v4413 = vadd.f32 0.0, %v4412
        %v4414 = vpop.f32.mrf.mxu0
        %v4415 = vadd.f32 0.0, %v4414
        %4416 = vmatmul.bf16.gmra.mxu0 %v3661
        %v4417 = vpop.f32.mrf.mxu0
        %v4418 = vadd.f32 0.0, %v4417
        %v4419 = vpop.f32.mrf.mxu0
        %v4420 = vadd.f32 0.0, %v4419
        %4421 = vmatmul.bf16.gmra.mxu0 %v3664
        %v4422 = vpop.f32.mrf.mxu0
        %v4423 = vadd.f32 0.0, %v4422
        %v4424 = vpop.f32.mrf.mxu0
        %v4425 = vadd.f32 0.0, %v4424
        %4426 = vmatmul.bf16.gmra.mxu0 %v3667
        %v4427 = vpop.f32.mrf.mxu0
        %v4428 = vadd.f32 0.0, %v4427
        %v4429 = vpop.f32.mrf.mxu0
        %v4430 = vadd.f32 0.0, %v4429
        %4431 = vmatmul.bf16.gmra.mxu0 %v3670
        %v4432 = vpop.f32.mrf.mxu0
        %v4433 = vadd.f32 0.0, %v4432
        %v4434 = vpop.f32.mrf.mxu0
        %v4435 = vadd.f32 0.0, %v4434
        %4436 = vmatmul.bf16.gmra.mxu0 %v3673
        %v4437 = vpop.f32.mrf.mxu0
        %v4438 = vadd.f32 0.0, %v4437
        %v4439 = vpop.f32.mrf.mxu0
        %v4440 = vadd.f32 0.0, %v4439
        %4441 = vmatmul.bf16.gmra.mxu0 %v3676
        %v4442 = vpop.f32.mrf.mxu0
        %v4443 = vadd.f32 0.0, %v4442
        %v4444 = vpop.f32.mrf.mxu0
        %v4445 = vadd.f32 0.0, %v4444
        %4446 = vmatmul.bf16.gmra.mxu0 %v3679
        %v4447 = vpop.f32.mrf.mxu0
        %v4448 = vadd.f32 0.0, %v4447
        %v4449 = vpop.f32.mrf.mxu0
        %v4450 = vadd.f32 0.0, %v4449
        %4451 = vmatmul.bf16.gmra.mxu0 %v3682
        %v4452 = vpop.f32.mrf.mxu0
        %v4453 = vadd.f32 0.0, %v4452
        %v4454 = vpop.f32.mrf.mxu0
        %v4455 = vadd.f32 0.0, %v4454
        %4456 = vmatmul.bf16.gmra.mxu0 %v3685
        %v4457 = vpop.f32.mrf.mxu0
        %v4458 = vadd.f32 0.0, %v4457
        %v4459 = vpop.f32.mrf.mxu0
        %v4460 = vadd.f32 0.0, %v4459
        %4461 = vmatmul.bf16.gmra.mxu0 %v3688
        %v4462 = vpop.f32.mrf.mxu0
        %v4463 = vadd.f32 0.0, %v4462
        %v4464 = vpop.f32.mrf.mxu0
        %v4465 = vadd.f32 0.0, %v4464
        %4466 = vmatmul.bf16.gmra.mxu0 %v3691
        %v4467 = vpop.f32.mrf.mxu0
        %v4468 = vadd.f32 0.0, %v4467
        %v4469 = vpop.f32.mrf.mxu0
        %v4470 = vadd.f32 0.0, %v4469
        %4471 = vmatmul.bf16.gmra.mxu0 %v3694
        %v4472 = vpop.f32.mrf.mxu0
        %v4473 = vadd.f32 0.0, %v4472
        %v4474 = vpop.f32.mrf.mxu0
        %v4475 = vadd.f32 0.0, %v4474
        %4476 = vmatmul.bf16.gmra.mxu0 %v3697
        %v4477 = vpop.f32.mrf.mxu0
        %v4478 = vadd.f32 0.0, %v4477
        %v4479 = vpop.f32.mrf.mxu0
        %v4480 = vadd.f32 0.0, %v4479
        %4481 = vmatmul.bf16.gmra.mxu0 %v4396
        %v4482 = vpop.f32.mrf.mxu0
        %v4483 = vadd.f32 0.0, %v4482
        %v4484 = vpop.f32.mrf.mxu0
        %v4485 = vadd.f32 0.0, %v4484
        %4486 = vdwg.mxu0
        %v4487 = vadd.f32 %v4355, %v4408
        %v4488 = vadd.f32 %v4356, %v4410
        %v4489 = vadd.f32 %v4357, %v4413
        %v4490 = vadd.f32 %v4358, %v4415
        %v4491 = vadd.f32 %v4359, %v4418
        %v4492 = vadd.f32 %v4360, %v4420
        %v4493 = vadd.f32 %v4361, %v4423
        %v4494 = vadd.f32 %v4362, %v4425
        %v4495 = vadd.f32 %v4363, %v4428
        %v4496 = vadd.f32 %v4364, %v4430
        %v4497 = vadd.f32 %v4365, %v4433
        %v4498 = vadd.f32 %v4366, %v4435
        %v4499 = vadd.f32 %v4367, %v4438
        %v4500 = vadd.f32 %v4368, %v4440
        %v4501 = vadd.f32 %v4369, %v4443
        %v4502 = vadd.f32 %v4370, %v4445
        %v4503 = vadd.f32 %v4371, %v4448
        %v4504 = vadd.f32 %v4372, %v4450
        %v4505 = vadd.f32 %v4373, %v4453
        %v4506 = vadd.f32 %v4374, %v4455
        %v4507 = vadd.f32 %v4375, %v4458
        %v4508 = vadd.f32 %v4376, %v4460
        %v4509 = vadd.f32 %v4377, %v4463
        %v4510 = vadd.f32 %v4378, %v4465
        %v4511 = vadd.f32 %v4379, %v4468
        %v4512 = vadd.f32 %v4380, %v4470
        %v4513 = vadd.f32 %v4381, %v4473
        %v4514 = vadd.f32 %v4382, %v4475
        %v4515 = vadd.f32 %v4383, %v4478
        %v4516 = vadd.f32 %v4384, %v4480
        %v4517 = vadd.f32 %v4385, %v4483
        %v4518 = vadd.f32 %v4386, %v4485
        %v4520 = vrot.slane %v3439, 1
        %v4521 = vrot.slane %v3440, 1
        %v4522 = vsel %vm2074, %v4520, %v4521
        %v4523 = vrot.slane %v3441, 1
        %v4524 = vsel %vm2074, %v4521, %v4523
        %v4527 = vpack.c.bf16 %v4524, %v4522
        %s4528 = scalar_lea.vmem %s6, 160
        %v4529 = vld [vmem:[%s4528] sm:$0xff]
        %v4530 = vld [vmem:[%s4528 + $0x8] sm:$0xff]
        %v4531 = vld [vmem:[%s4528 + $0x10] sm:$0xff]
        %v4532 = vld [vmem:[%s4528 + $0x18] sm:$0xff]
        %v4533 = vpack.c.bf16 %v4530, %v4529
        %v4534 = vpack.c.bf16 %v4532, %v4531
        %v4536 = vsel %vm3268, %v4527, 0
        %4538 = vmatpush.bf16.msra.mxu0 0
        %4539 = vmatpush.bf16.msra.mxu0 0
        %4540 = vmatpush.bf16.msra.mxu0 0
        %4541 = vmatpush.bf16.msra.mxu0 0
        %4542 = vmatpush.bf16.msra.mxu0 0
        %4543 = vmatpush.bf16.msra.mxu0 0
        %4544 = vmatpush.bf16.msra.mxu0 %v4534
        %4545 = vmatpush.bf16.msra.mxu0 %v4533
        %4546 = vmatmul.bf16.gmra.mxu0 %v4080
        %v4547 = vpop.f32.mrf.mxu0
        %v4548 = vadd.f32 0.0, %v4547
        %v4549 = vpop.f32.mrf.mxu0
        %v4550 = vadd.f32 0.0, %v4549
        %4551 = vmatmul.bf16.gmra.mxu0 %v4083
        %v4552 = vpop.f32.mrf.mxu0
        %v4553 = vadd.f32 0.0, %v4552
        %v4554 = vpop.f32.mrf.mxu0
        %v4555 = vadd.f32 0.0, %v4554
        %4556 = vmatmul.bf16.gmra.mxu0 %v4086
        %v4557 = vpop.f32.mrf.mxu0
        %v4558 = vadd.f32 0.0, %v4557
        %v4559 = vpop.f32.mrf.mxu0
        %v4560 = vadd.f32 0.0, %v4559
        %4561 = vmatmul.bf16.gmra.mxu0 %v4089
        %v4562 = vpop.f32.mrf.mxu0
        %v4563 = vadd.f32 0.0, %v4562
        %v4564 = vpop.f32.mrf.mxu0
        %v4565 = vadd.f32 0.0, %v4564
        %4566 = vmatmul.bf16.gmra.mxu0 %v4092
        %v4567 = vpop.f32.mrf.mxu0
        %v4568 = vadd.f32 0.0, %v4567
        %v4569 = vpop.f32.mrf.mxu0
        %v4570 = vadd.f32 0.0, %v4569
        %4571 = vmatmul.bf16.gmra.mxu0 %v4095
        %v4572 = vpop.f32.mrf.mxu0
        %v4573 = vadd.f32 0.0, %v4572
        %v4574 = vpop.f32.mrf.mxu0
        %v4575 = vadd.f32 0.0, %v4574
        %4576 = vmatmul.bf16.gmra.mxu0 %v4098
        %v4577 = vpop.f32.mrf.mxu0
        %v4578 = vadd.f32 0.0, %v4577
        %v4579 = vpop.f32.mrf.mxu0
        %v4580 = vadd.f32 0.0, %v4579
        %4581 = vmatmul.bf16.gmra.mxu0 %v4101
        %v4582 = vpop.f32.mrf.mxu0
        %v4583 = vadd.f32 0.0, %v4582
        %v4584 = vpop.f32.mrf.mxu0
        %v4585 = vadd.f32 0.0, %v4584
        %4586 = vmatmul.bf16.gmra.mxu0 %v4104
        %v4587 = vpop.f32.mrf.mxu0
        %v4588 = vadd.f32 0.0, %v4587
        %v4589 = vpop.f32.mrf.mxu0
        %v4590 = vadd.f32 0.0, %v4589
        %4591 = vmatmul.bf16.gmra.mxu0 %v4107
        %v4592 = vpop.f32.mrf.mxu0
        %v4593 = vadd.f32 0.0, %v4592
        %v4594 = vpop.f32.mrf.mxu0
        %v4595 = vadd.f32 0.0, %v4594
        %4596 = vmatmul.bf16.gmra.mxu0 %v4110
        %v4597 = vpop.f32.mrf.mxu0
        %v4598 = vadd.f32 0.0, %v4597
        %v4599 = vpop.f32.mrf.mxu0
        %v4600 = vadd.f32 0.0, %v4599
        %4601 = vmatmul.bf16.gmra.mxu0 %v4113
        %v4602 = vpop.f32.mrf.mxu0
        %v4603 = vadd.f32 0.0, %v4602
        %v4604 = vpop.f32.mrf.mxu0
        %v4605 = vadd.f32 0.0, %v4604
        %4606 = vmatmul.bf16.gmra.mxu0 %v4116
        %v4607 = vpop.f32.mrf.mxu0
        %v4608 = vadd.f32 0.0, %v4607
        %v4609 = vpop.f32.mrf.mxu0
        %v4610 = vadd.f32 0.0, %v4609
        %4611 = vmatmul.bf16.gmra.mxu0 %v4119
        %v4612 = vpop.f32.mrf.mxu0
        %v4613 = vadd.f32 0.0, %v4612
        %v4614 = vpop.f32.mrf.mxu0
        %v4615 = vadd.f32 0.0, %v4614
        %4616 = vmatmul.bf16.gmra.mxu0 %v4122
        %v4617 = vpop.f32.mrf.mxu0
        %v4618 = vadd.f32 0.0, %v4617
        %v4619 = vpop.f32.mrf.mxu0
        %v4620 = vadd.f32 0.0, %v4619
        %4621 = vmatmul.bf16.gmra.mxu0 %v4536
        %v4622 = vpop.f32.mrf.mxu0
        %v4623 = vadd.f32 0.0, %v4622
        %v4624 = vpop.f32.mrf.mxu0
        %v4625 = vadd.f32 0.0, %v4624
        %4626 = vdwg.mxu0
        %v4627 = vadd.f32 %v4487, %v4548
        %v4628 = vadd.f32 %v4488, %v4550
        %v4629 = vadd.f32 %v4489, %v4553
        %v4630 = vadd.f32 %v4490, %v4555
        %v4631 = vadd.f32 %v4491, %v4558
        %v4632 = vadd.f32 %v4492, %v4560
        %v4633 = vadd.f32 %v4493, %v4563
        %v4634 = vadd.f32 %v4494, %v4565
        %v4635 = vadd.f32 %v4495, %v4568
        %v4636 = vadd.f32 %v4496, %v4570
        %v4637 = vadd.f32 %v4497, %v4573
        %v4638 = vadd.f32 %v4498, %v4575
        %v4639 = vadd.f32 %v4499, %v4578
        %v4640 = vadd.f32 %v4500, %v4580
        %v4641 = vadd.f32 %v4501, %v4583
        %v4642 = vadd.f32 %v4502, %v4585
        %v4643 = vadd.f32 %v4503, %v4588
        %v4644 = vadd.f32 %v4504, %v4590
        %v4645 = vadd.f32 %v4505, %v4593
        %v4646 = vadd.f32 %v4506, %v4595
        %v4647 = vadd.f32 %v4507, %v4598
        %v4648 = vadd.f32 %v4508, %v4600
        %v4649 = vadd.f32 %v4509, %v4603
        %v4650 = vadd.f32 %v4510, %v4605
        %v4651 = vadd.f32 %v4511, %v4608
        %v4652 = vadd.f32 %v4512, %v4610
        %v4653 = vadd.f32 %v4513, %v4613
        %v4654 = vadd.f32 %v4514, %v4615
        %v4655 = vadd.f32 %v4515, %v4618
        %v4656 = vadd.f32 %v4516, %v4620
        %v4657 = vadd.f32 %v4517, %v4623
        %v4658 = vadd.f32 %v4518, %v4625
        %v4662 = vrot.slane %v3442, 7
        %v4663 = vrot.slane %v3443, 7
        %v4664 = vsel %vm1625, %v4662, %v4663
        %v4665 = vrot.slane %v3444, 7
        %v4666 = vsel %vm1625, %v4663, %v4665
        %v4669 = vpack.c.bf16 %v4666, %v4664
        %s4670 = scalar_lea.vmem %s6, 192
        %v4671 = vld [vmem:[%s4670] sm:$0xff]
        %v4672 = vld [vmem:[%s4670 + $0x8] sm:$0xff]
        %v4673 = vld [vmem:[%s4670 + $0x10] sm:$0xff]
        %v4674 = vld [vmem:[%s4670 + $0x18] sm:$0xff]
        %v4675 = vpack.c.bf16 %v4672, %v4671
        %v4676 = vpack.c.bf16 %v4674, %v4673
        %v4678 = vsel %vm3268, %v4669, 0
        %4680 = vmatpush.bf16.msra.mxu0 0
        %4681 = vmatpush.bf16.msra.mxu0 0
        %4682 = vmatpush.bf16.msra.mxu0 0
        %4683 = vmatpush.bf16.msra.mxu0 0
        %4684 = vmatpush.bf16.msra.mxu0 0
        %4685 = vmatpush.bf16.msra.mxu0 0
        %4686 = vmatpush.bf16.msra.mxu0 %v4676
        %4687 = vmatpush.bf16.msra.mxu0 %v4675
        %4688 = vmatmul.bf16.gmra.mxu0 %v3795
        %v4689 = vpop.f32.mrf.mxu0
        %v4690 = vadd.f32 0.0, %v4689
        %v4691 = vpop.f32.mrf.mxu0
        %v4692 = vadd.f32 0.0, %v4691
        %4693 = vmatmul.bf16.gmra.mxu0 %v3798
        %v4694 = vpop.f32.mrf.mxu0
        %v4695 = vadd.f32 0.0, %v4694
        %v4696 = vpop.f32.mrf.mxu0
        %v4697 = vadd.f32 0.0, %v4696
        %4698 = vmatmul.bf16.gmra.mxu0 %v3801
        %v4699 = vpop.f32.mrf.mxu0
        %v4700 = vadd.f32 0.0, %v4699
        %v4701 = vpop.f32.mrf.mxu0
        %v4702 = vadd.f32 0.0, %v4701
        %4703 = vmatmul.bf16.gmra.mxu0 %v3804
        %v4704 = vpop.f32.mrf.mxu0
        %v4705 = vadd.f32 0.0, %v4704
        %v4706 = vpop.f32.mrf.mxu0
        %v4707 = vadd.f32 0.0, %v4706
        %4708 = vmatmul.bf16.gmra.mxu0 %v3807
        %v4709 = vpop.f32.mrf.mxu0
        %v4710 = vadd.f32 0.0, %v4709
        %v4711 = vpop.f32.mrf.mxu0
        %v4712 = vadd.f32 0.0, %v4711
        %4713 = vmatmul.bf16.gmra.mxu0 %v3810
        %v4714 = vpop.f32.mrf.mxu0
        %v4715 = vadd.f32 0.0, %v4714
        %v4716 = vpop.f32.mrf.mxu0
        %v4717 = vadd.f32 0.0, %v4716
        %4718 = vmatmul.bf16.gmra.mxu0 %v3813
        %v4719 = vpop.f32.mrf.mxu0
        %v4720 = vadd.f32 0.0, %v4719
        %v4721 = vpop.f32.mrf.mxu0
        %v4722 = vadd.f32 0.0, %v4721
        %4723 = vmatmul.bf16.gmra.mxu0 %v3816
        %v4724 = vpop.f32.mrf.mxu0
        %v4725 = vadd.f32 0.0, %v4724
        %v4726 = vpop.f32.mrf.mxu0
        %v4727 = vadd.f32 0.0, %v4726
        %4728 = vmatmul.bf16.gmra.mxu0 %v3819
        %v4729 = vpop.f32.mrf.mxu0
        %v4730 = vadd.f32 0.0, %v4729
        %v4731 = vpop.f32.mrf.mxu0
        %v4732 = vadd.f32 0.0, %v4731
        %4733 = vmatmul.bf16.gmra.mxu0 %v3822
        %v4734 = vpop.f32.mrf.mxu0
        %v4735 = vadd.f32 0.0, %v4734
        %v4736 = vpop.f32.mrf.mxu0
        %v4737 = vadd.f32 0.0, %v4736
        %4738 = vmatmul.bf16.gmra.mxu0 %v3825
        %v4739 = vpop.f32.mrf.mxu0
        %v4740 = vadd.f32 0.0, %v4739
        %v4741 = vpop.f32.mrf.mxu0
        %v4742 = vadd.f32 0.0, %v4741
        %4743 = vmatmul.bf16.gmra.mxu0 %v3828
        %v4744 = vpop.f32.mrf.mxu0
        %v4745 = vadd.f32 0.0, %v4744
        %v4746 = vpop.f32.mrf.mxu0
        %v4747 = vadd.f32 0.0, %v4746
        %4748 = vmatmul.bf16.gmra.mxu0 %v3831
        %v4749 = vpop.f32.mrf.mxu0
        %v4750 = vadd.f32 0.0, %v4749
        %v4751 = vpop.f32.mrf.mxu0
        %v4752 = vadd.f32 0.0, %v4751
        %4753 = vmatmul.bf16.gmra.mxu0 %v3834
        %v4754 = vpop.f32.mrf.mxu0
        %v4755 = vadd.f32 0.0, %v4754
        %v4756 = vpop.f32.mrf.mxu0
        %v4757 = vadd.f32 0.0, %v4756
        %4758 = vmatmul.bf16.gmra.mxu0 %v4264
        %v4759 = vpop.f32.mrf.mxu0
        %v4760 = vadd.f32 0.0, %v4759
        %v4761 = vpop.f32.mrf.mxu0
        %v4762 = vadd.f32 0.0, %v4761
        %4763 = vmatmul.bf16.gmra.mxu0 %v4678
        %v4764 = vpop.f32.mrf.mxu0
        %v4765 = vadd.f32 0.0, %v4764
        %v4766 = vpop.f32.mrf.mxu0
        %v4767 = vadd.f32 0.0, %v4766
        %4768 = vdwg.mxu0
        %v4769 = vadd.f32 %v4627, %v4690
        %v4770 = vadd.f32 %v4628, %v4692
        %v4771 = vadd.f32 %v4629, %v4695
        %v4772 = vadd.f32 %v4630, %v4697
        %v4773 = vadd.f32 %v4631, %v4700
        %v4774 = vadd.f32 %v4632, %v4702
        %v4775 = vadd.f32 %v4633, %v4705
        %v4776 = vadd.f32 %v4634, %v4707
        %v4777 = vadd.f32 %v4635, %v4710
        %v4778 = vadd.f32 %v4636, %v4712
        %v4779 = vadd.f32 %v4637, %v4715
        %v4780 = vadd.f32 %v4638, %v4717
        %v4781 = vadd.f32 %v4639, %v4720
        %v4782 = vadd.f32 %v4640, %v4722
        %v4783 = vadd.f32 %v4641, %v4725
        %v4784 = vadd.f32 %v4642, %v4727
        %v4785 = vadd.f32 %v4643, %v4730
        %v4786 = vadd.f32 %v4644, %v4732
        %v4787 = vadd.f32 %v4645, %v4735
        %v4788 = vadd.f32 %v4646, %v4737
        %v4789 = vadd.f32 %v4647, %v4740
        %v4790 = vadd.f32 %v4648, %v4742
        %v4791 = vadd.f32 %v4649, %v4745
        %v4792 = vadd.f32 %v4650, %v4747
        %v4793 = vadd.f32 %v4651, %v4750
        %v4794 = vadd.f32 %v4652, %v4752
        %v4795 = vadd.f32 %v4653, %v4755
        %v4796 = vadd.f32 %v4654, %v4757
        %v4797 = vadd.f32 %v4655, %v4760
        %v4798 = vadd.f32 %v4656, %v4762
        %v4799 = vadd.f32 %v4657, %v4765
        %v4800 = vadd.f32 %v4658, %v4767
        %v4801 = vpack.c.bf16 %v3444, %v3443
        %s4802 = scalar_lea.vmem %s6, 224
        %v4803 = vld [vmem:[%s4802] sm:$0xff]
        %v4804 = vld [vmem:[%s4802 + $0x8] sm:$0xff]
        %v4805 = vld [vmem:[%s4802 + $0x10] sm:$0xff]
        %v4806 = vld [vmem:[%s4802 + $0x18] sm:$0xff]
        %v4807 = vpack.c.bf16 %v4804, %v4803
        %v4808 = vpack.c.bf16 %v4806, %v4805
        %v4810 = vsel %vm3268, %v4801, 0
        %4812 = vmatpush.bf16.msra.mxu0 0
        %4813 = vmatpush.bf16.msra.mxu0 0
        %4814 = vmatpush.bf16.msra.mxu0 0
        %4815 = vmatpush.bf16.msra.mxu0 0
        %4816 = vmatpush.bf16.msra.mxu0 0
        %4817 = vmatpush.bf16.msra.mxu0 0
        %4818 = vmatpush.bf16.msra.mxu0 %v4808
        %4819 = vmatpush.bf16.msra.mxu0 %v4807
        %4820 = vmatmul.bf16.gmra.mxu0 %v3658
        %v4821 = vpop.f32.mrf.mxu0
        %v4822 = vadd.f32 0.0, %v4821
        %v4823 = vpop.f32.mrf.mxu0
        %v4824 = vadd.f32 0.0, %v4823
        %4825 = vmatmul.bf16.gmra.mxu0 %v3661
        %v4826 = vpop.f32.mrf.mxu0
        %v4827 = vadd.f32 0.0, %v4826
        %v4828 = vpop.f32.mrf.mxu0
        %v4829 = vadd.f32 0.0, %v4828
        %4830 = vmatmul.bf16.gmra.mxu0 %v3664
        %v4831 = vpop.f32.mrf.mxu0
        %v4832 = vadd.f32 0.0, %v4831
        %v4833 = vpop.f32.mrf.mxu0
        %v4834 = vadd.f32 0.0, %v4833
        %4835 = vmatmul.bf16.gmra.mxu0 %v3667
        %v4836 = vpop.f32.mrf.mxu0
        %v4837 = vadd.f32 0.0, %v4836
        %v4838 = vpop.f32.mrf.mxu0
        %v4839 = vadd.f32 0.0, %v4838
        %4840 = vmatmul.bf16.gmra.mxu0 %v3670
        %v4841 = vpop.f32.mrf.mxu0
        %v4842 = vadd.f32 0.0, %v4841
        %v4843 = vpop.f32.mrf.mxu0
        %v4844 = vadd.f32 0.0, %v4843
        %4845 = vmatmul.bf16.gmra.mxu0 %v3673
        %v4846 = vpop.f32.mrf.mxu0
        %v4847 = vadd.f32 0.0, %v4846
        %v4848 = vpop.f32.mrf.mxu0
        %v4849 = vadd.f32 0.0, %v4848
        %4850 = vmatmul.bf16.gmra.mxu0 %v3676
        %v4851 = vpop.f32.mrf.mxu0
        %v4852 = vadd.f32 0.0, %v4851
        %v4853 = vpop.f32.mrf.mxu0
        %v4854 = vadd.f32 0.0, %v4853
        %4855 = vmatmul.bf16.gmra.mxu0 %v3679
        %v4856 = vpop.f32.mrf.mxu0
        %v4857 = vadd.f32 0.0, %v4856
        %v4858 = vpop.f32.mrf.mxu0
        %v4859 = vadd.f32 0.0, %v4858
        %4860 = vmatmul.bf16.gmra.mxu0 %v3682
        %v4861 = vpop.f32.mrf.mxu0
        %v4862 = vadd.f32 0.0, %v4861
        %v4863 = vpop.f32.mrf.mxu0
        %v4864 = vadd.f32 0.0, %v4863
        %4865 = vmatmul.bf16.gmra.mxu0 %v3685
        %v4866 = vpop.f32.mrf.mxu0
        %v4867 = vadd.f32 0.0, %v4866
        %v4868 = vpop.f32.mrf.mxu0
        %v4869 = vadd.f32 0.0, %v4868
        %4870 = vmatmul.bf16.gmra.mxu0 %v3688
        %v4871 = vpop.f32.mrf.mxu0
        %v4872 = vadd.f32 0.0, %v4871
        %v4873 = vpop.f32.mrf.mxu0
        %v4874 = vadd.f32 0.0, %v4873
        %4875 = vmatmul.bf16.gmra.mxu0 %v3691
        %v4876 = vpop.f32.mrf.mxu0
        %v4877 = vadd.f32 0.0, %v4876
        %v4878 = vpop.f32.mrf.mxu0
        %v4879 = vadd.f32 0.0, %v4878
        %4880 = vmatmul.bf16.gmra.mxu0 %v3694
        %v4881 = vpop.f32.mrf.mxu0
        %v4882 = vadd.f32 0.0, %v4881
        %v4883 = vpop.f32.mrf.mxu0
        %v4884 = vadd.f32 0.0, %v4883
        %4885 = vmatmul.bf16.gmra.mxu0 %v3697
        %v4886 = vpop.f32.mrf.mxu0
        %v4887 = vadd.f32 0.0, %v4886
        %v4888 = vpop.f32.mrf.mxu0
        %v4889 = vadd.f32 0.0, %v4888
        %4890 = vmatmul.bf16.gmra.mxu0 %v4396
        %v4891 = vpop.f32.mrf.mxu0
        %v4892 = vadd.f32 0.0, %v4891
        %v4893 = vpop.f32.mrf.mxu0
        %v4894 = vadd.f32 0.0, %v4893
        %4895 = vmatmul.bf16.gmra.mxu0 %v4810
        %v4896 = vpop.f32.mrf.mxu0
        %v4897 = vadd.f32 0.0, %v4896
        %v4898 = vpop.f32.mrf.mxu0
        %v4899 = vadd.f32 0.0, %v4898
        %4900 = vdwg.mxu0
        %v4901 = vadd.f32 %v4769, %v4822
        %v4902 = vadd.f32 %v4770, %v4824
        %v4903 = vadd.f32 %v4771, %v4827
        %v4904 = vadd.f32 %v4772, %v4829
        %v4905 = vadd.f32 %v4773, %v4832
        %v4906 = vadd.f32 %v4774, %v4834
        %v4907 = vadd.f32 %v4775, %v4837
        %v4908 = vadd.f32 %v4776, %v4839
        %v4909 = vadd.f32 %v4777, %v4842
        %v4910 = vadd.f32 %v4778, %v4844
        %v4911 = vadd.f32 %v4779, %v4847
        %v4912 = vadd.f32 %v4780, %v4849
        %v4913 = vadd.f32 %v4781, %v4852
        %v4914 = vadd.f32 %v4782, %v4854
        %v4915 = vadd.f32 %v4783, %v4857
        %v4916 = vadd.f32 %v4784, %v4859
        %v4917 = vadd.f32 %v4785, %v4862
        %v4918 = vadd.f32 %v4786, %v4864
        %v4919 = vadd.f32 %v4787, %v4867
        %v4920 = vadd.f32 %v4788, %v4869
        %v4921 = vadd.f32 %v4789, %v4872
        %v4922 = vadd.f32 %v4790, %v4874
        %v4923 = vadd.f32 %v4791, %v4877
        %v4924 = vadd.f32 %v4792, %v4879
        %v4925 = vadd.f32 %v4793, %v4882
        %v4926 = vadd.f32 %v4794, %v4884
        %v4927 = vadd.f32 %v4795, %v4887
        %v4928 = vadd.f32 %v4796, %v4889
        %v4929 = vadd.f32 %v4797, %v4892
        %v4930 = vadd.f32 %v4798, %v4894
        %v4931 = vadd.f32 %v4799, %v4897
        %v4932 = vadd.f32 %v4800, %v4899
        %v4934 = vrot.slane %v3443, 1
        %v4935 = vrot.slane %v3444, 1
        %v4936 = vsel %vm2074, %v4934, %v4935
        %v4937 = vrot.slane %v3445, 1
        %v4938 = vsel %vm2074, %v4935, %v4937
        %v4941 = vpack.c.bf16 %v4938, %v4936
        %s4942 = scalar_lea.vmem %s6, 256
        %v4943 = vld [vmem:[%s4942] sm:$0xff]
        %v4944 = vld [vmem:[%s4942 + $0x8] sm:$0xff]
        %v4945 = vld [vmem:[%s4942 + $0x10] sm:$0xff]
        %v4946 = vld [vmem:[%s4942 + $0x18] sm:$0xff]
        %v4947 = vpack.c.bf16 %v4944, %v4943
        %v4948 = vpack.c.bf16 %v4946, %v4945
        %v4950 = vsel %vm3268, %v4941, 0
        %4952 = vmatpush.bf16.msra.mxu0 0
        %4953 = vmatpush.bf16.msra.mxu0 0
        %4954 = vmatpush.bf16.msra.mxu0 0
        %4955 = vmatpush.bf16.msra.mxu0 0
        %4956 = vmatpush.bf16.msra.mxu0 0
        %4957 = vmatpush.bf16.msra.mxu0 0
        %4958 = vmatpush.bf16.msra.mxu0 %v4948
        %4959 = vmatpush.bf16.msra.mxu0 %v4947
        %4960 = vmatmul.bf16.gmra.mxu0 %v4083
        %v4961 = vpop.f32.mrf.mxu0
        %v4962 = vadd.f32 0.0, %v4961
        %v4963 = vpop.f32.mrf.mxu0
        %v4964 = vadd.f32 0.0, %v4963
        %4965 = vmatmul.bf16.gmra.mxu0 %v4086
        %v4966 = vpop.f32.mrf.mxu0
        %v4967 = vadd.f32 0.0, %v4966
        %v4968 = vpop.f32.mrf.mxu0
        %v4969 = vadd.f32 0.0, %v4968
        %4970 = vmatmul.bf16.gmra.mxu0 %v4089
        %v4971 = vpop.f32.mrf.mxu0
        %v4972 = vadd.f32 0.0, %v4971
        %v4973 = vpop.f32.mrf.mxu0
        %v4974 = vadd.f32 0.0, %v4973
        %4975 = vmatmul.bf16.gmra.mxu0 %v4092
        %v4976 = vpop.f32.mrf.mxu0
        %v4977 = vadd.f32 0.0, %v4976
        %v4978 = vpop.f32.mrf.mxu0
        %v4979 = vadd.f32 0.0, %v4978
        %4980 = vmatmul.bf16.gmra.mxu0 %v4095
        %v4981 = vpop.f32.mrf.mxu0
        %v4982 = vadd.f32 0.0, %v4981
        %v4983 = vpop.f32.mrf.mxu0
        %v4984 = vadd.f32 0.0, %v4983
        %4985 = vmatmul.bf16.gmra.mxu0 %v4098
        %v4986 = vpop.f32.mrf.mxu0
        %v4987 = vadd.f32 0.0, %v4986
        %v4988 = vpop.f32.mrf.mxu0
        %v4989 = vadd.f32 0.0, %v4988
        %4990 = vmatmul.bf16.gmra.mxu0 %v4101
        %v4991 = vpop.f32.mrf.mxu0
        %v4992 = vadd.f32 0.0, %v4991
        %v4993 = vpop.f32.mrf.mxu0
        %v4994 = vadd.f32 0.0, %v4993
        %4995 = vmatmul.bf16.gmra.mxu0 %v4104
        %v4996 = vpop.f32.mrf.mxu0
        %v4997 = vadd.f32 0.0, %v4996
        %v4998 = vpop.f32.mrf.mxu0
        %v4999 = vadd.f32 0.0, %v4998
        %5000 = vmatmul.bf16.gmra.mxu0 %v4107
        %v5001 = vpop.f32.mrf.mxu0
        %v5002 = vadd.f32 0.0, %v5001
        %v5003 = vpop.f32.mrf.mxu0
        %v5004 = vadd.f32 0.0, %v5003
        %5005 = vmatmul.bf16.gmra.mxu0 %v4110
        %v5006 = vpop.f32.mrf.mxu0
        %v5007 = vadd.f32 0.0, %v5006
        %v5008 = vpop.f32.mrf.mxu0
        %v5009 = vadd.f32 0.0, %v5008
        %5010 = vmatmul.bf16.gmra.mxu0 %v4113
        %v5011 = vpop.f32.mrf.mxu0
        %v5012 = vadd.f32 0.0, %v5011
        %v5013 = vpop.f32.mrf.mxu0
        %v5014 = vadd.f32 0.0, %v5013
        %5015 = vmatmul.bf16.gmra.mxu0 %v4116
        %v5016 = vpop.f32.mrf.mxu0
        %v5017 = vadd.f32 0.0, %v5016
        %v5018 = vpop.f32.mrf.mxu0
        %v5019 = vadd.f32 0.0, %v5018
        %5020 = vmatmul.bf16.gmra.mxu0 %v4119
        %v5021 = vpop.f32.mrf.mxu0
        %v5022 = vadd.f32 0.0, %v5021
        %v5023 = vpop.f32.mrf.mxu0
        %v5024 = vadd.f32 0.0, %v5023
        %5025 = vmatmul.bf16.gmra.mxu0 %v4122
        %v5026 = vpop.f32.mrf.mxu0
        %v5027 = vadd.f32 0.0, %v5026
        %v5028 = vpop.f32.mrf.mxu0
        %v5029 = vadd.f32 0.0, %v5028
        %5030 = vmatmul.bf16.gmra.mxu0 %v4536
        %v5031 = vpop.f32.mrf.mxu0
        %v5032 = vadd.f32 0.0, %v5031
        %v5033 = vpop.f32.mrf.mxu0
        %v5034 = vadd.f32 0.0, %v5033
        %5035 = vmatmul.bf16.gmra.mxu0 %v4950
        %v5036 = vpop.f32.mrf.mxu0
        %v5037 = vadd.f32 0.0, %v5036
        %v5038 = vpop.f32.mrf.mxu0
        %v5039 = vadd.f32 0.0, %v5038
        %5040 = vdwg.mxu0
        %v5041 = vadd.f32 %v4901, %v4962
        %v5042 = vadd.f32 %v4902, %v4964
        %v5043 = vadd.f32 %v4903, %v4967
        %v5044 = vadd.f32 %v4904, %v4969
        %v5045 = vadd.f32 %v4905, %v4972
        %v5046 = vadd.f32 %v4906, %v4974
        %v5047 = vadd.f32 %v4907, %v4977
        %v5048 = vadd.f32 %v4908, %v4979
        %v5049 = vadd.f32 %v4909, %v4982
        %v5050 = vadd.f32 %v4910, %v4984
        %v5051 = vadd.f32 %v4911, %v4987
        %v5052 = vadd.f32 %v4912, %v4989
        %v5053 = vadd.f32 %v4913, %v4992
        %v5054 = vadd.f32 %v4914, %v4994
        %v5055 = vadd.f32 %v4915, %v4997
        %v5056 = vadd.f32 %v4916, %v4999
        %v5057 = vadd.f32 %v4917, %v5002
        %v5058 = vadd.f32 %v4918, %v5004
        %v5059 = vadd.f32 %v4919, %v5007
        %v5060 = vadd.f32 %v4920, %v5009
        %v5061 = vadd.f32 %v4921, %v5012
        %v5062 = vadd.f32 %v4922, %v5014
        %v5063 = vadd.f32 %v4923, %v5017
        %v5064 = vadd.f32 %v4924, %v5019
        %v5065 = vadd.f32 %v4925, %v5022
        %v5066 = vadd.f32 %v4926, %v5024
        %v5067 = vadd.f32 %v4927, %v5027
        %v5068 = vadd.f32 %v4928, %v5029
        %v5069 = vadd.f32 %v4929, %v5032
        %v5070 = vadd.f32 %v4930, %v5034
        %v5071 = vadd.f32 %v4931, %v5037
        %v5072 = vadd.f32 %v4932, %v5039
        %v5073 = vld [vmem:[%s7] sm:$0x1]
        %v5075 = vperm.slane %v5073, 0
        %v5077 = vadd.f32 %v5041, %v5075
        %v5078 = vadd.f32 %v5042, %v5075
        %v5079 = vadd.f32 %v5043, %v5075
        %v5080 = vadd.f32 %v5044, %v5075
        %v5081 = vadd.f32 %v5045, %v5075
        %v5082 = vadd.f32 %v5046, %v5075
        %v5083 = vadd.f32 %v5047, %v5075
        %v5084 = vadd.f32 %v5048, %v5075
        %v5085 = vadd.f32 %v5049, %v5075
        %v5086 = vadd.f32 %v5050, %v5075
        %v5087 = vadd.f32 %v5051, %v5075
        %v5088 = vadd.f32 %v5052, %v5075
        %v5089 = vadd.f32 %v5053, %v5075
        %v5090 = vadd.f32 %v5054, %v5075
        %v5091 = vadd.f32 %v5055, %v5075
        %v5092 = vadd.f32 %v5056, %v5075
        %v5093 = vadd.f32 %v5057, %v5075
        %v5094 = vadd.f32 %v5058, %v5075
        %v5095 = vadd.f32 %v5059, %v5075
        %v5096 = vadd.f32 %v5060, %v5075
        %v5097 = vadd.f32 %v5061, %v5075
        %v5098 = vadd.f32 %v5062, %v5075
        %v5099 = vadd.f32 %v5063, %v5075
        %v5100 = vadd.f32 %v5064, %v5075
        %v5101 = vadd.f32 %v5065, %v5075
        %v5102 = vadd.f32 %v5066, %v5075
        %v5103 = vadd.f32 %v5067, %v5075
        %v5104 = vadd.f32 %v5068, %v5075
        %v5105 = vadd.f32 %v5069, %v5075
        %v5106 = vadd.f32 %v5070, %v5075
        %v5107 = vadd.f32 %v5071, %v5075
        %v5108 = vadd.f32 %v5072, %v5075
        %v5109 = vperm.slane %v370, 0
        %v5110 = vsub.f32 %v374, %v5109
        %v5111 = vsub.f32 %v379, %v5109
        %v5112 = vsub.f32 %v384, %v5109
        %v5113 = vsub.f32 %v389, %v5109
        %v5114 = vsub.f32 %v394, %v5109
        %v5115 = vsub.f32 %v399, %v5109
        %v5116 = vsub.f32 %v404, %v5109
        %v5117 = vsub.f32 %v409, %v5109
        %v5118 = vsub.f32 %v414, %v5109
        %v5119 = vsub.f32 %v419, %v5109
        %v5120 = vsub.f32 %v424, %v5109
        %v5121 = vsub.f32 %v429, %v5109
        %v5122 = vsub.f32 %v434, %v5109
        %v5123 = vsub.f32 %v439, %v5109
        %v5124 = vsub.f32 %v444, %v5109
        %v5125 = vsub.f32 %v449, %v5109
        %v5126 = vsub.f32 %v454, %v5109
        %v5127 = vsub.f32 %v459, %v5109
        %v5128 = vsub.f32 %v464, %v5109
        %v5129 = vsub.f32 %v469, %v5109
        %v5130 = vsub.f32 %v474, %v5109
        %v5131 = vsub.f32 %v479, %v5109
        %v5132 = vsub.f32 %v484, %v5109
        %v5133 = vsub.f32 %v489, %v5109
        %v5134 = vsub.f32 %v494, %v5109
        %v5135 = vsub.f32 %v499, %v5109
        %v5136 = vsub.f32 %v504, %v5109
        %v5137 = vsub.f32 %v509, %v5109
        %v5138 = vsub.f32 %v514, %v5109
        %v5139 = vsub.f32 %v519, %v5109
        %v5140 = vsub.f32 %v524, %v5109
        %v5141 = vsub.f32 %v529, %v5109
        %v5142 = vmul.f32 %v5110, %v5110
        %v5143 = vmul.f32 %v5111, %v5111
        %v5144 = vmul.f32 %v5112, %v5112
        %v5145 = vmul.f32 %v5113, %v5113
        %v5146 = vmul.f32 %v5114, %v5114
        %v5147 = vmul.f32 %v5115, %v5115
        %v5148 = vmul.f32 %v5116, %v5116
        %v5149 = vmul.f32 %v5117, %v5117
        %v5150 = vmul.f32 %v5118, %v5118
        %v5151 = vmul.f32 %v5119, %v5119
        %v5152 = vmul.f32 %v5120, %v5120
        %v5153 = vmul.f32 %v5121, %v5121
        %v5154 = vmul.f32 %v5122, %v5122
        %v5155 = vmul.f32 %v5123, %v5123
        %v5156 = vmul.f32 %v5124, %v5124
        %v5157 = vmul.f32 %v5125, %v5125
        %v5158 = vmul.f32 %v5126, %v5126
        %v5159 = vmul.f32 %v5127, %v5127
        %v5160 = vmul.f32 %v5128, %v5128
        %v5161 = vmul.f32 %v5129, %v5129
        %v5162 = vmul.f32 %v5130, %v5130
        %v5163 = vmul.f32 %v5131, %v5131
        %v5164 = vmul.f32 %v5132, %v5132
        %v5165 = vmul.f32 %v5133, %v5133
        %v5166 = vmul.f32 %v5134, %v5134
        %v5167 = vmul.f32 %v5135, %v5135
        %v5168 = vmul.f32 %v5136, %v5136
        %v5169 = vmul.f32 %v5137, %v5137
        %v5170 = vmul.f32 %v5138, %v5138
        %v5171 = vmul.f32 %v5139, %v5139
        %v5172 = vmul.f32 %v5140, %v5140
        %v5173 = vmul.f32 %v5141, %v5141
        %v5174 = vadd.f32 %v5142, 0.0
        %v5175 = vadd.f32 %v5143, 0.0
        %v5176 = vadd.f32 %v5144, 0.0
        %v5177 = vadd.f32 %v5145, 0.0
        %v5178 = vadd.f32 %v5146, 0.0
        %v5179 = vadd.f32 %v5147, 0.0
        %v5180 = vadd.f32 %v5148, 0.0
        %v5181 = vadd.f32 %v5149, 0.0
        %v5182 = vadd.f32 %v5150, 0.0
        %v5183 = vadd.f32 %v5151, 0.0
        %v5184 = vadd.f32 %v5152, 0.0
        %v5185 = vadd.f32 %v5153, 0.0
        %v5186 = vadd.f32 %v5154, 0.0
        %v5187 = vadd.f32 %v5155, 0.0
        %v5188 = vadd.f32 %v5156, 0.0
        %v5189 = vadd.f32 %v5157, 0.0
        %v5190 = vadd.f32 %v5158, 0.0
        %v5191 = vadd.f32 %v5159, 0.0
        %v5192 = vadd.f32 %v5160, 0.0
        %v5193 = vadd.f32 %v5161, 0.0
        %v5194 = vadd.f32 %v5162, 0.0
        %v5195 = vadd.f32 %v5163, 0.0
        %v5196 = vadd.f32 %v5164, 0.0
        %v5197 = vadd.f32 %v5165, 0.0
        %v5198 = vadd.f32 %v5166, 0.0
        %v5199 = vadd.f32 %v5167, 0.0
        %v5200 = vadd.f32 %v5168, 0.0
        %v5201 = vadd.f32 %v5169, 0.0
        %v5202 = vadd.f32 %v5170, 0.0
        %v5203 = vadd.f32 %v5171, 0.0
        %v5204 = vadd.f32 %v5172, 0.0
        %v5205 = vadd.f32 %v5173, 0.0
        %v5206 = vperm.slane %v370, 1
        %v5207 = vsub.f32 %v630, %v5206
        %v5208 = vsub.f32 %v634, %v5206
        %v5209 = vsub.f32 %v638, %v5206
        %v5210 = vsub.f32 %v642, %v5206
        %v5211 = vsub.f32 %v646, %v5206
        %v5212 = vsub.f32 %v650, %v5206
        %v5213 = vsub.f32 %v654, %v5206
        %v5214 = vsub.f32 %v658, %v5206
        %v5215 = vsub.f32 %v662, %v5206
        %v5216 = vsub.f32 %v666, %v5206
        %v5217 = vsub.f32 %v670, %v5206
        %v5218 = vsub.f32 %v674, %v5206
        %v5219 = vsub.f32 %v678, %v5206
        %v5220 = vsub.f32 %v682, %v5206
        %v5221 = vsub.f32 %v686, %v5206
        %v5222 = vsub.f32 %v690, %v5206
        %v5223 = vsub.f32 %v694, %v5206
        %v5224 = vsub.f32 %v698, %v5206
        %v5225 = vsub.f32 %v702, %v5206
        %v5226 = vsub.f32 %v706, %v5206
        %v5227 = vsub.f32 %v710, %v5206
        %v5228 = vsub.f32 %v714, %v5206
        %v5229 = vsub.f32 %v718, %v5206
        %v5230 = vsub.f32 %v722, %v5206
        %v5231 = vsub.f32 %v726, %v5206
        %v5232 = vsub.f32 %v730, %v5206
        %v5233 = vsub.f32 %v734, %v5206
        %v5234 = vsub.f32 %v738, %v5206
        %v5235 = vsub.f32 %v742, %v5206
        %v5236 = vsub.f32 %v746, %v5206
        %v5237 = vsub.f32 %v750, %v5206
        %v5238 = vsub.f32 %v754, %v5206
        %v5239 = vmul.f32 %v5207, %v5207
        %v5240 = vmul.f32 %v5208, %v5208
        %v5241 = vmul.f32 %v5209, %v5209
        %v5242 = vmul.f32 %v5210, %v5210
        %v5243 = vmul.f32 %v5211, %v5211
        %v5244 = vmul.f32 %v5212, %v5212
        %v5245 = vmul.f32 %v5213, %v5213
        %v5246 = vmul.f32 %v5214, %v5214
        %v5247 = vmul.f32 %v5215, %v5215
        %v5248 = vmul.f32 %v5216, %v5216
        %v5249 = vmul.f32 %v5217, %v5217
        %v5250 = vmul.f32 %v5218, %v5218
        %v5251 = vmul.f32 %v5219, %v5219
        %v5252 = vmul.f32 %v5220, %v5220
        %v5253 = vmul.f32 %v5221, %v5221
        %v5254 = vmul.f32 %v5222, %v5222
        %v5255 = vmul.f32 %v5223, %v5223
        %v5256 = vmul.f32 %v5224, %v5224
        %v5257 = vmul.f32 %v5225, %v5225
        %v5258 = vmul.f32 %v5226, %v5226
        %v5259 = vmul.f32 %v5227, %v5227
        %v5260 = vmul.f32 %v5228, %v5228
        %v5261 = vmul.f32 %v5229, %v5229
        %v5262 = vmul.f32 %v5230, %v5230
        %v5263 = vmul.f32 %v5231, %v5231
        %v5264 = vmul.f32 %v5232, %v5232
        %v5265 = vmul.f32 %v5233, %v5233
        %v5266 = vmul.f32 %v5234, %v5234
        %v5267 = vmul.f32 %v5235, %v5235
        %v5268 = vmul.f32 %v5236, %v5236
        %v5269 = vmul.f32 %v5237, %v5237
        %v5270 = vmul.f32 %v5238, %v5238
        %v5271 = vadd.f32 %v5174, %v5239
        %v5272 = vadd.f32 %v5175, %v5240
        %v5273 = vadd.f32 %v5176, %v5241
        %v5274 = vadd.f32 %v5177, %v5242
        %v5275 = vadd.f32 %v5178, %v5243
        %v5276 = vadd.f32 %v5179, %v5244
        %v5277 = vadd.f32 %v5180, %v5245
        %v5278 = vadd.f32 %v5181, %v5246
        %v5279 = vadd.f32 %v5182, %v5247
        %v5280 = vadd.f32 %v5183, %v5248
        %v5281 = vadd.f32 %v5184, %v5249
        %v5282 = vadd.f32 %v5185, %v5250
        %v5283 = vadd.f32 %v5186, %v5251
        %v5284 = vadd.f32 %v5187, %v5252
        %v5285 = vadd.f32 %v5188, %v5253
        %v5286 = vadd.f32 %v5189, %v5254
        %v5287 = vadd.f32 %v5190, %v5255
        %v5288 = vadd.f32 %v5191, %v5256
        %v5289 = vadd.f32 %v5192, %v5257
        %v5290 = vadd.f32 %v5193, %v5258
        %v5291 = vadd.f32 %v5194, %v5259
        %v5292 = vadd.f32 %v5195, %v5260
        %v5293 = vadd.f32 %v5196, %v5261
        %v5294 = vadd.f32 %v5197, %v5262
        %v5295 = vadd.f32 %v5198, %v5263
        %v5296 = vadd.f32 %v5199, %v5264
        %v5297 = vadd.f32 %v5200, %v5265
        %v5298 = vadd.f32 %v5201, %v5266
        %v5299 = vadd.f32 %v5202, %v5267
        %v5300 = vadd.f32 %v5203, %v5268
        %v5301 = vadd.f32 %v5204, %v5269
        %v5302 = vadd.f32 %v5205, %v5270
        %v5303 = vmul.f32 %v5271, -0.78125
        %v5304 = vmul.f32 %v5272, -0.78125
        %v5305 = vmul.f32 %v5273, -0.78125
        %v5306 = vmul.f32 %v5274, -0.78125
        %v5307 = vmul.f32 %v5275, -0.78125
        %v5308 = vmul.f32 %v5276, -0.78125
        %v5309 = vmul.f32 %v5277, -0.78125
        %v5310 = vmul.f32 %v5278, -0.78125
        %v5311 = vmul.f32 %v5279, -0.78125
        %v5312 = vmul.f32 %v5280, -0.78125
        %v5313 = vmul.f32 %v5281, -0.78125
        %v5314 = vmul.f32 %v5282, -0.78125
        %v5315 = vmul.f32 %v5283, -0.78125
        %v5316 = vmul.f32 %v5284, -0.78125
        %v5317 = vmul.f32 %v5285, -0.78125
        %v5318 = vmul.f32 %v5286, -0.78125
        %v5319 = vmul.f32 %v5287, -0.78125
        %v5320 = vmul.f32 %v5288, -0.78125
        %v5321 = vmul.f32 %v5289, -0.78125
        %v5322 = vmul.f32 %v5290, -0.78125
        %v5323 = vmul.f32 %v5291, -0.78125
        %v5324 = vmul.f32 %v5292, -0.78125
        %v5325 = vmul.f32 %v5293, -0.78125
        %v5326 = vmul.f32 %v5294, -0.78125
        %v5327 = vmul.f32 %v5295, -0.78125
        %v5328 = vmul.f32 %v5296, -0.78125
        %v5329 = vmul.f32 %v5297, -0.78125
        %v5330 = vmul.f32 %v5298, -0.78125
        %v5331 = vmul.f32 %v5299, -0.78125
        %v5332 = vmul.f32 %v5300, -0.78125
        %v5333 = vmul.f32 %v5301, -0.78125
        %v5334 = vmul.f32 %v5302, -0.78125
        %v5335 = vmul.f32 %v5303, 1.442695
        %v5336 = vpow.pop %v5335
        %v5337 = vmul.f32 %v5304, 1.442695
        %v5338 = vpow.pop %v5337
        %v5339 = vmul.f32 %v5305, 1.442695
        %v5340 = vpow.pop %v5339
        %v5341 = vmul.f32 %v5306, 1.442695
        %v5342 = vpow.pop %v5341
        %v5343 = vmul.f32 %v5307, 1.442695
        %v5344 = vpow.pop %v5343
        %v5345 = vmul.f32 %v5308, 1.442695
        %v5346 = vpow.pop %v5345
        %v5347 = vmul.f32 %v5309, 1.442695
        %v5348 = vpow.pop %v5347
        %v5349 = vmul.f32 %v5310, 1.442695
        %v5350 = vpow.pop %v5349
        %v5351 = vmul.f32 %v5311, 1.442695
        %v5352 = vpow.pop %v5351
        %v5353 = vmul.f32 %v5312, 1.442695
        %v5354 = vpow.pop %v5353
        %v5355 = vmul.f32 %v5313, 1.442695
        %v5356 = vpow.pop %v5355
        %v5357 = vmul.f32 %v5314, 1.442695
        %v5358 = vpow.pop %v5357
        %v5359 = vmul.f32 %v5315, 1.442695
        %v5360 = vpow.pop %v5359
        %v5361 = vmul.f32 %v5316, 1.442695
        %v5362 = vpow.pop %v5361
        %v5363 = vmul.f32 %v5317, 1.442695
        %v5364 = vpow.pop %v5363
        %v5365 = vmul.f32 %v5318, 1.442695
        %v5366 = vpow.pop %v5365
        %v5367 = vmul.f32 %v5319, 1.442695
        %v5368 = vpow.pop %v5367
        %v5369 = vmul.f32 %v5320, 1.442695
        %v5370 = vpow.pop %v5369
        %v5371 = vmul.f32 %v5321, 1.442695
        %v5372 = vpow.pop %v5371
        %v5373 = vmul.f32 %v5322, 1.442695
        %v5374 = vpow.pop %v5373
        %v5375 = vmul.f32 %v5323, 1.442695
        %v5376 = vpow.pop %v5375
        %v5377 = vmul.f32 %v5324, 1.442695
        %v5378 = vpow.pop %v5377
        %v5379 = vmul.f32 %v5325, 1.442695
        %v5380 = vpow.pop %v5379
        %v5381 = vmul.f32 %v5326, 1.442695
        %v5382 = vpow.pop %v5381
        %v5383 = vmul.f32 %v5327, 1.442695
        %v5384 = vpow.pop %v5383
        %v5385 = vmul.f32 %v5328, 1.442695
        %v5386 = vpow.pop %v5385
        %v5387 = vmul.f32 %v5329, 1.442695
        %v5388 = vpow.pop %v5387
        %v5389 = vmul.f32 %v5330, 1.442695
        %v5390 = vpow.pop %v5389
        %v5391 = vmul.f32 %v5331, 1.442695
        %v5392 = vpow.pop %v5391
        %v5393 = vmul.f32 %v5332, 1.442695
        %v5394 = vpow.pop %v5393
        %v5395 = vmul.f32 %v5333, 1.442695
        %v5396 = vpow.pop %v5395
        %v5397 = vmul.f32 %v5334, 1.442695
        %v5398 = vpow.pop %v5397
        %5399 = vxpose.xlu0.b32.start [1/16] %v5077, 128
        %5400 = vxpose.xlu0.b32.cont [2/16] %v5078, 128
        %5401 = vxpose.xlu0.b32.cont [3/16] %v5079, 128
        %5402 = vxpose.xlu0.b32.cont [4/16] %v5080, 128
        %5403 = vxpose.xlu0.b32.cont [5/16] %v5081, 128
        %5404 = vxpose.xlu0.b32.cont [6/16] %v5082, 128
        %5405 = vxpose.xlu0.b32.cont [7/16] %v5083, 128
        %5406 = vxpose.xlu0.b32.cont [8/16] %v5084, 128
        %5407 = vxpose.xlu0.b32.cont [9/16] %v5085, 128
        %5408 = vxpose.xlu0.b32.cont [10/16] %v5086, 128
        %5409 = vxpose.xlu0.b32.cont [11/16] %v5087, 128
        %5410 = vxpose.xlu0.b32.cont [12/16] %v5088, 128
        %5411 = vxpose.xlu0.b32.cont [13/16] %v5089, 128
        %5412 = vxpose.xlu0.b32.cont [14/16] %v5090, 128
        %5413 = vxpose.xlu0.b32.cont [15/16] %v5091, 128
        %5414 = vxpose.xlu0.b32.end [16/16] %v5092, 128
        %v5415 = vpop.trf.xlu0
        %v5416 = vpop.trf.xlu0
        %v5417 = vpop.trf.xlu0
        %v5418 = vpop.trf.xlu0
        %v5419 = vpop.trf.xlu0
        %v5420 = vpop.trf.xlu0
        %v5421 = vpop.trf.xlu0
        %v5422 = vpop.trf.xlu0
        %v5423 = vpop.trf.xlu0
        %v5424 = vpop.trf.xlu0
        %v5425 = vpop.trf.xlu0
        %v5426 = vpop.trf.xlu0
        %v5427 = vpop.trf.xlu0
        %v5428 = vpop.trf.xlu0
        %v5429 = vpop.trf.xlu0
        %v5430 = vpop.trf.xlu0
        %5431 = vxpose.xlu0.b32.start [1/16] %v5093, 128
        %5432 = vxpose.xlu0.b32.cont [2/16] %v5094, 128
        %5433 = vxpose.xlu0.b32.cont [3/16] %v5095, 128
        %5434 = vxpose.xlu0.b32.cont [4/16] %v5096, 128
        %5435 = vxpose.xlu0.b32.cont [5/16] %v5097, 128
        %5436 = vxpose.xlu0.b32.cont [6/16] %v5098, 128
        %5437 = vxpose.xlu0.b32.cont [7/16] %v5099, 128
        %5438 = vxpose.xlu0.b32.cont [8/16] %v5100, 128
        %5439 = vxpose.xlu0.b32.cont [9/16] %v5101, 128
        %5440 = vxpose.xlu0.b32.cont [10/16] %v5102, 128
        %5441 = vxpose.xlu0.b32.cont [11/16] %v5103, 128
        %5442 = vxpose.xlu0.b32.cont [12/16] %v5104, 128
        %5443 = vxpose.xlu0.b32.cont [13/16] %v5105, 128
        %5444 = vxpose.xlu0.b32.cont [14/16] %v5106, 128
        %5445 = vxpose.xlu0.b32.cont [15/16] %v5107, 128
        %5446 = vxpose.xlu0.b32.end [16/16] %v5108, 128
        %v5447 = vpop.trf.xlu0
        %v5448 = vpop.trf.xlu0
        %v5449 = vpop.trf.xlu0
        %v5450 = vpop.trf.xlu0
        %v5451 = vpop.trf.xlu0
        %v5452 = vpop.trf.xlu0
        %v5453 = vpop.trf.xlu0
        %v5454 = vpop.trf.xlu0
        %v5455 = vpop.trf.xlu0
        %v5456 = vpop.trf.xlu0
        %v5457 = vpop.trf.xlu0
        %v5458 = vpop.trf.xlu0
        %v5459 = vpop.trf.xlu0
        %v5460 = vpop.trf.xlu0
        %v5461 = vpop.trf.xlu0
        %v5462 = vpop.trf.xlu0
        %5463 = vmatpush.msra.mxu0 %v5366
        %5464 = vmatpush.msra.mxu0 %v5364
        %5465 = vmatpush.msra.mxu0 %v5362
        %5466 = vmatpush.msra.mxu0 %v5360
        %5467 = vmatpush.msra.mxu0 %v5358
        %5468 = vmatpush.msra.mxu0 %v5356
        %5469 = vmatpush.msra.mxu0 %v5354
        %5470 = vmatpush.msra.mxu0 %v5352
        %5471 = vmatpush.msra.mxu0 %v5350
        %5472 = vmatpush.msra.mxu0 %v5348
        %5473 = vmatpush.msra.mxu0 %v5346
        %5474 = vmatpush.msra.mxu0 %v5344
        %5475 = vmatpush.msra.mxu0 %v5342
        %5476 = vmatpush.msra.mxu0 %v5340
        %5477 = vmatpush.msra.mxu0 %v5338
        %5478 = vmatpush.msra.mxu0 %v5336
        %5479 = vmatmul.f32.gmra.mxu0 %v5415
        %v5480 = vpop.f32.mrf.mxu0
        %v5481 = vadd.f32 0.0, %v5480
        %5482 = vdwg.mxu0
        %5483 = vmatpush.msra.mxu0 %v5398
        %5484 = vmatpush.msra.mxu0 %v5396
        %5485 = vmatpush.msra.mxu0 %v5394
        %5486 = vmatpush.msra.mxu0 %v5392
        %5487 = vmatpush.msra.mxu0 %v5390
        %5488 = vmatpush.msra.mxu0 %v5388
        %5489 = vmatpush.msra.mxu0 %v5386
        %5490 = vmatpush.msra.mxu0 %v5384
        %5491 = vmatpush.msra.mxu0 %v5382
        %5492 = vmatpush.msra.mxu0 %v5380
        %5493 = vmatpush.msra.mxu0 %v5378
        %5494 = vmatpush.msra.mxu0 %v5376
        %5495 = vmatpush.msra.mxu0 %v5374
        %5496 = vmatpush.msra.mxu0 %v5372
        %5497 = vmatpush.msra.mxu0 %v5370
        %5498 = vmatpush.msra.mxu0 %v5368
        %5499 = vmatmul.f32.gmra.mxu0 %v5447
        %v5500 = vpop.f32.mrf.mxu0
        %v5501 = vadd.f32 %v5481, %v5500
        %5502 = vdwg.mxu0
        %5503 = vmatpush.msra.mxu0 %v5366
        %5504 = vmatpush.msra.mxu0 %v5364
        %5505 = vmatpush.msra.mxu0 %v5362
        %5506 = vmatpush.msra.mxu0 %v5360
        %5507 = vmatpush.msra.mxu0 %v5358
        %5508 = vmatpush.msra.mxu0 %v5356
        %5509 = vmatpush.msra.mxu0 %v5354
        %5510 = vmatpush.msra.mxu0 %v5352
        %5511 = vmatpush.msra.mxu0 %v5350
        %5512 = vmatpush.msra.mxu0 %v5348
        %5513 = vmatpush.msra.mxu0 %v5346
        %5514 = vmatpush.msra.mxu0 %v5344
        %5515 = vmatpush.msra.mxu0 %v5342
        %5516 = vmatpush.msra.mxu0 %v5340
        %5517 = vmatpush.msra.mxu0 %v5338
        %5518 = vmatpush.msra.mxu0 %v5336
        %5519 = vmatmul.f32.gmra.mxu0 1.0
        %v5520 = vpop.f32.mrf.mxu0
        %v5521 = vadd.f32 1e-06, %v5520
        %5522 = vdwg.mxu0
        %5523 = vmatpush.msra.mxu0 %v5398
        %5524 = vmatpush.msra.mxu0 %v5396
        %5525 = vmatpush.msra.mxu0 %v5394
        %5526 = vmatpush.msra.mxu0 %v5392
        %5527 = vmatpush.msra.mxu0 %v5390
        %5528 = vmatpush.msra.mxu0 %v5388
        %5529 = vmatpush.msra.mxu0 %v5386
        %5530 = vmatpush.msra.mxu0 %v5384
        %5531 = vmatpush.msra.mxu0 %v5382
        %5532 = vmatpush.msra.mxu0 %v5380
        %5533 = vmatpush.msra.mxu0 %v5378
        %5534 = vmatpush.msra.mxu0 %v5376
        %5535 = vmatpush.msra.mxu0 %v5374
        %5536 = vmatpush.msra.mxu0 %v5372
        %5537 = vmatpush.msra.mxu0 %v5370
        %5538 = vmatpush.msra.mxu0 %v5368
        %5539 = vmatmul.f32.gmra.mxu0 1.0
        %v5540 = vpop.f32.mrf.mxu0
        %v5541 = vadd.f32 %v5521, %v5540
        %5542 = vdwg.mxu0
        %v5543 = vrcp.pop %v5541
        %v5544 = vperm.slane %v5543, 0
        %v5545 = vmul.f32 %v5501, %v5544
        %vm5546 = vcmask 58368
        %5547 = vst.msk [vmem:[%s322] sm:$0x3] %vm5546, %v5545
        %s5548 = sand.u32 %s213, 1
        %s5549 = scalar_lea.sflag [#allocation5], %s5548
        %s5550 = sand.u32 %s213, 1
        %s5551 = smul.addr %s5550, 2
        %s5552 = scalar_lea.vmem [#allocation4], %s5551
        // Predicated region
        $region53: #{tpu_custom_call.1} parent=51 // pred_check
          %p5553 = pneg %p223
        $region54: #{tpu_custom_call.1} parent=51 // pred_check_branch
          %5555 = sbr.rel (%p5553) target = $region56
        $region55: #{tpu_custom_call.1} parent=51 // pred_region
          %5557 = vsyncadd %s5549, 0
          %s5558 = smul.addr %s22, 2
          %s5559 = scalar_lea.hbm %s8, %s5558
          %s5561 = sshll.u32 %s5552, 4
          %s5562 = int_to_ptr.vmem [resolvable:$true] %s5561
          %s5563 = sshll.u32 %s5559, 4
          %s5564 = int_to_ptr.hbm [resolvable:$true] %s5563
          %5566 = dma.vmem_to_hbm [thread:$0]  %s5562, 32, %s5564, %s5549
        $region56: #{tpu_custom_call.1} parent=51 // pred_fallthru
          _
      $region52: #{tpu_custom_call.1} parent=5 // pred_fallthru
        _
      %p5567 = scmp.le.s32.totalorder 2, %s17
      // Predicated region
      $region57: #{tpu_custom_call.1} parent=5 // pred_check
        %p5568 = pneg %p5567
      $region58: #{tpu_custom_call.1} parent=5 // pred_check_branch
        %5570 = sbr.rel (%p5568) target = $region60
      $region59: #{tpu_custom_call.1} parent=5 // pred_region
        %s5571 = ssub.s32 %s17, 2
        // Predicated region
        $region61: #{tpu_custom_call.1} parent=59 // pred_check
          %p5572 = pneg %p229
        $region62: #{tpu_custom_call.1} parent=59 // pred_check_branch
          %5574 = sbr.rel (%p5572) target = $region64
        $region63: #{tpu_custom_call.1} parent=59 // pred_region
          %s5575 = sand.u32 %s214, 1
          %s5576 = scalar_lea.sflag [#allocation5], %s5575
          %s5577 = sand.u32 %s214, 1
          %s5578 = smul.addr %s5577, 2
          %s5579 = scalar_lea.vmem [#allocation4], %s5578
          %5581 = dma.done %s5576, 32
        $region64: #{tpu_custom_call.1} parent=59 // pred_fallthru
          _
      $region60: #{tpu_custom_call.1} parent=5 // pred_fallthru
        _
    $region6: #{tpu_custom_call.1} parent=1 // loop_footer
      %s21 = sadd.s32 1, %s17
    $region7: #{tpu_custom_call.1} parent=1 // loop_footer_branch
      %16 = sbr.rel target = $region3
    $region8: #{tpu_custom_call.1} parent=1 // loop_exit
      _
    %5582 = vsyncpa [#allocation5], 1
    %s5583 = scalar_lea.sflag [#allocation5], 1
    %5584 = vsyncpa %s5583, 1

</llo_original>
